<compile_context>
chip_gen: v6e
topology: v6e:2x2x1
jax: 0.10.0
libtpu: 0.0.40
codegen_flags: <defaults>
</compile_context>

<pallas_src>
import jax
import jax.numpy as jnp
import numpy as np
from jax import lax
from jax.experimental import pallas as pl
from jax.experimental.pallas import tpu as pltpu

H = 100     # nn.LSTM(1, 100, 1) hidden size
HP = 128    # lane-padded hidden size (one 128-lane slot per gate)
R1 = 10     # regressor intermediate width
R1P = 128   # lane-padded regressor width

# dest gate slot -> source gate index.  PyTorch weight order is [i, f, g, o];
# we store [i, f, o, g] so sigmoid(i|f|o) is one contiguous 3*HP slice.
_GATE_PERM = (0, 1, 3, 2)


# ----------------------------- Pallas kernel ------------------------------ #
def lstm_regressor_kernel(x_ref, wih_ref, whh_ref, b_ref, h0_ref, c0_ref,
                          w1_ref, b1_ref, w2_ref, b2_ref, out_ref, gx_ref):
    # x_ref : (T, B, 1)  f32        wih_ref: (1, 4*HP) f32
    # whh_ref: (HP, 4*HP) bf16      b_ref  : (1, 4*HP) f32
    # h0/c0 : (B, HP)    f32
    # w1_ref: (HP, R1P) bf16  b1_ref: (1, R1P)  w2_ref: (1, R1P)  b2_ref: (1, 1)
    # gx_ref: VMEM scratch (T, B, 4*HP) f32
    T = x_ref.shape[0]

    # Hoisted input contribution: gx[t] = x_t * W_ih^T + (b_ih + b_hh).
    # One slab-wide VPU pass; the recurrence only does matmul + add +
    # activations + elementwise state update.
    gx_ref[...] = (x_ref[...] * wih_ref[...].reshape(1, 1, 4 * HP)
                   + b_ref[...].reshape(1, 1, 4 * HP))

    whh_bf = whh_ref[...]          # (HP, 4*HP) bf16 MXU RHS, loaded once

    # TODO(synk): hold W_hh resident in the MXU across all T steps with
    # pltpu.matmul_push_rhs / matmul_acc_lhs / matmul_pop (removes the per-step
    # weight refill from the serial h->h chain); left on jnp.dot until the
    # multi-tile (128x512) RHS staging can be verified in a bundle dump.

    def step(t, carry):
        h, c = carry               # (B, HP) f32 each
        gates = gx_ref[t] + jnp.dot(h.astype(jnp.bfloat16), whh_bf,
                                    preferred_element_type=jnp.float32)
        # sigmoid(x) == 0.5*tanh(0.5*x) + 0.5 : one wide EUP tanh for [i|f|o].
        sig = jnp.tanh(0.5 * gates[:, :3 * HP]) * 0.5 + 0.5
        i = sig[:, 0 * HP:1 * HP]
        f = sig[:, 1 * HP:2 * HP]
        o = sig[:, 2 * HP:3 * HP]
        g = jnp.tanh(gates[:, 3 * HP:4 * HP])
        c_new = f * c + i * g
        h_new = o * jnp.tanh(c_new)
        return (h_new, c_new)

    # Short fixed trip count -> full unroll (cross-step scheduler visibility,
    # no per-iteration bookkeeping).  Live state per step is ~10-12 vregs,
    # far below the 64-vreg file, so no spill risk at T=16.
    h, _ = lax.fori_loop(0, T, step, (h0_ref[...], c0_ref[...]), unroll=True)

    # regressor: Linear(100,10) -> ReLU -> Linear(10,1) on the last hidden
    # state.  Single bf16 MXU pass into a full 128-lane result tile.
    z = jnp.dot(h.astype(jnp.bfloat16), w1_ref[...],
                preferred_element_type=jnp.float32) + b1_ref[...]
    z = jnp.maximum(z, 0.0)
    # Final Linear(10,1) as a lane reduction on the VPU/XLU.
    out_ref[...] = (jnp.sum(z * w2_ref[...], axis=-1, keepdims=True)
                    + b2_ref[...])


# ------------------------------ glue / wrapper ----------------------------- #
def _pad_gate_cols(w):
    """(rows, 4*H) in PyTorch gate order [i,f,g,o] -> (rows, 4*HP) in
    [i,f,o,g] order, each gate in its own 128-lane slot; padded lanes zero.

    Pad-lane invariant: zero-padded W_ih/W_hh/bias columns (here) plus
    zero-padded h0/c0 pad lanes (below) keep h/c pad lanes exactly zero for
    the whole recurrence (f_pad = sigmoid(0) = 0.5 multiplies c_pad = 0 and
    g_pad = tanh(0) = 0).  Do NOT feed a non-zero-padded initial state.
    """
    rows = w.shape[0]
    out = jnp.zeros((rows, 4 * HP), jnp.float32)
    for dst, src in enumerate(_GATE_PERM):
        out = out.at[:, dst * HP:dst * HP + H].set(w[:, src * H:(src + 1) * H])
    return out


def _pad_rows(w, rows_pad):
    out = jnp.zeros((rows_pad, w.shape[1]), w.dtype)
    return out.at[:w.shape[0], :].set(w)


def _pad_last(a, n):
    pad = [(0, 0)] * (a.ndim - 1) + [(0, n - a.shape[-1])]
    return jnp.pad(a, pad)


def basic_lstm_forward(x, hidden, params):
    """x: (B, T, 1) float32 ; hidden: (h0, c0), each (1, B, H). Returns (B, 1)."""
    h0, c0 = hidden
    B, T, _ = x.shape

    # --- parameter padding / layout prep (plain JAX glue, no compute hoist) ---
    wih_p = _pad_gate_cols(params["w_ih"].T)                        # (1, 4*HP)
    whh_bf = _pad_rows(_pad_gate_cols(params["w_hh"].T), HP).astype(jnp.bfloat16)
    b_p = _pad_gate_cols((params["b_ih"] + params["b_hh"])[None])   # (1, 4*HP)

    w1_bf = (jnp.zeros((HP, R1P), jnp.float32)
             .at[:H, :R1].set(params["w1"].T).astype(jnp.bfloat16)) # (HP, R1P)
    b1_p = _pad_last(params["b1"][None], R1P)                       # (1, R1P)
    w2_p = _pad_last(params["w2"], R1P)                             # (1, R1P)
    b2_p = params["b2"][None]                                       # (1, 1)

    h0_p = _pad_last(h0[0], HP)                                     # (B, HP)
    c0_p = _pad_last(c0[0], HP)                                     # (B, HP)

    # x consumed time-major.  Kept as (T, B, 1): the trailing-1 layout costs a
    # few KiB of VMEM padding / ~0.5 KiB of DMA off the critical path; dropping
    # the dim would force a lane->sublane relayout inside the kernel.
    x_tbf = jnp.transpose(x, (1, 0, 2)).astype(jnp.float32)         # (T, B, 1)

    vmem = pl.BlockSpec(memory_space=pltpu.MemorySpace.VMEM)
    # TODO(synk): for large T chunk the (T, B, 4*HP) gx slab over a T grid axis
    # (h/c carried in scratch, axis "arbitrary") or store it in bf16 -- at B=8
    # it is 16 KiB/step and hits v7x's 64 MiB VMEM around T~4K (2x sooner on
    # the 16 MiB default scoped limit of v5e).
    # TODO(synk): for larger batches add a leading sublane-aligned batch grid
    # axis with dimension_semantics=("parallel",) to engage both v7x TCs.
    out = pl.pallas_call(
        lstm_regressor_kernel,
        out_shape=jax.ShapeDtypeStruct((B, 1), jnp.float32),
        in_specs=[vmem] * 10,
        out_specs=vmem,
        scratch_shapes=[pltpu.VMEM((T, B, 4 * HP), jnp.float32)],
        compiler_params=pltpu.CompilerParams(vmem_limit_bytes=32 * 1024 * 1024),
    )(x_tbf, wih_p, whh_bf, b_p, h0_p, c0_p, w1_bf, b1_p, w2_p, b2_p)
    return out


# -------------------------- deterministic params --------------------------- #
def init_params(key):
    kl = 1.0 / np.sqrt(H)
    kr = 1.0 / np.sqrt(R1)
    ks = jax.random.split(key, 8)
    return dict(
        w_ih=jax.random.uniform(ks[0], (4 * H, 1), jnp.float32, -kl, kl),
        w_hh=jax.random.uniform(ks[1], (4 * H, H), jnp.float32, -kl, kl),
        b_ih=jax.random.uniform(ks[2], (4 * H,), jnp.float32, -kl, kl),
        b_hh=jax.random.uniform(ks[3], (4 * H,), jnp.float32, -kl, kl),
        w1=jax.random.uniform(ks[4], (R1, H), jnp.float32, -kl, kl),
        b1=jax.random.uniform(ks[5], (R1,), jnp.float32, -kl, kl),
        w2=jax.random.uniform(ks[6], (1, R1), jnp.float32, -kr, kr),
        b2=jax.random.uniform(ks[7], (1,), jnp.float32, -kr, kr),
    )


# ------------------------------ pure-JAX ref -------------------------------- #
def reference_forward(x, hidden, p):
    h0, c0 = hidden
    b = p["b_ih"] + p["b_hh"]

    def cell(carry, x_t):
        h, c = carry
        gates = x_t @ p["w_ih"].T + h @ p["w_hh"].T + b
        i, f, g, o = jnp.split(gates, 4, axis=-1)
        c = jax.nn.sigmoid(f) * c + jax.nn.sigmoid(i) * jnp.tanh(g)
        h = jax.nn.sigmoid(o) * jnp.tanh(c)
        return (h, c), None

    (h, _), _ = lax.scan(cell, (h0[0], c0[0]), jnp.transpose(x, (1, 0, 2)))
    z = jnp.maximum(h @ p["w1"].T + p["b1"], 0.0)
    return z @ p["w2"].T + p["b2"]


if __name__ == "__main__":
    B, T = 8, 16
    key = jax.random.PRNGKey(0)
    kx, kp = jax.random.split(key)
    x = jax.random.normal(kx, (B, T, 1), jnp.float32)
    hidden = (jnp.zeros((1, B, H), jnp.float32), jnp.zeros((1, B, H), jnp.float32))
    params = init_params(kp)

    out = basic_lstm_forward(x, hidden, params)
    out = jax.block_until_ready(out)

    ref = jax.block_until_ready(reference_forward(x, hidden, params))
    assert out.shape == (B, 1)
    assert np.allclose(np.asarray(out), np.asarray(ref), rtol=1e-2, atol=1e-2), (
        "mismatch vs pure-JAX reference")
    print("KERNEL_OK")
</pallas_src>

<mosaic_0001>
module attributes {stable_mosaic.version = 11 : i64} {
  func.func @lstm_regressor_kernel(%arg0: memref<16x8x1xf32, #tpu.memory_space<vmem>>, %arg1: memref<1x512xf32, #tpu.memory_space<vmem>>, %arg2: memref<128x512xbf16, #tpu.memory_space<vmem>>, %arg3: memref<1x512xf32, #tpu.memory_space<vmem>>, %arg4: memref<8x128xf32, #tpu.memory_space<vmem>>, %arg5: memref<8x128xf32, #tpu.memory_space<vmem>>, %arg6: memref<128x128xbf16, #tpu.memory_space<vmem>>, %arg7: memref<1x128xf32, #tpu.memory_space<vmem>>, %arg8: memref<1x128xf32, #tpu.memory_space<vmem>>, %arg9: memref<1x1xf32, #tpu.memory_space<vmem>>, %arg10: memref<8x1xf32, #tpu.memory_space<vmem>>, %arg11: memref<16x8x512xf32, #tpu.memory_space<vmem>>) attributes {dimension_semantics = [], scalar_prefetch = 0 : i64, scratch_operands = 1 : i64, tpu.core_type = #tpu.core_type<tc>} {
    %c0 = arith.constant 0 : index
    %c0_0 = arith.constant 0 : index
    %c0_1 = arith.constant 0 : index
    %0 = vector.load %arg0[%c0, %c0_0, %c0_1] : memref<16x8x1xf32, #tpu.memory_space<vmem>>, vector<16x8x1xf32>
    %c0_2 = arith.constant 0 : index
    %c0_3 = arith.constant 0 : index
    %1 = vector.load %arg1[%c0_2, %c0_3] : memref<1x512xf32, #tpu.memory_space<vmem>>, vector<1x512xf32>
    %2 = vector.shape_cast %1 : vector<1x512xf32> to vector<1x1x512xf32>
    %3 = vector.broadcast %0 : vector<16x8x1xf32> to vector<16x8x512xf32>
    %4 = vector.broadcast %2 : vector<1x1x512xf32> to vector<16x8x512xf32>
    %5 = arith.mulf %3, %4 : vector<16x8x512xf32>
    %c0_4 = arith.constant 0 : index
    %c0_5 = arith.constant 0 : index
    %6 = vector.load %arg3[%c0_4, %c0_5] : memref<1x512xf32, #tpu.memory_space<vmem>>, vector<1x512xf32>
    %7 = vector.shape_cast %6 : vector<1x512xf32> to vector<1x1x512xf32>
    %8 = vector.broadcast %7 : vector<1x1x512xf32> to vector<16x8x512xf32>
    %9 = arith.addf %5, %8 : vector<16x8x512xf32>
    %c0_6 = arith.constant 0 : index
    %c0_7 = arith.constant 0 : index
    %c0_8 = arith.constant 0 : index
    %10 = vector.load %arg11[%c0_6, %c0_7, %c0_8] : memref<16x8x512xf32, #tpu.memory_space<vmem>>, vector<16x8x512xf32>
    tpu.vector_store %arg11[%c0_6, %c0_7, %c0_8], %9 {strides = array<i32>} : memref<16x8x512xf32, #tpu.memory_space<vmem>>, vector<16x8x512xf32>,
    %c0_9 = arith.constant 0 : index
    %c0_10 = arith.constant 0 : index
    %11 = vector.load %arg2[%c0_9, %c0_10] : memref<128x512xbf16, #tpu.memory_space<vmem>>, vector<128x512xbf16>
    %c0_11 = arith.constant 0 : index
    %c0_12 = arith.constant 0 : index
    %12 = vector.load %arg4[%c0_11, %c0_12] : memref<8x128xf32, #tpu.memory_space<vmem>>, vector<8x128xf32>
    %c0_13 = arith.constant 0 : index
    %c0_14 = arith.constant 0 : index
    %13 = vector.load %arg5[%c0_13, %c0_14] : memref<8x128xf32, #tpu.memory_space<vmem>>, vector<8x128xf32>
    %c0_i32 = arith.constant 0 : i32
    %14 = arith.index_cast %c0_i32 : i32 to index
    %c0_15 = arith.constant 0 : index
    %c0_16 = arith.constant 0 : index
    %15 = vector.load %arg11[%14, %c0_15, %c0_16] : memref<16x8x512xf32, #tpu.memory_space<vmem>>, vector<1x8x512xf32>
    %16 = vector.shape_cast %15 : vector<1x8x512xf32> to vector<8x512xf32>
    %17 = arith.truncf %12 : vector<8x128xf32> to vector<8x128xbf16>
    %cst = arith.constant dense<0.000000e+00> : vector<8x512xf32>
    %18 = tpu.matmul %17, %11, %cst {dimension_numbers = #tpu.dot_dimension_numbers<[1], [0], [0], [1], [0, 0, 1, 1], [], []>} : vector<8x128xbf16>, vector<128x512xbf16>, vector<8x512xf32> -> vector<8x512xf32>
    %19 = arith.addf %16, %18 : vector<8x512xf32>
    %20 = vector.extract_strided_slice %19 {offsets = [0, 0], sizes = [8, 384], strides = [1, 1]} : vector<8x512xf32> to vector<8x384xf32>
    %cst_17 = arith.constant 5.000000e-01 : f32
    %21 = vector.broadcast %cst_17 : f32 to vector<8x384xf32>
    %22 = arith.mulf %21, %20 : vector<8x384xf32>
    %23 = math.tanh %22 : vector<8x384xf32>
    %cst_18 = arith.constant 5.000000e-01 : f32
    %24 = vector.broadcast %cst_18 : f32 to vector<8x384xf32>
    %25 = arith.mulf %23, %24 : vector<8x384xf32>
    %cst_19 = arith.constant 5.000000e-01 : f32
    %26 = vector.broadcast %cst_19 : f32 to vector<8x384xf32>
    %27 = arith.addf %25, %26 : vector<8x384xf32>
    %28 = vector.extract_strided_slice %27 {offsets = [0, 0], sizes = [8, 128], strides = [1, 1]} : vector<8x384xf32> to vector<8x128xf32>
    %29 = vector.extract_strided_slice %27 {offsets = [0, 128], sizes = [8, 128], strides = [1, 1]} : vector<8x384xf32> to vector<8x128xf32>
    %30 = vector.extract_strided_slice %27 {offsets = [0, 256], sizes = [8, 128], strides = [1, 1]} : vector<8x384xf32> to vector<8x128xf32>
    %31 = vector.extract_strided_slice %19 {offsets = [0, 384], sizes = [8, 128], strides = [1, 1]} : vector<8x512xf32> to vector<8x128xf32>
    %32 = math.tanh %31 : vector<8x128xf32>
    %33 = arith.mulf %29, %13 : vector<8x128xf32>
    %34 = arith.mulf %28, %32 : vector<8x128xf32>
    %35 = arith.addf %33, %34 : vector<8x128xf32>
    %36 = math.tanh %35 : vector<8x128xf32>
    %37 = arith.mulf %30, %36 : vector<8x128xf32>
    %c1_i32 = arith.constant 1 : i32
    %38 = arith.index_cast %c1_i32 : i32 to index
    %c0_20 = arith.constant 0 : index
    %c0_21 = arith.constant 0 : index
    %39 = vector.load %arg11[%38, %c0_20, %c0_21] : memref<16x8x512xf32, #tpu.memory_space<vmem>>, vector<1x8x512xf32>
    %40 = vector.shape_cast %39 : vector<1x8x512xf32> to vector<8x512xf32>
    %41 = arith.truncf %37 : vector<8x128xf32> to vector<8x128xbf16>
    %cst_22 = arith.constant dense<0.000000e+00> : vector<8x512xf32>
    %42 = tpu.matmul %41, %11, %cst_22 {dimension_numbers = #tpu.dot_dimension_numbers<[1], [0], [0], [1], [0, 0, 1, 1], [], []>} : vector<8x128xbf16>, vector<128x512xbf16>, vector<8x512xf32> -> vector<8x512xf32>
    %43 = arith.addf %40, %42 : vector<8x512xf32>
    %44 = vector.extract_strided_slice %43 {offsets = [0, 0], sizes = [8, 384], strides = [1, 1]} : vector<8x512xf32> to vector<8x384xf32>
    %cst_23 = arith.constant 5.000000e-01 : f32
    %45 = vector.broadcast %cst_23 : f32 to vector<8x384xf32>
    %46 = arith.mulf %45, %44 : vector<8x384xf32>
    %47 = math.tanh %46 : vector<8x384xf32>
    %cst_24 = arith.constant 5.000000e-01 : f32
    %48 = vector.broadcast %cst_24 : f32 to vector<8x384xf32>
    %49 = arith.mulf %47, %48 : vector<8x384xf32>
    %cst_25 = arith.constant 5.000000e-01 : f32
    %50 = vector.broadcast %cst_25 : f32 to vector<8x384xf32>
    %51 = arith.addf %49, %50 : vector<8x384xf32>
    %52 = vector.extract_strided_slice %51 {offsets = [0, 0], sizes = [8, 128], strides = [1, 1]} : vector<8x384xf32> to vector<8x128xf32>
    %53 = vector.extract_strided_slice %51 {offsets = [0, 128], sizes = [8, 128], strides = [1, 1]} : vector<8x384xf32> to vector<8x128xf32>
    %54 = vector.extract_strided_slice %51 {offsets = [0, 256], sizes = [8, 128], strides = [1, 1]} : vector<8x384xf32> to vector<8x128xf32>
    %55 = vector.extract_strided_slice %43 {offsets = [0, 384], sizes = [8, 128], strides = [1, 1]} : vector<8x512xf32> to vector<8x128xf32>
    %56 = math.tanh %55 : vector<8x128xf32>
    %57 = arith.mulf %53, %35 : vector<8x128xf32>
    %58 = arith.mulf %52, %56 : vector<8x128xf32>
    %59 = arith.addf %57, %58 : vector<8x128xf32>
    %60 = math.tanh %59 : vector<8x128xf32>
    %61 = arith.mulf %54, %60 : vector<8x128xf32>
    %c2_i32 = arith.constant 2 : i32
    %62 = arith.index_cast %c2_i32 : i32 to index
    %c0_26 = arith.constant 0 : index
    %c0_27 = arith.constant 0 : index
    %63 = vector.load %arg11[%62, %c0_26, %c0_27] : memref<16x8x512xf32, #tpu.memory_space<vmem>>, vector<1x8x512xf32>
    %64 = vector.shape_cast %63 : vector<1x8x512xf32> to vector<8x512xf32>
    %65 = arith.truncf %61 : vector<8x128xf32> to vector<8x128xbf16>
    %cst_28 = arith.constant dense<0.000000e+00> : vector<8x512xf32>
    %66 = tpu.matmul %65, %11, %cst_28 {dimension_numbers = #tpu.dot_dimension_numbers<[1], [0], [0], [1], [0, 0, 1, 1], [], []>} : vector<8x128xbf16>, vector<128x512xbf16>, vector<8x512xf32> -> vector<8x512xf32>
    %67 = arith.addf %64, %66 : vector<8x512xf32>
    %68 = vector.extract_strided_slice %67 {offsets = [0, 0], sizes = [8, 384], strides = [1, 1]} : vector<8x512xf32> to vector<8x384xf32>
    %cst_29 = arith.constant 5.000000e-01 : f32
    %69 = vector.broadcast %cst_29 : f32 to vector<8x384xf32>
    %70 = arith.mulf %69, %68 : vector<8x384xf32>
    %71 = math.tanh %70 : vector<8x384xf32>
    %cst_30 = arith.constant 5.000000e-01 : f32
    %72 = vector.broadcast %cst_30 : f32 to vector<8x384xf32>
    %73 = arith.mulf %71, %72 : vector<8x384xf32>
    %cst_31 = arith.constant 5.000000e-01 : f32
    %74 = vector.broadcast %cst_31 : f32 to vector<8x384xf32>
    %75 = arith.addf %73, %74 : vector<8x384xf32>
    %76 = vector.extract_strided_slice %75 {offsets = [0, 0], sizes = [8, 128], strides = [1, 1]} : vector<8x384xf32> to vector<8x128xf32>
    %77 = vector.extract_strided_slice %75 {offsets = [0, 128], sizes = [8, 128], strides = [1, 1]} : vector<8x384xf32> to vector<8x128xf32>
    %78 = vector.extract_strided_slice %75 {offsets = [0, 256], sizes = [8, 128], strides = [1, 1]} : vector<8x384xf32> to vector<8x128xf32>
    %79 = vector.extract_strided_slice %67 {offsets = [0, 384], sizes = [8, 128], strides = [1, 1]} : vector<8x512xf32> to vector<8x128xf32>
    %80 = math.tanh %79 : vector<8x128xf32>
    %81 = arith.mulf %77, %59 : vector<8x128xf32>
    %82 = arith.mulf %76, %80 : vector<8x128xf32>
    %83 = arith.addf %81, %82 : vector<8x128xf32>
    %84 = math.tanh %83 : vector<8x128xf32>
    %85 = arith.mulf %78, %84 : vector<8x128xf32>
    %c3_i32 = arith.constant 3 : i32
    %86 = arith.index_cast %c3_i32 : i32 to index
    %c0_32 = arith.constant 0 : index
    %c0_33 = arith.constant 0 : index
    %87 = vector.load %arg11[%86, %c0_32, %c0_33] : memref<16x8x512xf32, #tpu.memory_space<vmem>>, vector<1x8x512xf32>
    %88 = vector.shape_cast %87 : vector<1x8x512xf32> to vector<8x512xf32>
    %89 = arith.truncf %85 : vector<8x128xf32> to vector<8x128xbf16>
    %cst_34 = arith.constant dense<0.000000e+00> : vector<8x512xf32>
    %90 = tpu.matmul %89, %11, %cst_34 {dimension_numbers = #tpu.dot_dimension_numbers<[1], [0], [0], [1], [0, 0, 1, 1], [], []>} : vector<8x128xbf16>, vector<128x512xbf16>, vector<8x512xf32> -> vector<8x512xf32>
    %91 = arith.addf %88, %90 : vector<8x512xf32>
    %92 = vector.extract_strided_slice %91 {offsets = [0, 0], sizes = [8, 384], strides = [1, 1]} : vector<8x512xf32> to vector<8x384xf32>
    %cst_35 = arith.constant 5.000000e-01 : f32
    %93 = vector.broadcast %cst_35 : f32 to vector<8x384xf32>
    %94 = arith.mulf %93, %92 : vector<8x384xf32>
    %95 = math.tanh %94 : vector<8x384xf32>
    %cst_36 = arith.constant 5.000000e-01 : f32
    %96 = vector.broadcast %cst_36 : f32 to vector<8x384xf32>
    %97 = arith.mulf %95, %96 : vector<8x384xf32>
    %cst_37 = arith.constant 5.000000e-01 : f32
    %98 = vector.broadcast %cst_37 : f32 to vector<8x384xf32>
    %99 = arith.addf %97, %98 : vector<8x384xf32>
    %100 = vector.extract_strided_slice %99 {offsets = [0, 0], sizes = [8, 128], strides = [1, 1]} : vector<8x384xf32> to vector<8x128xf32>
    %101 = vector.extract_strided_slice %99 {offsets = [0, 128], sizes = [8, 128], strides = [1, 1]} : vector<8x384xf32> to vector<8x128xf32>
    %102 = vector.extract_strided_slice %99 {offsets = [0, 256], sizes = [8, 128], strides = [1, 1]} : vector<8x384xf32> to vector<8x128xf32>
    %103 = vector.extract_strided_slice %91 {offsets = [0, 384], sizes = [8, 128], strides = [1, 1]} : vector<8x512xf32> to vector<8x128xf32>
    %104 = math.tanh %103 : vector<8x128xf32>
    %105 = arith.mulf %101, %83 : vector<8x128xf32>
    %106 = arith.mulf %100, %104 : vector<8x128xf32>
    %107 = arith.addf %105, %106 : vector<8x128xf32>
    %108 = math.tanh %107 : vector<8x128xf32>
    %109 = arith.mulf %102, %108 : vector<8x128xf32>
    %c4_i32 = arith.constant 4 : i32
    %110 = arith.index_cast %c4_i32 : i32 to index
    %c0_38 = arith.constant 0 : index
    %c0_39 = arith.constant 0 : index
    %111 = vector.load %arg11[%110, %c0_38, %c0_39] : memref<16x8x512xf32, #tpu.memory_space<vmem>>, vector<1x8x512xf32>
    %112 = vector.shape_cast %111 : vector<1x8x512xf32> to vector<8x512xf32>
    %113 = arith.truncf %109 : vector<8x128xf32> to vector<8x128xbf16>
    %cst_40 = arith.constant dense<0.000000e+00> : vector<8x512xf32>
    %114 = tpu.matmul %113, %11, %cst_40 {dimension_numbers = #tpu.dot_dimension_numbers<[1], [0], [0], [1], [0, 0, 1, 1], [], []>} : vector<8x128xbf16>, vector<128x512xbf16>, vector<8x512xf32> -> vector<8x512xf32>
    %115 = arith.addf %112, %114 : vector<8x512xf32>
    %116 = vector.extract_strided_slice %115 {offsets = [0, 0], sizes = [8, 384], strides = [1, 1]} : vector<8x512xf32> to vector<8x384xf32>
    %cst_41 = arith.constant 5.000000e-01 : f32
    %117 = vector.broadcast %cst_41 : f32 to vector<8x384xf32>
    %118 = arith.mulf %117, %116 : vector<8x384xf32>
    %119 = math.tanh %118 : vector<8x384xf32>
    %cst_42 = arith.constant 5.000000e-01 : f32
    %120 = vector.broadcast %cst_42 : f32 to vector<8x384xf32>
    %121 = arith.mulf %119, %120 : vector<8x384xf32>
    %cst_43 = arith.constant 5.000000e-01 : f32
    %122 = vector.broadcast %cst_43 : f32 to vector<8x384xf32>
    %123 = arith.addf %121, %122 : vector<8x384xf32>
    %124 = vector.extract_strided_slice %123 {offsets = [0, 0], sizes = [8, 128], strides = [1, 1]} : vector<8x384xf32> to vector<8x128xf32>
    %125 = vector.extract_strided_slice %123 {offsets = [0, 128], sizes = [8, 128], strides = [1, 1]} : vector<8x384xf32> to vector<8x128xf32>
    %126 = vector.extract_strided_slice %123 {offsets = [0, 256], sizes = [8, 128], strides = [1, 1]} : vector<8x384xf32> to vector<8x128xf32>
    %127 = vector.extract_strided_slice %115 {offsets = [0, 384], sizes = [8, 128], strides = [1, 1]} : vector<8x512xf32> to vector<8x128xf32>
    %128 = math.tanh %127 : vector<8x128xf32>
    %129 = arith.mulf %125, %107 : vector<8x128xf32>
    %130 = arith.mulf %124, %128 : vector<8x128xf32>
    %131 = arith.addf %129, %130 : vector<8x128xf32>
    %132 = math.tanh %131 : vector<8x128xf32>
    %133 = arith.mulf %126, %132 : vector<8x128xf32>
    %c5_i32 = arith.constant 5 : i32
    %134 = arith.index_cast %c5_i32 : i32 to index
    %c0_44 = arith.constant 0 : index
    %c0_45 = arith.constant 0 : index
    %135 = vector.load %arg11[%134, %c0_44, %c0_45] : memref<16x8x512xf32, #tpu.memory_space<vmem>>, vector<1x8x512xf32>
    %136 = vector.shape_cast %135 : vector<1x8x512xf32> to vector<8x512xf32>
    %137 = arith.truncf %133 : vector<8x128xf32> to vector<8x128xbf16>
    %cst_46 = arith.constant dense<0.000000e+00> : vector<8x512xf32>
    %138 = tpu.matmul %137, %11, %cst_46 {dimension_numbers = #tpu.dot_dimension_numbers<[1], [0], [0], [1], [0, 0, 1, 1], [], []>} : vector<8x128xbf16>, vector<128x512xbf16>, vector<8x512xf32> -> vector<8x512xf32>
    %139 = arith.addf %136, %138 : vector<8x512xf32>
    %140 = vector.extract_strided_slice %139 {offsets = [0, 0], sizes = [8, 384], strides = [1, 1]} : vector<8x512xf32> to vector<8x384xf32>
    %cst_47 = arith.constant 5.000000e-01 : f32
    %141 = vector.broadcast %cst_47 : f32 to vector<8x384xf32>
    %142 = arith.mulf %141, %140 : vector<8x384xf32>
    %143 = math.tanh %142 : vector<8x384xf32>
    %cst_48 = arith.constant 5.000000e-01 : f32
    %144 = vector.broadcast %cst_48 : f32 to vector<8x384xf32>
    %145 = arith.mulf %143, %144 : vector<8x384xf32>
    %cst_49 = arith.constant 5.000000e-01 : f32
    %146 = vector.broadcast %cst_49 : f32 to vector<8x384xf32>
    %147 = arith.addf %145, %146 : vector<8x384xf32>
    %148 = vector.extract_strided_slice %147 {offsets = [0, 0], sizes = [8, 128], strides = [1, 1]} : vector<8x384xf32> to vector<8x128xf32>
    %149 = vector.extract_strided_slice %147 {offsets = [0, 128], sizes = [8, 128], strides = [1, 1]} : vector<8x384xf32> to vector<8x128xf32>
    %150 = vector.extract_strided_slice %147 {offsets = [0, 256], sizes = [8, 128], strides = [1, 1]} : vector<8x384xf32> to vector<8x128xf32>
    %151 = vector.extract_strided_slice %139 {offsets = [0, 384], sizes = [8, 128], strides = [1, 1]} : vector<8x512xf32> to vector<8x128xf32>
    %152 = math.tanh %151 : vector<8x128xf32>
    %153 = arith.mulf %149, %131 : vector<8x128xf32>
    %154 = arith.mulf %148, %152 : vector<8x128xf32>
    %155 = arith.addf %153, %154 : vector<8x128xf32>
    %156 = math.tanh %155 : vector<8x128xf32>
    %157 = arith.mulf %150, %156 : vector<8x128xf32>
    %c6_i32 = arith.constant 6 : i32
    %158 = arith.index_cast %c6_i32 : i32 to index
    %c0_50 = arith.constant 0 : index
    %c0_51 = arith.constant 0 : index
    %159 = vector.load %arg11[%158, %c0_50, %c0_51] : memref<16x8x512xf32, #tpu.memory_space<vmem>>, vector<1x8x512xf32>
    %160 = vector.shape_cast %159 : vector<1x8x512xf32> to vector<8x512xf32>
    %161 = arith.truncf %157 : vector<8x128xf32> to vector<8x128xbf16>
    %cst_52 = arith.constant dense<0.000000e+00> : vector<8x512xf32>
    %162 = tpu.matmul %161, %11, %cst_52 {dimension_numbers = #tpu.dot_dimension_numbers<[1], [0], [0], [1], [0, 0, 1, 1], [], []>} : vector<8x128xbf16>, vector<128x512xbf16>, vector<8x512xf32> -> vector<8x512xf32>
    %163 = arith.addf %160, %162 : vector<8x512xf32>
    %164 = vector.extract_strided_slice %163 {offsets = [0, 0], sizes = [8, 384], strides = [1, 1]} : vector<8x512xf32> to vector<8x384xf32>
    %cst_53 = arith.constant 5.000000e-01 : f32
    %165 = vector.broadcast %cst_53 : f32 to vector<8x384xf32>
    %166 = arith.mulf %165, %164 : vector<8x384xf32>
    %167 = math.tanh %166 : vector<8x384xf32>
    %cst_54 = arith.constant 5.000000e-01 : f32
    %168 = vector.broadcast %cst_54 : f32 to vector<8x384xf32>
    %169 = arith.mulf %167, %168 : vector<8x384xf32>
    %cst_55 = arith.constant 5.000000e-01 : f32
    %170 = vector.broadcast %cst_55 : f32 to vector<8x384xf32>
    %171 = arith.addf %169, %170 : vector<8x384xf32>
    %172 = vector.extract_strided_slice %171 {offsets = [0, 0], sizes = [8, 128], strides = [1, 1]} : vector<8x384xf32> to vector<8x128xf32>
    %173 = vector.extract_strided_slice %171 {offsets = [0, 128], sizes = [8, 128], strides = [1, 1]} : vector<8x384xf32> to vector<8x128xf32>
    %174 = vector.extract_strided_slice %171 {offsets = [0, 256], sizes = [8, 128], strides = [1, 1]} : vector<8x384xf32> to vector<8x128xf32>
    %175 = vector.extract_strided_slice %163 {offsets = [0, 384], sizes = [8, 128], strides = [1, 1]} : vector<8x512xf32> to vector<8x128xf32>
    %176 = math.tanh %175 : vector<8x128xf32>
    %177 = arith.mulf %173, %155 : vector<8x128xf32>
    %178 = arith.mulf %172, %176 : vector<8x128xf32>
    %179 = arith.addf %177, %178 : vector<8x128xf32>
    %180 = math.tanh %179 : vector<8x128xf32>
    %181 = arith.mulf %174, %180 : vector<8x128xf32>
    %c7_i32 = arith.constant 7 : i32
    %182 = arith.index_cast %c7_i32 : i32 to index
    %c0_56 = arith.constant 0 : index
    %c0_57 = arith.constant 0 : index
    %183 = vector.load %arg11[%182, %c0_56, %c0_57] : memref<16x8x512xf32, #tpu.memory_space<vmem>>, vector<1x8x512xf32>
    %184 = vector.shape_cast %183 : vector<1x8x512xf32> to vector<8x512xf32>
    %185 = arith.truncf %181 : vector<8x128xf32> to vector<8x128xbf16>
    %cst_58 = arith.constant dense<0.000000e+00> : vector<8x512xf32>
    %186 = tpu.matmul %185, %11, %cst_58 {dimension_numbers = #tpu.dot_dimension_numbers<[1], [0], [0], [1], [0, 0, 1, 1], [], []>} : vector<8x128xbf16>, vector<128x512xbf16>, vector<8x512xf32> -> vector<8x512xf32>
    %187 = arith.addf %184, %186 : vector<8x512xf32>
    %188 = vector.extract_strided_slice %187 {offsets = [0, 0], sizes = [8, 384], strides = [1, 1]} : vector<8x512xf32> to vector<8x384xf32>
    %cst_59 = arith.constant 5.000000e-01 : f32
    %189 = vector.broadcast %cst_59 : f32 to vector<8x384xf32>
    %190 = arith.mulf %189, %188 : vector<8x384xf32>
    %191 = math.tanh %190 : vector<8x384xf32>
    %cst_60 = arith.constant 5.000000e-01 : f32
    %192 = vector.broadcast %cst_60 : f32 to vector<8x384xf32>
    %193 = arith.mulf %191, %192 : vector<8x384xf32>
    %cst_61 = arith.constant 5.000000e-01 : f32
    %194 = vector.broadcast %cst_61 : f32 to vector<8x384xf32>
    %195 = arith.addf %193, %194 : vector<8x384xf32>
    %196 = vector.extract_strided_slice %195 {offsets = [0, 0], sizes = [8, 128], strides = [1, 1]} : vector<8x384xf32> to vector<8x128xf32>
    %197 = vector.extract_strided_slice %195 {offsets = [0, 128], sizes = [8, 128], strides = [1, 1]} : vector<8x384xf32> to vector<8x128xf32>
    %198 = vector.extract_strided_slice %195 {offsets = [0, 256], sizes = [8, 128], strides = [1, 1]} : vector<8x384xf32> to vector<8x128xf32>
    %199 = vector.extract_strided_slice %187 {offsets = [0, 384], sizes = [8, 128], strides = [1, 1]} : vector<8x512xf32> to vector<8x128xf32>
    %200 = math.tanh %199 : vector<8x128xf32>
    %201 = arith.mulf %197, %179 : vector<8x128xf32>
    %202 = arith.mulf %196, %200 : vector<8x128xf32>
    %203 = arith.addf %201, %202 : vector<8x128xf32>
    %204 = math.tanh %203 : vector<8x128xf32>
    %205 = arith.mulf %198, %204 : vector<8x128xf32>
    %c8_i32 = arith.constant 8 : i32
    %206 = arith.index_cast %c8_i32 : i32 to index
    %c0_62 = arith.constant 0 : index
    %c0_63 = arith.constant 0 : index
    %207 = vector.load %arg11[%206, %c0_62, %c0_63] : memref<16x8x512xf32, #tpu.memory_space<vmem>>, vector<1x8x512xf32>
    %208 = vector.shape_cast %207 : vector<1x8x512xf32> to vector<8x512xf32>
    %209 = arith.truncf %205 : vector<8x128xf32> to vector<8x128xbf16>
    %cst_64 = arith.constant dense<0.000000e+00> : vector<8x512xf32>
    %210 = tpu.matmul %209, %11, %cst_64 {dimension_numbers = #tpu.dot_dimension_numbers<[1], [0], [0], [1], [0, 0, 1, 1], [], []>} : vector<8x128xbf16>, vector<128x512xbf16>, vector<8x512xf32> -> vector<8x512xf32>
    %211 = arith.addf %208, %210 : vector<8x512xf32>
    %212 = vector.extract_strided_slice %211 {offsets = [0, 0], sizes = [8, 384], strides = [1, 1]} : vector<8x512xf32> to vector<8x384xf32>
    %cst_65 = arith.constant 5.000000e-01 : f32
    %213 = vector.broadcast %cst_65 : f32 to vector<8x384xf32>
    %214 = arith.mulf %213, %212 : vector<8x384xf32>
    %215 = math.tanh %214 : vector<8x384xf32>
    %cst_66 = arith.constant 5.000000e-01 : f32
    %216 = vector.broadcast %cst_66 : f32 to vector<8x384xf32>
    %217 = arith.mulf %215, %216 : vector<8x384xf32>
    %cst_67 = arith.constant 5.000000e-01 : f32
    %218 = vector.broadcast %cst_67 : f32 to vector<8x384xf32>
    %219 = arith.addf %217, %218 : vector<8x384xf32>
    %220 = vector.extract_strided_slice %219 {offsets = [0, 0], sizes = [8, 128], strides = [1, 1]} : vector<8x384xf32> to vector<8x128xf32>
    %221 = vector.extract_strided_slice %219 {offsets = [0, 128], sizes = [8, 128], strides = [1, 1]} : vector<8x384xf32> to vector<8x128xf32>
    %222 = vector.extract_strided_slice %219 {offsets = [0, 256], sizes = [8, 128], strides = [1, 1]} : vector<8x384xf32> to vector<8x128xf32>
    %223 = vector.extract_strided_slice %211 {offsets = [0, 384], sizes = [8, 128], strides = [1, 1]} : vector<8x512xf32> to vector<8x128xf32>
    %224 = math.tanh %223 : vector<8x128xf32>
    %225 = arith.mulf %221, %203 : vector<8x128xf32>
    %226 = arith.mulf %220, %224 : vector<8x128xf32>
    %227 = arith.addf %225, %226 : vector<8x128xf32>
    %228 = math.tanh %227 : vector<8x128xf32>
    %229 = arith.mulf %222, %228 : vector<8x128xf32>
    %c9_i32 = arith.constant 9 : i32
    %230 = arith.index_cast %c9_i32 : i32 to index
    %c0_68 = arith.constant 0 : index
    %c0_69 = arith.constant 0 : index
    %231 = vector.load %arg11[%230, %c0_68, %c0_69] : memref<16x8x512xf32, #tpu.memory_space<vmem>>, vector<1x8x512xf32>
    %232 = vector.shape_cast %231 : vector<1x8x512xf32> to vector<8x512xf32>
    %233 = arith.truncf %229 : vector<8x128xf32> to vector<8x128xbf16>
    %cst_70 = arith.constant dense<0.000000e+00> : vector<8x512xf32>
    %234 = tpu.matmul %233, %11, %cst_70 {dimension_numbers = #tpu.dot_dimension_numbers<[1], [0], [0], [1], [0, 0, 1, 1], [], []>} : vector<8x128xbf16>, vector<128x512xbf16>, vector<8x512xf32> -> vector<8x512xf32>
    %235 = arith.addf %232, %234 : vector<8x512xf32>
    %236 = vector.extract_strided_slice %235 {offsets = [0, 0], sizes = [8, 384], strides = [1, 1]} : vector<8x512xf32> to vector<8x384xf32>
    %cst_71 = arith.constant 5.000000e-01 : f32
    %237 = vector.broadcast %cst_71 : f32 to vector<8x384xf32>
    %238 = arith.mulf %237, %236 : vector<8x384xf32>
    %239 = math.tanh %238 : vector<8x384xf32>
    %cst_72 = arith.constant 5.000000e-01 : f32
    %240 = vector.broadcast %cst_72 : f32 to vector<8x384xf32>
    %241 = arith.mulf %239, %240 : vector<8x384xf32>
    %cst_73 = arith.constant 5.000000e-01 : f32
    %242 = vector.broadcast %cst_73 : f32 to vector<8x384xf32>
    %243 = arith.addf %241, %242 : vector<8x384xf32>
    %244 = vector.extract_strided_slice %243 {offsets = [0, 0], sizes = [8, 128], strides = [1, 1]} : vector<8x384xf32> to vector<8x128xf32>
    %245 = vector.extract_strided_slice %243 {offsets = [0, 128], sizes = [8, 128], strides = [1, 1]} : vector<8x384xf32> to vector<8x128xf32>
    %246 = vector.extract_strided_slice %243 {offsets = [0, 256], sizes = [8, 128], strides = [1, 1]} : vector<8x384xf32> to vector<8x128xf32>
    %247 = vector.extract_strided_slice %235 {offsets = [0, 384], sizes = [8, 128], strides = [1, 1]} : vector<8x512xf32> to vector<8x128xf32>
    %248 = math.tanh %247 : vector<8x128xf32>
    %249 = arith.mulf %245, %227 : vector<8x128xf32>
    %250 = arith.mulf %244, %248 : vector<8x128xf32>
    %251 = arith.addf %249, %250 : vector<8x128xf32>
    %252 = math.tanh %251 : vector<8x128xf32>
    %253 = arith.mulf %246, %252 : vector<8x128xf32>
    %c10_i32 = arith.constant 10 : i32
    %254 = arith.index_cast %c10_i32 : i32 to index
    %c0_74 = arith.constant 0 : index
    %c0_75 = arith.constant 0 : index
    %255 = vector.load %arg11[%254, %c0_74, %c0_75] : memref<16x8x512xf32, #tpu.memory_space<vmem>>, vector<1x8x512xf32>
    %256 = vector.shape_cast %255 : vector<1x8x512xf32> to vector<8x512xf32>
    %257 = arith.truncf %253 : vector<8x128xf32> to vector<8x128xbf16>
    %cst_76 = arith.constant dense<0.000000e+00> : vector<8x512xf32>
    %258 = tpu.matmul %257, %11, %cst_76 {dimension_numbers = #tpu.dot_dimension_numbers<[1], [0], [0], [1], [0, 0, 1, 1], [], []>} : vector<8x128xbf16>, vector<128x512xbf16>, vector<8x512xf32> -> vector<8x512xf32>
    %259 = arith.addf %256, %258 : vector<8x512xf32>
    %260 = vector.extract_strided_slice %259 {offsets = [0, 0], sizes = [8, 384], strides = [1, 1]} : vector<8x512xf32> to vector<8x384xf32>
    %cst_77 = arith.constant 5.000000e-01 : f32
    %261 = vector.broadcast %cst_77 : f32 to vector<8x384xf32>
    %262 = arith.mulf %261, %260 : vector<8x384xf32>
    %263 = math.tanh %262 : vector<8x384xf32>
    %cst_78 = arith.constant 5.000000e-01 : f32
    %264 = vector.broadcast %cst_78 : f32 to vector<8x384xf32>
    %265 = arith.mulf %263, %264 : vector<8x384xf32>
    %cst_79 = arith.constant 5.000000e-01 : f32
    %266 = vector.broadcast %cst_79 : f32 to vector<8x384xf32>
    %267 = arith.addf %265, %266 : vector<8x384xf32>
    %268 = vector.extract_strided_slice %267 {offsets = [0, 0], sizes = [8, 128], strides = [1, 1]} : vector<8x384xf32> to vector<8x128xf32>
    %269 = vector.extract_strided_slice %267 {offsets = [0, 128], sizes = [8, 128], strides = [1, 1]} : vector<8x384xf32> to vector<8x128xf32>
    %270 = vector.extract_strided_slice %267 {offsets = [0, 256], sizes = [8, 128], strides = [1, 1]} : vector<8x384xf32> to vector<8x128xf32>
    %271 = vector.extract_strided_slice %259 {offsets = [0, 384], sizes = [8, 128], strides = [1, 1]} : vector<8x512xf32> to vector<8x128xf32>
    %272 = math.tanh %271 : vector<8x128xf32>
    %273 = arith.mulf %269, %251 : vector<8x128xf32>
    %274 = arith.mulf %268, %272 : vector<8x128xf32>
    %275 = arith.addf %273, %274 : vector<8x128xf32>
    %276 = math.tanh %275 : vector<8x128xf32>
    %277 = arith.mulf %270, %276 : vector<8x128xf32>
    %c11_i32 = arith.constant 11 : i32
    %278 = arith.index_cast %c11_i32 : i32 to index
    %c0_80 = arith.constant 0 : index
    %c0_81 = arith.constant 0 : index
    %279 = vector.load %arg11[%278, %c0_80, %c0_81] : memref<16x8x512xf32, #tpu.memory_space<vmem>>, vector<1x8x512xf32>
    %280 = vector.shape_cast %279 : vector<1x8x512xf32> to vector<8x512xf32>
    %281 = arith.truncf %277 : vector<8x128xf32> to vector<8x128xbf16>
    %cst_82 = arith.constant dense<0.000000e+00> : vector<8x512xf32>
    %282 = tpu.matmul %281, %11, %cst_82 {dimension_numbers = #tpu.dot_dimension_numbers<[1], [0], [0], [1], [0, 0, 1, 1], [], []>} : vector<8x128xbf16>, vector<128x512xbf16>, vector<8x512xf32> -> vector<8x512xf32>
    %283 = arith.addf %280, %282 : vector<8x512xf32>
    %284 = vector.extract_strided_slice %283 {offsets = [0, 0], sizes = [8, 384], strides = [1, 1]} : vector<8x512xf32> to vector<8x384xf32>
    %cst_83 = arith.constant 5.000000e-01 : f32
    %285 = vector.broadcast %cst_83 : f32 to vector<8x384xf32>
    %286 = arith.mulf %285, %284 : vector<8x384xf32>
    %287 = math.tanh %286 : vector<8x384xf32>
    %cst_84 = arith.constant 5.000000e-01 : f32
    %288 = vector.broadcast %cst_84 : f32 to vector<8x384xf32>
    %289 = arith.mulf %287, %288 : vector<8x384xf32>
    %cst_85 = arith.constant 5.000000e-01 : f32
    %290 = vector.broadcast %cst_85 : f32 to vector<8x384xf32>
    %291 = arith.addf %289, %290 : vector<8x384xf32>
    %292 = vector.extract_strided_slice %291 {offsets = [0, 0], sizes = [8, 128], strides = [1, 1]} : vector<8x384xf32> to vector<8x128xf32>
    %293 = vector.extract_strided_slice %291 {offsets = [0, 128], sizes = [8, 128], strides = [1, 1]} : vector<8x384xf32> to vector<8x128xf32>
    %294 = vector.extract_strided_slice %291 {offsets = [0, 256], sizes = [8, 128], strides = [1, 1]} : vector<8x384xf32> to vector<8x128xf32>
    %295 = vector.extract_strided_slice %283 {offsets = [0, 384], sizes = [8, 128], strides = [1, 1]} : vector<8x512xf32> to vector<8x128xf32>
    %296 = math.tanh %295 : vector<8x128xf32>
    %297 = arith.mulf %293, %275 : vector<8x128xf32>
    %298 = arith.mulf %292, %296 : vector<8x128xf32>
    %299 = arith.addf %297, %298 : vector<8x128xf32>
    %300 = math.tanh %299 : vector<8x128xf32>
    %301 = arith.mulf %294, %300 : vector<8x128xf32>
    %c12_i32 = arith.constant 12 : i32
    %302 = arith.index_cast %c12_i32 : i32 to index
    %c0_86 = arith.constant 0 : index
    %c0_87 = arith.constant 0 : index
    %303 = vector.load %arg11[%302, %c0_86, %c0_87] : memref<16x8x512xf32, #tpu.memory_space<vmem>>, vector<1x8x512xf32>
    %304 = vector.shape_cast %303 : vector<1x8x512xf32> to vector<8x512xf32>
    %305 = arith.truncf %301 : vector<8x128xf32> to vector<8x128xbf16>
    %cst_88 = arith.constant dense<0.000000e+00> : vector<8x512xf32>
    %306 = tpu.matmul %305, %11, %cst_88 {dimension_numbers = #tpu.dot_dimension_numbers<[1], [0], [0], [1], [0, 0, 1, 1], [], []>} : vector<8x128xbf16>, vector<128x512xbf16>, vector<8x512xf32> -> vector<8x512xf32>
    %307 = arith.addf %304, %306 : vector<8x512xf32>
    %308 = vector.extract_strided_slice %307 {offsets = [0, 0], sizes = [8, 384], strides = [1, 1]} : vector<8x512xf32> to vector<8x384xf32>
    %cst_89 = arith.constant 5.000000e-01 : f32
    %309 = vector.broadcast %cst_89 : f32 to vector<8x384xf32>
    %310 = arith.mulf %309, %308 : vector<8x384xf32>
    %311 = math.tanh %310 : vector<8x384xf32>
    %cst_90 = arith.constant 5.000000e-01 : f32
    %312 = vector.broadcast %cst_90 : f32 to vector<8x384xf32>
    %313 = arith.mulf %311, %312 : vector<8x384xf32>
    %cst_91 = arith.constant 5.000000e-01 : f32
    %314 = vector.broadcast %cst_91 : f32 to vector<8x384xf32>
    %315 = arith.addf %313, %314 : vector<8x384xf32>
    %316 = vector.extract_strided_slice %315 {offsets = [0, 0], sizes = [8, 128], strides = [1, 1]} : vector<8x384xf32> to vector<8x128xf32>
    %317 = vector.extract_strided_slice %315 {offsets = [0, 128], sizes = [8, 128], strides = [1, 1]} : vector<8x384xf32> to vector<8x128xf32>
    %318 = vector.extract_strided_slice %315 {offsets = [0, 256], sizes = [8, 128], strides = [1, 1]} : vector<8x384xf32> to vector<8x128xf32>
    %319 = vector.extract_strided_slice %307 {offsets = [0, 384], sizes = [8, 128], strides = [1, 1]} : vector<8x512xf32> to vector<8x128xf32>
    %320 = math.tanh %319 : vector<8x128xf32>
    %321 = arith.mulf %317, %299 : vector<8x128xf32>
    %322 = arith.mulf %316, %320 : vector<8x128xf32>
    %323 = arith.addf %321, %322 : vector<8x128xf32>
    %324 = math.tanh %323 : vector<8x128xf32>
    %325 = arith.mulf %318, %324 : vector<8x128xf32>
    %c13_i32 = arith.constant 13 : i32
    %326 = arith.index_cast %c13_i32 : i32 to index
    %c0_92 = arith.constant 0 : index
    %c0_93 = arith.constant 0 : index
    %327 = vector.load %arg11[%326, %c0_92, %c0_93] : memref<16x8x512xf32, #tpu.memory_space<vmem>>, vector<1x8x512xf32>
    %328 = vector.shape_cast %327 : vector<1x8x512xf32> to vector<8x512xf32>
    %329 = arith.truncf %325 : vector<8x128xf32> to vector<8x128xbf16>
    %cst_94 = arith.constant dense<0.000000e+00> : vector<8x512xf32>
    %330 = tpu.matmul %329, %11, %cst_94 {dimension_numbers = #tpu.dot_dimension_numbers<[1], [0], [0], [1], [0, 0, 1, 1], [], []>} : vector<8x128xbf16>, vector<128x512xbf16>, vector<8x512xf32> -> vector<8x512xf32>
    %331 = arith.addf %328, %330 : vector<8x512xf32>
    %332 = vector.extract_strided_slice %331 {offsets = [0, 0], sizes = [8, 384], strides = [1, 1]} : vector<8x512xf32> to vector<8x384xf32>
    %cst_95 = arith.constant 5.000000e-01 : f32
    %333 = vector.broadcast %cst_95 : f32 to vector<8x384xf32>
    %334 = arith.mulf %333, %332 : vector<8x384xf32>
    %335 = math.tanh %334 : vector<8x384xf32>
    %cst_96 = arith.constant 5.000000e-01 : f32
    %336 = vector.broadcast %cst_96 : f32 to vector<8x384xf32>
    %337 = arith.mulf %335, %336 : vector<8x384xf32>
    %cst_97 = arith.constant 5.000000e-01 : f32
    %338 = vector.broadcast %cst_97 : f32 to vector<8x384xf32>
    %339 = arith.addf %337, %338 : vector<8x384xf32>
    %340 = vector.extract_strided_slice %339 {offsets = [0, 0], sizes = [8, 128], strides = [1, 1]} : vector<8x384xf32> to vector<8x128xf32>
    %341 = vector.extract_strided_slice %339 {offsets = [0, 128], sizes = [8, 128], strides = [1, 1]} : vector<8x384xf32> to vector<8x128xf32>
    %342 = vector.extract_strided_slice %339 {offsets = [0, 256], sizes = [8, 128], strides = [1, 1]} : vector<8x384xf32> to vector<8x128xf32>
    %343 = vector.extract_strided_slice %331 {offsets = [0, 384], sizes = [8, 128], strides = [1, 1]} : vector<8x512xf32> to vector<8x128xf32>
    %344 = math.tanh %343 : vector<8x128xf32>
    %345 = arith.mulf %341, %323 : vector<8x128xf32>
    %346 = arith.mulf %340, %344 : vector<8x128xf32>
    %347 = arith.addf %345, %346 : vector<8x128xf32>
    %348 = math.tanh %347 : vector<8x128xf32>
    %349 = arith.mulf %342, %348 : vector<8x128xf32>
    %c14_i32 = arith.constant 14 : i32
    %350 = arith.index_cast %c14_i32 : i32 to index
    %c0_98 = arith.constant 0 : index
    %c0_99 = arith.constant 0 : index
    %351 = vector.load %arg11[%350, %c0_98, %c0_99] : memref<16x8x512xf32, #tpu.memory_space<vmem>>, vector<1x8x512xf32>
    %352 = vector.shape_cast %351 : vector<1x8x512xf32> to vector<8x512xf32>
    %353 = arith.truncf %349 : vector<8x128xf32> to vector<8x128xbf16>
    %cst_100 = arith.constant dense<0.000000e+00> : vector<8x512xf32>
    %354 = tpu.matmul %353, %11, %cst_100 {dimension_numbers = #tpu.dot_dimension_numbers<[1], [0], [0], [1], [0, 0, 1, 1], [], []>} : vector<8x128xbf16>, vector<128x512xbf16>, vector<8x512xf32> -> vector<8x512xf32>
    %355 = arith.addf %352, %354 : vector<8x512xf32>
    %356 = vector.extract_strided_slice %355 {offsets = [0, 0], sizes = [8, 384], strides = [1, 1]} : vector<8x512xf32> to vector<8x384xf32>
    %cst_101 = arith.constant 5.000000e-01 : f32
    %357 = vector.broadcast %cst_101 : f32 to vector<8x384xf32>
    %358 = arith.mulf %357, %356 : vector<8x384xf32>
    %359 = math.tanh %358 : vector<8x384xf32>
    %cst_102 = arith.constant 5.000000e-01 : f32
    %360 = vector.broadcast %cst_102 : f32 to vector<8x384xf32>
    %361 = arith.mulf %359, %360 : vector<8x384xf32>
    %cst_103 = arith.constant 5.000000e-01 : f32
    %362 = vector.broadcast %cst_103 : f32 to vector<8x384xf32>
    %363 = arith.addf %361, %362 : vector<8x384xf32>
    %364 = vector.extract_strided_slice %363 {offsets = [0, 0], sizes = [8, 128], strides = [1, 1]} : vector<8x384xf32> to vector<8x128xf32>
    %365 = vector.extract_strided_slice %363 {offsets = [0, 128], sizes = [8, 128], strides = [1, 1]} : vector<8x384xf32> to vector<8x128xf32>
    %366 = vector.extract_strided_slice %363 {offsets = [0, 256], sizes = [8, 128], strides = [1, 1]} : vector<8x384xf32> to vector<8x128xf32>
    %367 = vector.extract_strided_slice %355 {offsets = [0, 384], sizes = [8, 128], strides = [1, 1]} : vector<8x512xf32> to vector<8x128xf32>
    %368 = math.tanh %367 : vector<8x128xf32>
    %369 = arith.mulf %365, %347 : vector<8x128xf32>
    %370 = arith.mulf %364, %368 : vector<8x128xf32>
    %371 = arith.addf %369, %370 : vector<8x128xf32>
    %372 = math.tanh %371 : vector<8x128xf32>
    %373 = arith.mulf %366, %372 : vector<8x128xf32>
    %c15_i32 = arith.constant 15 : i32
    %374 = arith.index_cast %c15_i32 : i32 to index
    %c0_104 = arith.constant 0 : index
    %c0_105 = arith.constant 0 : index
    %375 = vector.load %arg11[%374, %c0_104, %c0_105] : memref<16x8x512xf32, #tpu.memory_space<vmem>>, vector<1x8x512xf32>
    %376 = vector.shape_cast %375 : vector<1x8x512xf32> to vector<8x512xf32>
    %377 = arith.truncf %373 : vector<8x128xf32> to vector<8x128xbf16>
    %cst_106 = arith.constant dense<0.000000e+00> : vector<8x512xf32>
    %378 = tpu.matmul %377, %11, %cst_106 {dimension_numbers = #tpu.dot_dimension_numbers<[1], [0], [0], [1], [0, 0, 1, 1], [], []>} : vector<8x128xbf16>, vector<128x512xbf16>, vector<8x512xf32> -> vector<8x512xf32>
    %379 = arith.addf %376, %378 : vector<8x512xf32>
    %380 = vector.extract_strided_slice %379 {offsets = [0, 0], sizes = [8, 384], strides = [1, 1]} : vector<8x512xf32> to vector<8x384xf32>
    %cst_107 = arith.constant 5.000000e-01 : f32
    %381 = vector.broadcast %cst_107 : f32 to vector<8x384xf32>
    %382 = arith.mulf %381, %380 : vector<8x384xf32>
    %383 = math.tanh %382 : vector<8x384xf32>
    %cst_108 = arith.constant 5.000000e-01 : f32
    %384 = vector.broadcast %cst_108 : f32 to vector<8x384xf32>
    %385 = arith.mulf %383, %384 : vector<8x384xf32>
    %cst_109 = arith.constant 5.000000e-01 : f32
    %386 = vector.broadcast %cst_109 : f32 to vector<8x384xf32>
    %387 = arith.addf %385, %386 : vector<8x384xf32>
    %388 = vector.extract_strided_slice %387 {offsets = [0, 0], sizes = [8, 128], strides = [1, 1]} : vector<8x384xf32> to vector<8x128xf32>
    %389 = vector.extract_strided_slice %387 {offsets = [0, 128], sizes = [8, 128], strides = [1, 1]} : vector<8x384xf32> to vector<8x128xf32>
    %390 = vector.extract_strided_slice %387 {offsets = [0, 256], sizes = [8, 128], strides = [1, 1]} : vector<8x384xf32> to vector<8x128xf32>
    %391 = vector.extract_strided_slice %379 {offsets = [0, 384], sizes = [8, 128], strides = [1, 1]} : vector<8x512xf32> to vector<8x128xf32>
    %392 = math.tanh %391 : vector<8x128xf32>
    %393 = arith.mulf %389, %371 : vector<8x128xf32>
    %394 = arith.mulf %388, %392 : vector<8x128xf32>
    %395 = arith.addf %393, %394 : vector<8x128xf32>
    %396 = math.tanh %395 : vector<8x128xf32>
    %397 = arith.mulf %390, %396 : vector<8x128xf32>
    %c16_i32 = arith.constant 16 : i32
    %398 = arith.truncf %397 : vector<8x128xf32> to vector<8x128xbf16>
    %c0_110 = arith.constant 0 : index
    %c0_111 = arith.constant 0 : index
    %399 = vector.load %arg6[%c0_110, %c0_111] : memref<128x128xbf16, #tpu.memory_space<vmem>>, vector<128x128xbf16>
    %cst_112 = arith.constant dense<0.000000e+00> : vector<8x128xf32>
    %400 = tpu.matmul %398, %399, %cst_112 {dimension_numbers = #tpu.dot_dimension_numbers<[1], [0], [0], [1], [0, 0, 1, 1], [], []>} : vector<8x128xbf16>, vector<128x128xbf16>, vector<8x128xf32> -> vector<8x128xf32>
    %c0_113 = arith.constant 0 : index
    %c0_114 = arith.constant 0 : index
    %401 = vector.load %arg7[%c0_113, %c0_114] : memref<1x128xf32, #tpu.memory_space<vmem>>, vector<1x128xf32>
    %402 = vector.broadcast %401 : vector<1x128xf32> to vector<8x128xf32>
    %403 = arith.addf %400, %402 : vector<8x128xf32>
    %cst_115 = arith.constant 0.000000e+00 : f32
    %404 = vector.broadcast %cst_115 : f32 to vector<8x128xf32>
    %405 = arith.maximumf %403, %404 : vector<8x128xf32>
    %c0_116 = arith.constant 0 : index
    %c0_117 = arith.constant 0 : index
    %406 = vector.load %arg8[%c0_116, %c0_117] : memref<1x128xf32, #tpu.memory_space<vmem>>, vector<1x128xf32>
    %407 = vector.broadcast %406 : vector<1x128xf32> to vector<8x128xf32>
    %408 = arith.mulf %405, %407 : vector<8x128xf32>
    %cst_118 = arith.constant dense<0.000000e+00> : vector<8xf32>
    %409 = vector.multi_reduction <add>, %408, %cst_118 [1] : vector<8x128xf32> to vector<8xf32>
    %410 = vector.shape_cast %409 : vector<8xf32> to vector<8x1xf32>
    %c0_119 = arith.constant 0 : index
    %c0_120 = arith.constant 0 : index
    %411 = vector.load %arg9[%c0_119, %c0_120] : memref<1x1xf32, #tpu.memory_space<vmem>>, vector<1x1xf32>
    %412 = vector.broadcast %411 : vector<1x1xf32> to vector<8x1xf32>
    %413 = arith.addf %410, %412 : vector<8x1xf32>
    %c0_121 = arith.constant 0 : index
    %c0_122 = arith.constant 0 : index
    %414 = vector.load %arg10[%c0_121, %c0_122] : memref<8x1xf32, #tpu.memory_space<vmem>>, vector<8x1xf32>
    tpu.vector_store %arg10[%c0_121, %c0_122], %413 {strides = array<i32>} : memref<8x1xf32, #tpu.memory_space<vmem>>, vector<8x1xf32>,
    return
  }
}

</mosaic_0001>

<llo_original>
// kernel: tpu_custom_call.1
$region0: #{tpu_custom_call.1}
  #allocation0 [shape = 'u32[]', space=smem, size = 0x4, offset = 0x4, fixed_abs, tag = 'smem constant byte address 0x4 - core index']
  #allocation1 [shape = 'u32[144,128]{1,0:T(1,128)}', space=vmem, size = 0x12000, scoped, tag = 'internal scratch']
  #allocation2 [shape = 'f32[16,8,512]{2,1,0:T(8,128)}', space=vmem, size = 0x40000, scoped, tag = 'scratch operand']
  #allocation3 [shape = 'f32[1,1]{1,0:T(1,128)S(1)}', space=vmem, size = 0x200, scoped, tag = 'scoped memory for tpu_custom_call.1']
  %s0 = inlined_call_operand.vmem [shape: f32[16,8,1], index: 0, kind: input, shape index: {}]
  %s1 = inlined_call_operand.vmem [shape: f32[1,512], index: 1, kind: input, shape index: {}]
  %s2 = inlined_call_operand.hbm [shape: bf16[128,512], index: 2, kind: input, shape index: {}]
  %s3 = inlined_call_operand.vmem [shape: f32[1,512], index: 3, kind: input, shape index: {}]
  %s4 = inlined_call_operand.vmem [shape: f32[8,128], index: 4, kind: input, shape index: {}]
  %s5 = inlined_call_operand.vmem [shape: f32[8,128], index: 5, kind: input, shape index: {}]
  %s6 = inlined_call_operand.vmem [shape: bf16[128,128], index: 6, kind: input, shape index: {}]
  %s7 = inlined_call_operand.vmem [shape: f32[1,128], index: 7, kind: input, shape index: {}]
  %s8 = inlined_call_operand.vmem [shape: f32[1,128], index: 8, kind: input, shape index: {}]
  %s9 = inlined_call_operand.<no memory space> [shape: f32[1,1], index: 9, kind: input, shape index: {}]
  %s10 = inlined_call_operand.vmem [shape: f32[8,1], index: 10, kind: output, shape index: {}]
  %s11 = sld [smem:[#allocation0]]
  $region54: #{tpu_custom_call.1} parent=0
    _
  %s13 = ssub.s32 1, %s11
  %s14 = scalar_select 0, %s13, %s11
  %v15 = vstv %s9
  %16 = vst [vmem:[#allocation3] sm:$0x1] %v15
  $region1: #{tpu_custom_call.1} parent=0
    #allocation4 [shape = 'u8[131072]{0}', space=vmem, size = 0x20000, scoped, tag = 'input window, operand 2, single buffered']
    #allocation5 [shape = 's32[1]{0}', space=sflag, size = 0x4, scoped, tag = 'scoped memory for tpu_custom_call.1']
    %17 = vsyncpa [#allocation5], 0
    // Predicated region
    $region2: #{tpu_custom_call.1} parent=1 // pred_check
      _
    $region3: #{tpu_custom_call.1} parent=1 // pred_check_branch
      %19 = sbr.rel (0) target = $region5
    $region4: #{tpu_custom_call.1} parent=1 // pred_region
      _
    $region5: #{tpu_custom_call.1} parent=1 // pred_fallthru
      _
    // Predicated region
    $region6: #{tpu_custom_call.1} parent=1 // pred_check
      _
    $region7: #{tpu_custom_call.1} parent=1 // pred_check_branch
      %21 = sbr.rel (0) target = $region9
    $region8: #{tpu_custom_call.1} parent=1 // pred_region
      _
    $region9: #{tpu_custom_call.1} parent=1 // pred_fallthru
      _
    // Predicated region
    $region10: #{tpu_custom_call.1} parent=1 // pred_check
      _
    $region11: #{tpu_custom_call.1} parent=1 // pred_check_branch
      %23 = sbr.rel (0) target = $region13
    $region12: #{tpu_custom_call.1} parent=1 // pred_region
      %s25 = ssub.s32 4096, 4096
      %26 = vsyncadd [#allocation5], %s25
      %s27 = sshll.u32 [#allocation4], 4
      %s28 = int_to_ptr.vmem [resolvable:$true] %s27
      %33 = dma.hbm_to_vmem [thread:$0]  %s2, 4096, %s28, [#allocation5], 256, 256, 16
    $region13: #{tpu_custom_call.1} parent=1 // pred_fallthru
      _
    // Predicated region
    $region14: #{tpu_custom_call.1} parent=1 // pred_check
      _
    $region15: #{tpu_custom_call.1} parent=1 // pred_check_branch
      %35 = sbr.rel (0) target = $region17
    $region16: #{tpu_custom_call.1} parent=1 // pred_region
      _
    $region17: #{tpu_custom_call.1} parent=1 // pred_fallthru
      _
    // Predicated region
    $region18: #{tpu_custom_call.1} parent=1 // pred_check
      _
    $region19: #{tpu_custom_call.1} parent=1 // pred_check_branch
      %37 = sbr.rel (0) target = $region21
    $region20: #{tpu_custom_call.1} parent=1 // pred_region
      _
    $region21: #{tpu_custom_call.1} parent=1 // pred_fallthru
      _
    // Predicated region
    $region22: #{tpu_custom_call.1} parent=1 // pred_check
      _
    $region23: #{tpu_custom_call.1} parent=1 // pred_check_branch
      %39 = sbr.rel (0) target = $region25
    $region24: #{tpu_custom_call.1} parent=1 // pred_region
      _
    $region25: #{tpu_custom_call.1} parent=1 // pred_fallthru
      _
    // Predicated region
    $region26: #{tpu_custom_call.1} parent=1 // pred_check
      _
    $region27: #{tpu_custom_call.1} parent=1 // pred_check_branch
      %41 = sbr.rel (0) target = $region29
    $region28: #{tpu_custom_call.1} parent=1 // pred_region
      _
    $region29: #{tpu_custom_call.1} parent=1 // pred_fallthru
      _
    // Predicated region
    $region30: #{tpu_custom_call.1} parent=1 // pred_check
      _
    $region31: #{tpu_custom_call.1} parent=1 // pred_check_branch
      %43 = sbr.rel (0) target = $region33
    $region32: #{tpu_custom_call.1} parent=1 // pred_region
      _
    $region33: #{tpu_custom_call.1} parent=1 // pred_fallthru
      _
    // Predicated region
    $region34: #{tpu_custom_call.1} parent=1 // pred_check
      _
    $region35: #{tpu_custom_call.1} parent=1 // pred_check_branch
      %45 = sbr.rel (0) target = $region37
    $region36: #{tpu_custom_call.1} parent=1 // pred_region
      _
    $region37: #{tpu_custom_call.1} parent=1 // pred_fallthru
      _
    // Predicated region
    $region38: #{tpu_custom_call.1} parent=1 // pred_check
      _
    $region39: #{tpu_custom_call.1} parent=1 // pred_check_branch
      %47 = sbr.rel (0) target = $region41
    $region40: #{tpu_custom_call.1} parent=1 // pred_region
      _
    $region41: #{tpu_custom_call.1} parent=1 // pred_fallthru
      _
    // Predicated region
    $region42: #{tpu_custom_call.1} parent=1 // pred_check
      _
    $region43: #{tpu_custom_call.1} parent=1 // pred_check_branch
      %49 = sbr.rel (0) target = $region45
    $region44: #{tpu_custom_call.1} parent=1 // pred_region
      %50 = dma.done [#allocation5], 4096
    $region45: #{tpu_custom_call.1} parent=1 // pred_fallthru
      _
    %v52 = vld [vmem:[%s0] sm:$0xff]
    %v53 = vld [vmem:[%s0 + $0x8] sm:$0xff]
    %v54 = vld [vmem:[%s0 + $0x10] sm:$0xff]
    %v55 = vld [vmem:[%s0 + $0x18] sm:$0xff]
    %v56 = vld [vmem:[%s0 + $0x20] sm:$0xff]
    %v57 = vld [vmem:[%s0 + $0x28] sm:$0xff]
    %v58 = vld [vmem:[%s0 + $0x30] sm:$0xff]
    %v59 = vld [vmem:[%s0 + $0x38] sm:$0xff]
    %v60 = vld [vmem:[%s0 + $0x40] sm:$0xff]
    %v61 = vld [vmem:[%s0 + $0x48] sm:$0xff]
    %v62 = vld [vmem:[%s0 + $0x50] sm:$0xff]
    %v63 = vld [vmem:[%s0 + $0x58] sm:$0xff]
    %v64 = vld [vmem:[%s0 + $0x60] sm:$0xff]
    %v65 = vld [vmem:[%s0 + $0x68] sm:$0xff]
    %v66 = vld [vmem:[%s0 + $0x70] sm:$0xff]
    %v67 = vld [vmem:[%s0 + $0x78] sm:$0xff]
    %v68 = vld [vmem:[%s1] sm:$0xf]
    %70 = vset.pattern.permute.xlu0 0
    %71 = vperm.xlu0 %70, %v52
    %v72 = vpop.permute.xlu0 %71
    %75 = vset.pattern.permute.xlu0 0
    %76 = vperm.xlu0 %75, %v53
    %v77 = vpop.permute.xlu0 %76
    %80 = vset.pattern.permute.xlu0 0
    %81 = vperm.xlu0 %80, %v54
    %v82 = vpop.permute.xlu0 %81
    %85 = vset.pattern.permute.xlu0 0
    %86 = vperm.xlu0 %85, %v55
    %v87 = vpop.permute.xlu0 %86
    %90 = vset.pattern.permute.xlu0 0
    %91 = vperm.xlu0 %90, %v56
    %v92 = vpop.permute.xlu0 %91
    %95 = vset.pattern.permute.xlu0 0
    %96 = vperm.xlu0 %95, %v57
    %v97 = vpop.permute.xlu0 %96
    %100 = vset.pattern.permute.xlu0 0
    %101 = vperm.xlu0 %100, %v58
    %v102 = vpop.permute.xlu0 %101
    %105 = vset.pattern.permute.xlu0 0
    %106 = vperm.xlu0 %105, %v59
    %v107 = vpop.permute.xlu0 %106
    %110 = vset.pattern.permute.xlu0 0
    %111 = vperm.xlu0 %110, %v60
    %v112 = vpop.permute.xlu0 %111
    %115 = vset.pattern.permute.xlu0 0
    %116 = vperm.xlu0 %115, %v61
    %v117 = vpop.permute.xlu0 %116
    %120 = vset.pattern.permute.xlu0 0
    %121 = vperm.xlu0 %120, %v62
    %v122 = vpop.permute.xlu0 %121
    %125 = vset.pattern.permute.xlu0 0
    %126 = vperm.xlu0 %125, %v63
    %v127 = vpop.permute.xlu0 %126
    %130 = vset.pattern.permute.xlu0 0
    %131 = vperm.xlu0 %130, %v64
    %v132 = vpop.permute.xlu0 %131
    %135 = vset.pattern.permute.xlu0 0
    %136 = vperm.xlu0 %135, %v65
    %v137 = vpop.permute.xlu0 %136
    %140 = vset.pattern.permute.xlu0 0
    %141 = vperm.xlu0 %140, %v66
    %v142 = vpop.permute.xlu0 %141
    %145 = vset.pattern.permute.xlu0 0
    %146 = vperm.xlu0 %145, %v67
    %v147 = vpop.permute.xlu0 %146
    %v150 = vlaneseq
    %v151 = vshrl.u32 %v150, 7
    %v152 = vsub.s32 0, %v151
    %v153 = vrot.slane %v68, %v152
    %v154 = vlaneseq
    %v155 = vshrl.u32 %v154, 7
    %v156 = vsub.s32 1, %v155
    %v157 = vrot.slane %v68, %v156
    %v158 = vlaneseq
    %v159 = vshrl.u32 %v158, 7
    %v160 = vsub.s32 2, %v159
    %v161 = vrot.slane %v68, %v160
    %v162 = vlaneseq
    %v163 = vshrl.u32 %v162, 7
    %v164 = vsub.s32 3, %v163
    %v165 = vrot.slane %v68, %v164
    %v170 = vmul.f32 %v72, %v153
    %v171 = vmul.f32 %v72, %v157
    %v172 = vmul.f32 %v72, %v161
    %v173 = vmul.f32 %v72, %v165
    %v174 = vmul.f32 %v77, %v153
    %v175 = vmul.f32 %v77, %v157
    %v176 = vmul.f32 %v77, %v161
    %v177 = vmul.f32 %v77, %v165
    %v178 = vmul.f32 %v82, %v153
    %v179 = vmul.f32 %v82, %v157
    %v180 = vmul.f32 %v82, %v161
    %v181 = vmul.f32 %v82, %v165
    %v182 = vmul.f32 %v87, %v153
    %v183 = vmul.f32 %v87, %v157
    %v184 = vmul.f32 %v87, %v161
    %v185 = vmul.f32 %v87, %v165
    %v186 = vmul.f32 %v92, %v153
    %v187 = vmul.f32 %v92, %v157
    %v188 = vmul.f32 %v92, %v161
    %v189 = vmul.f32 %v92, %v165
    %v190 = vmul.f32 %v97, %v153
    %v191 = vmul.f32 %v97, %v157
    %v192 = vmul.f32 %v97, %v161
    %v193 = vmul.f32 %v97, %v165
    %v194 = vmul.f32 %v102, %v153
    %v195 = vmul.f32 %v102, %v157
    %v196 = vmul.f32 %v102, %v161
    %v197 = vmul.f32 %v102, %v165
    %v198 = vmul.f32 %v107, %v153
    %v199 = vmul.f32 %v107, %v157
    %v200 = vmul.f32 %v107, %v161
    %v201 = vmul.f32 %v107, %v165
    %v202 = vmul.f32 %v112, %v153
    %v203 = vmul.f32 %v112, %v157
    %v204 = vmul.f32 %v112, %v161
    %v205 = vmul.f32 %v112, %v165
    %v206 = vmul.f32 %v117, %v153
    %v207 = vmul.f32 %v117, %v157
    %v208 = vmul.f32 %v117, %v161
    %v209 = vmul.f32 %v117, %v165
    %v210 = vmul.f32 %v122, %v153
    %v211 = vmul.f32 %v122, %v157
    %v212 = vmul.f32 %v122, %v161
    %v213 = vmul.f32 %v122, %v165
    %v214 = vmul.f32 %v127, %v153
    %v215 = vmul.f32 %v127, %v157
    %v216 = vmul.f32 %v127, %v161
    %v217 = vmul.f32 %v127, %v165
    %v218 = vmul.f32 %v132, %v153
    %v219 = vmul.f32 %v132, %v157
    %v220 = vmul.f32 %v132, %v161
    %v221 = vmul.f32 %v132, %v165
    %v222 = vmul.f32 %v137, %v153
    %v223 = vmul.f32 %v137, %v157
    %v224 = vmul.f32 %v137, %v161
    %v225 = vmul.f32 %v137, %v165
    %v226 = vmul.f32 %v142, %v153
    %v227 = vmul.f32 %v142, %v157
    %v228 = vmul.f32 %v142, %v161
    %v229 = vmul.f32 %v142, %v165
    %v230 = vmul.f32 %v147, %v153
    %v231 = vmul.f32 %v147, %v157
    %v232 = vmul.f32 %v147, %v161
    %v233 = vmul.f32 %v147, %v165
    %v234 = vld [vmem:[%s3] sm:$0xf]
    %v236 = vlaneseq
    %v237 = vshrl.u32 %v236, 7
    %v238 = vsub.s32 0, %v237
    %v239 = vrot.slane %v234, %v238
    %v240 = vlaneseq
    %v241 = vshrl.u32 %v240, 7
    %v242 = vsub.s32 1, %v241
    %v243 = vrot.slane %v234, %v242
    %v244 = vlaneseq
    %v245 = vshrl.u32 %v244, 7
    %v246 = vsub.s32 2, %v245
    %v247 = vrot.slane %v234, %v246
    %v248 = vlaneseq
    %v249 = vshrl.u32 %v248, 7
    %v250 = vsub.s32 3, %v249
    %v251 = vrot.slane %v234, %v250
    %v256 = vadd.f32 %v170, %v239
    %v257 = vadd.f32 %v171, %v243
    %v258 = vadd.f32 %v172, %v247
    %v259 = vadd.f32 %v173, %v251
    %v260 = vadd.f32 %v174, %v239
    %v261 = vadd.f32 %v175, %v243
    %v262 = vadd.f32 %v176, %v247
    %v263 = vadd.f32 %v177, %v251
    %v264 = vadd.f32 %v178, %v239
    %v265 = vadd.f32 %v179, %v243
    %v266 = vadd.f32 %v180, %v247
    %v267 = vadd.f32 %v181, %v251
    %v268 = vadd.f32 %v182, %v239
    %v269 = vadd.f32 %v183, %v243
    %v270 = vadd.f32 %v184, %v247
    %v271 = vadd.f32 %v185, %v251
    %v272 = vadd.f32 %v186, %v239
    %v273 = vadd.f32 %v187, %v243
    %v274 = vadd.f32 %v188, %v247
    %v275 = vadd.f32 %v189, %v251
    %v276 = vadd.f32 %v190, %v239
    %v277 = vadd.f32 %v191, %v243
    %v278 = vadd.f32 %v192, %v247
    %v279 = vadd.f32 %v193, %v251
    %v280 = vadd.f32 %v194, %v239
    %v281 = vadd.f32 %v195, %v243
    %v282 = vadd.f32 %v196, %v247
    %v283 = vadd.f32 %v197, %v251
    %v284 = vadd.f32 %v198, %v239
    %v285 = vadd.f32 %v199, %v243
    %v286 = vadd.f32 %v200, %v247
    %v287 = vadd.f32 %v201, %v251
    %v288 = vadd.f32 %v202, %v239
    %v289 = vadd.f32 %v203, %v243
    %v290 = vadd.f32 %v204, %v247
    %v291 = vadd.f32 %v205, %v251
    %v292 = vadd.f32 %v206, %v239
    %v293 = vadd.f32 %v207, %v243
    %v294 = vadd.f32 %v208, %v247
    %v295 = vadd.f32 %v209, %v251
    %v296 = vadd.f32 %v210, %v239
    %v297 = vadd.f32 %v211, %v243
    %v298 = vadd.f32 %v212, %v247
    %v299 = vadd.f32 %v213, %v251
    %v300 = vadd.f32 %v214, %v239
    %v301 = vadd.f32 %v215, %v243
    %v302 = vadd.f32 %v216, %v247
    %v303 = vadd.f32 %v217, %v251
    %v304 = vadd.f32 %v218, %v239
    %v305 = vadd.f32 %v219, %v243
    %v306 = vadd.f32 %v220, %v247
    %v307 = vadd.f32 %v221, %v251
    %v308 = vadd.f32 %v222, %v239
    %v309 = vadd.f32 %v223, %v243
    %v310 = vadd.f32 %v224, %v247
    %v311 = vadd.f32 %v225, %v251
    %v312 = vadd.f32 %v226, %v239
    %v313 = vadd.f32 %v227, %v243
    %v314 = vadd.f32 %v228, %v247
    %v315 = vadd.f32 %v229, %v251
    %v316 = vadd.f32 %v230, %v239
    %v317 = vadd.f32 %v231, %v243
    %v318 = vadd.f32 %v232, %v247
    %v319 = vadd.f32 %v233, %v251
    %320 = vst [vmem:[#allocation2] sm:$0xff] %v256
    %321 = vst [vmem:[#allocation2 + $0x8] sm:$0xff] %v257
    %322 = vst [vmem:[#allocation2 + $0x10] sm:$0xff] %v258
    %323 = vst [vmem:[#allocation2 + $0x18] sm:$0xff] %v259
    %324 = vst [vmem:[#allocation2 + $0x20] sm:$0xff] %v260
    %325 = vst [vmem:[#allocation2 + $0x28] sm:$0xff] %v261
    %326 = vst [vmem:[#allocation2 + $0x30] sm:$0xff] %v262
    %327 = vst [vmem:[#allocation2 + $0x38] sm:$0xff] %v263
    %328 = vst [vmem:[#allocation2 + $0x40] sm:$0xff] %v264
    %329 = vst [vmem:[#allocation2 + $0x48] sm:$0xff] %v265
    %330 = vst [vmem:[#allocation2 + $0x50] sm:$0xff] %v266
    %331 = vst [vmem:[#allocation2 + $0x58] sm:$0xff] %v267
    %332 = vst [vmem:[#allocation2 + $0x60] sm:$0xff] %v268
    %333 = vst [vmem:[#allocation2 + $0x68] sm:$0xff] %v269
    %334 = vst [vmem:[#allocation2 + $0x70] sm:$0xff] %v270
    %335 = vst [vmem:[#allocation2 + $0x78] sm:$0xff] %v271
    %336 = vst [vmem:[#allocation2 + $0x80] sm:$0xff] %v272
    %337 = vst [vmem:[#allocation2 + $0x88] sm:$0xff] %v273
    %338 = vst [vmem:[#allocation2 + $0x90] sm:$0xff] %v274
    %339 = vst [vmem:[#allocation2 + $0x98] sm:$0xff] %v275
    %340 = vst [vmem:[#allocation2 + $0xa0] sm:$0xff] %v276
    %341 = vst [vmem:[#allocation2 + $0xa8] sm:$0xff] %v277
    %342 = vst [vmem:[#allocation2 + $0xb0] sm:$0xff] %v278
    %343 = vst [vmem:[#allocation2 + $0xb8] sm:$0xff] %v279
    %344 = vst [vmem:[#allocation2 + $0xc0] sm:$0xff] %v280
    %345 = vst [vmem:[#allocation2 + $0xc8] sm:$0xff] %v281
    %346 = vst [vmem:[#allocation2 + $0xd0] sm:$0xff] %v282
    %347 = vst [vmem:[#allocation2 + $0xd8] sm:$0xff] %v283
    %348 = vst [vmem:[#allocation2 + $0xe0] sm:$0xff] %v284
    %349 = vst [vmem:[#allocation2 + $0xe8] sm:$0xff] %v285
    %350 = vst [vmem:[#allocation2 + $0xf0] sm:$0xff] %v286
    %351 = vst [vmem:[#allocation2 + $0xf8] sm:$0xff] %v287
    %352 = vst [vmem:[#allocation2 + $0x100] sm:$0xff] %v288
    %353 = vst [vmem:[#allocation2 + $0x108] sm:$0xff] %v289
    %354 = vst [vmem:[#allocation2 + $0x110] sm:$0xff] %v290
    %355 = vst [vmem:[#allocation2 + $0x118] sm:$0xff] %v291
    %356 = vst [vmem:[#allocation2 + $0x120] sm:$0xff] %v292
    %357 = vst [vmem:[#allocation2 + $0x128] sm:$0xff] %v293
    %358 = vst [vmem:[#allocation2 + $0x130] sm:$0xff] %v294
    %359 = vst [vmem:[#allocation2 + $0x138] sm:$0xff] %v295
    %360 = vst [vmem:[#allocation2 + $0x140] sm:$0xff] %v296
    %361 = vst [vmem:[#allocation2 + $0x148] sm:$0xff] %v297
    %362 = vst [vmem:[#allocation2 + $0x150] sm:$0xff] %v298
    %363 = vst [vmem:[#allocation2 + $0x158] sm:$0xff] %v299
    %364 = vst [vmem:[#allocation2 + $0x160] sm:$0xff] %v300
    %365 = vst [vmem:[#allocation2 + $0x168] sm:$0xff] %v301
    %366 = vst [vmem:[#allocation2 + $0x170] sm:$0xff] %v302
    %367 = vst [vmem:[#allocation2 + $0x178] sm:$0xff] %v303
    %368 = vst [vmem:[#allocation2 + $0x180] sm:$0xff] %v304
    %369 = vst [vmem:[#allocation2 + $0x188] sm:$0xff] %v305
    %370 = vst [vmem:[#allocation2 + $0x190] sm:$0xff] %v306
    %371 = vst [vmem:[#allocation2 + $0x198] sm:$0xff] %v307
    %372 = vst [vmem:[#allocation2 + $0x1a0] sm:$0xff] %v308
    %373 = vst [vmem:[#allocation2 + $0x1a8] sm:$0xff] %v309
    %374 = vst [vmem:[#allocation2 + $0x1b0] sm:$0xff] %v310
    %375 = vst [vmem:[#allocation2 + $0x1b8] sm:$0xff] %v311
    %376 = vst [vmem:[#allocation2 + $0x1c0] sm:$0xff] %v312
    %377 = vst [vmem:[#allocation2 + $0x1c8] sm:$0xff] %v313
    %378 = vst [vmem:[#allocation2 + $0x1d0] sm:$0xff] %v314
    %379 = vst [vmem:[#allocation2 + $0x1d8] sm:$0xff] %v315
    %380 = vst [vmem:[#allocation2 + $0x1e0] sm:$0xff] %v316
    %381 = vst [vmem:[#allocation2 + $0x1e8] sm:$0xff] %v317
    %382 = vst [vmem:[#allocation2 + $0x1f0] sm:$0xff] %v318
    %383 = vst [vmem:[#allocation2 + $0x1f8] sm:$0xff] %v319
    %v384 = vld [vmem:[#allocation4] sm:$0xff]
    %v385 = vld [vmem:[#allocation4 + $0x8] sm:$0xff]
    %v386 = vld [vmem:[#allocation4 + $0x10] sm:$0xff]
    %v387 = vld [vmem:[#allocation4 + $0x18] sm:$0xff]
    %v388 = vld [vmem:[#allocation4 + $0x20] sm:$0xff]
    %v389 = vld [vmem:[#allocation4 + $0x28] sm:$0xff]
    %v390 = vld [vmem:[#allocation4 + $0x30] sm:$0xff]
    %v391 = vld [vmem:[#allocation4 + $0x38] sm:$0xff]
    %v392 = vld [vmem:[#allocation4 + $0x40] sm:$0xff]
    %v393 = vld [vmem:[#allocation4 + $0x48] sm:$0xff]
    %v394 = vld [vmem:[#allocation4 + $0x50] sm:$0xff]
    %v395 = vld [vmem:[#allocation4 + $0x58] sm:$0xff]
    %v396 = vld [vmem:[#allocation4 + $0x60] sm:$0xff]
    %v397 = vld [vmem:[#allocation4 + $0x68] sm:$0xff]
    %v398 = vld [vmem:[#allocation4 + $0x70] sm:$0xff]
    %v399 = vld [vmem:[#allocation4 + $0x78] sm:$0xff]
    %v400 = vld [vmem:[#allocation4 + $0x80] sm:$0xff]
    %v401 = vld [vmem:[#allocation4 + $0x88] sm:$0xff]
    %v402 = vld [vmem:[#allocation4 + $0x90] sm:$0xff]
    %v403 = vld [vmem:[#allocation4 + $0x98] sm:$0xff]
    %v404 = vld [vmem:[#allocation4 + $0xa0] sm:$0xff]
    %v405 = vld [vmem:[#allocation4 + $0xa8] sm:$0xff]
    %v406 = vld [vmem:[#allocation4 + $0xb0] sm:$0xff]
    %v407 = vld [vmem:[#allocation4 + $0xb8] sm:$0xff]
    %v408 = vld [vmem:[#allocation4 + $0xc0] sm:$0xff]
    %v409 = vld [vmem:[#allocation4 + $0xc8] sm:$0xff]
    %v410 = vld [vmem:[#allocation4 + $0xd0] sm:$0xff]
    %v411 = vld [vmem:[#allocation4 + $0xd8] sm:$0xff]
    %v412 = vld [vmem:[#allocation4 + $0xe0] sm:$0xff]
    %v413 = vld [vmem:[#allocation4 + $0xe8] sm:$0xff]
    %v414 = vld [vmem:[#allocation4 + $0xf0] sm:$0xff]
    %v415 = vld [vmem:[#allocation4 + $0xf8] sm:$0xff]
    %v416 = vld [vmem:[%s4] sm:$0xff]
    %v417 = vld [vmem:[%s5] sm:$0xff]
    %v418 = vld [vmem:[#allocation2] sm:$0xff]
    %v419 = vld [vmem:[#allocation2 + $0x8] sm:$0xff]
    %v420 = vld [vmem:[#allocation2 + $0x10] sm:$0xff]
    %v421 = vld [vmem:[#allocation2 + $0x18] sm:$0xff]
    %v422 = vpack.c.bf16 %v416, %v416
    %v455 = vunpack.c.l.b16 %v384
    %v456 = vunpack.c.h.b16 %v384
    %v457 = vunpack.c.l.b16 %v385
    %v458 = vunpack.c.h.b16 %v385
    %v459 = vunpack.c.l.b16 %v386
    %v460 = vunpack.c.h.b16 %v386
    %v461 = vunpack.c.l.b16 %v387
    %v462 = vunpack.c.h.b16 %v387
    %v463 = vunpack.c.l.b16 %v388
    %v464 = vunpack.c.h.b16 %v388
    %v465 = vunpack.c.l.b16 %v389
    %v466 = vunpack.c.h.b16 %v389
    %v467 = vunpack.c.l.b16 %v390
    %v468 = vunpack.c.h.b16 %v390
    %v469 = vunpack.c.l.b16 %v391
    %v470 = vunpack.c.h.b16 %v391
    %v471 = vunpack.c.l.b16 %v392
    %v472 = vunpack.c.h.b16 %v392
    %v473 = vunpack.c.l.b16 %v393
    %v474 = vunpack.c.h.b16 %v393
    %v475 = vunpack.c.l.b16 %v394
    %v476 = vunpack.c.h.b16 %v394
    %v477 = vunpack.c.l.b16 %v395
    %v478 = vunpack.c.h.b16 %v395
    %v479 = vunpack.c.l.b16 %v396
    %v480 = vunpack.c.h.b16 %v396
    %v481 = vunpack.c.l.b16 %v397
    %v482 = vunpack.c.h.b16 %v397
    %v483 = vunpack.c.l.b16 %v398
    %v484 = vunpack.c.h.b16 %v398
    %v485 = vunpack.c.l.b16 %v399
    %v486 = vunpack.c.h.b16 %v399
    %v487 = vunpack.c.l.b16 %v400
    %v488 = vunpack.c.h.b16 %v400
    %v489 = vunpack.c.l.b16 %v401
    %v490 = vunpack.c.h.b16 %v401
    %v491 = vunpack.c.l.b16 %v402
    %v492 = vunpack.c.h.b16 %v402
    %v493 = vunpack.c.l.b16 %v403
    %v494 = vunpack.c.h.b16 %v403
    %v495 = vunpack.c.l.b16 %v404
    %v496 = vunpack.c.h.b16 %v404
    %v497 = vunpack.c.l.b16 %v405
    %v498 = vunpack.c.h.b16 %v405
    %v499 = vunpack.c.l.b16 %v406
    %v500 = vunpack.c.h.b16 %v406
    %v501 = vunpack.c.l.b16 %v407
    %v502 = vunpack.c.h.b16 %v407
    %v503 = vunpack.c.l.b16 %v408
    %v504 = vunpack.c.h.b16 %v408
    %v505 = vunpack.c.l.b16 %v409
    %v506 = vunpack.c.h.b16 %v409
    %v507 = vunpack.c.l.b16 %v410
    %v508 = vunpack.c.h.b16 %v410
    %v509 = vunpack.c.l.b16 %v411
    %v510 = vunpack.c.h.b16 %v411
    %v511 = vunpack.c.l.b16 %v412
    %v512 = vunpack.c.h.b16 %v412
    %v513 = vunpack.c.l.b16 %v413
    %v514 = vunpack.c.h.b16 %v413
    %v515 = vunpack.c.l.b16 %v414
    %v516 = vunpack.c.h.b16 %v414
    %v517 = vunpack.c.l.b16 %v415
    %v518 = vunpack.c.h.b16 %v415
    %v519 = vpack.c.b16 %v459, %v455
    %v520 = vpack.c.b16 %v460, %v456
    %v521 = vpack.c.b16 %v461, %v457
    %v522 = vpack.c.b16 %v462, %v458
    %v523 = vpack.c.b16 %v467, %v463
    %v524 = vpack.c.b16 %v468, %v464
    %v525 = vpack.c.b16 %v469, %v465
    %v526 = vpack.c.b16 %v470, %v466
    %v527 = vpack.c.b16 %v475, %v471
    %v528 = vpack.c.b16 %v476, %v472
    %v529 = vpack.c.b16 %v477, %v473
    %v530 = vpack.c.b16 %v478, %v474
    %v531 = vpack.c.b16 %v483, %v479
    %v532 = vpack.c.b16 %v484, %v480
    %v533 = vpack.c.b16 %v485, %v481
    %v534 = vpack.c.b16 %v486, %v482
    %v535 = vpack.c.b16 %v491, %v487
    %v536 = vpack.c.b16 %v492, %v488
    %v537 = vpack.c.b16 %v493, %v489
    %v538 = vpack.c.b16 %v494, %v490
    %v539 = vpack.c.b16 %v499, %v495
    %v540 = vpack.c.b16 %v500, %v496
    %v541 = vpack.c.b16 %v501, %v497
    %v542 = vpack.c.b16 %v502, %v498
    %v543 = vpack.c.b16 %v507, %v503
    %v544 = vpack.c.b16 %v508, %v504
    %v545 = vpack.c.b16 %v509, %v505
    %v546 = vpack.c.b16 %v510, %v506
    %v547 = vpack.c.b16 %v515, %v511
    %v548 = vpack.c.b16 %v516, %v512
    %v549 = vpack.c.b16 %v517, %v513
    %v550 = vpack.c.b16 %v518, %v514
    %583 = vmatprep.subr.bf16.mxu0 %v548
    %584 = vmatpush1.bf16.msra.mxu0 %v547
    %585 = vmatprep.subr.bf16.mxu0 %v544
    %586 = vmatpush1.bf16.msra.mxu0 %v543
    %587 = vmatprep.subr.bf16.mxu0 %v540
    %588 = vmatpush1.bf16.msra.mxu0 %v539
    %589 = vmatprep.subr.bf16.mxu0 %v536
    %590 = vmatpush1.bf16.msra.mxu0 %v535
    %591 = vmatprep.subr.bf16.mxu0 %v532
    %592 = vmatpush1.bf16.msra.mxu0 %v531
    %593 = vmatprep.subr.bf16.mxu0 %v528
    %594 = vmatpush1.bf16.msra.mxu0 %v527
    %595 = vmatprep.subr.bf16.mxu0 %v524
    %596 = vmatpush1.bf16.msra.mxu0 %v523
    %597 = vmatprep.subr.bf16.mxu0 %v520
    %598 = vmatpush1.bf16.msra.mxu0 %v519
    %599 = vmatprep.subr.bf16.mxu0 0
    %600 = vmatpush2.bf16.msra.mxu0 0
    %601 = vmatprep.subr.bf16.mxu0 0
    %602 = vmatpush2.bf16.msra.mxu0 0
    %603 = vmatprep.subr.bf16.mxu0 0
    %604 = vmatpush2.bf16.msra.mxu0 0
    %605 = vmatprep.subr.bf16.mxu0 0
    %606 = vmatpush2.bf16.msra.mxu0 0
    %607 = vmatprep.subr.bf16.mxu0 0
    %608 = vmatpush2.bf16.msra.mxu0 0
    %609 = vmatprep.subr.bf16.mxu0 0
    %610 = vmatpush2.bf16.msra.mxu0 0
    %611 = vmatprep.subr.bf16.mxu0 0
    %612 = vmatpush2.bf16.msra.mxu0 0
    %613 = vmatprep.subr.bf16.mxu0 0
    %614 = vmatpush2.bf16.msra.mxu0 0
    %615 = vmatprep.mubr.bf16.mxu0 0
    %616 = vmatmul.mubr.bf16.gmra.mxu0 %v422
    %v617 = vpop.f32.mrf.mxu0
    %v618 = vadd.f32 0.0, %v617
    %v619 = vpop.f32.mrf.mxu0
    %v620 = vadd.f32 0.0, %v619
    %v621 = vpop.f32.mrf.mxu0
    %v622 = vpop.f32.mrf.mxu0
    %623 = vdwg.mxu0
    %624 = vmatprep.subr.bf16.mxu0 %v550
    %625 = vmatpush1.bf16.msra.mxu0 %v549
    %626 = vmatprep.subr.bf16.mxu0 %v546
    %627 = vmatpush1.bf16.msra.mxu0 %v545
    %628 = vmatprep.subr.bf16.mxu0 %v542
    %629 = vmatpush1.bf16.msra.mxu0 %v541
    %630 = vmatprep.subr.bf16.mxu0 %v538
    %631 = vmatpush1.bf16.msra.mxu0 %v537
    %632 = vmatprep.subr.bf16.mxu0 %v534
    %633 = vmatpush1.bf16.msra.mxu0 %v533
    %634 = vmatprep.subr.bf16.mxu0 %v530
    %635 = vmatpush1.bf16.msra.mxu0 %v529
    %636 = vmatprep.subr.bf16.mxu0 %v526
    %637 = vmatpush1.bf16.msra.mxu0 %v525
    %638 = vmatprep.subr.bf16.mxu0 %v522
    %639 = vmatpush1.bf16.msra.mxu0 %v521
    %640 = vmatprep.subr.bf16.mxu0 0
    %641 = vmatpush2.bf16.msra.mxu0 0
    %642 = vmatprep.subr.bf16.mxu0 0
    %643 = vmatpush2.bf16.msra.mxu0 0
    %644 = vmatprep.subr.bf16.mxu0 0
    %645 = vmatpush2.bf16.msra.mxu0 0
    %646 = vmatprep.subr.bf16.mxu0 0
    %647 = vmatpush2.bf16.msra.mxu0 0
    %648 = vmatprep.subr.bf16.mxu0 0
    %649 = vmatpush2.bf16.msra.mxu0 0
    %650 = vmatprep.subr.bf16.mxu0 0
    %651 = vmatpush2.bf16.msra.mxu0 0
    %652 = vmatprep.subr.bf16.mxu0 0
    %653 = vmatpush2.bf16.msra.mxu0 0
    %654 = vmatprep.subr.bf16.mxu0 0
    %655 = vmatpush2.bf16.msra.mxu0 0
    %656 = vmatprep.mubr.bf16.mxu0 0
    %657 = vmatmul.mubr.bf16.gmra.mxu0 %v422
    %v658 = vpop.f32.mrf.mxu0
    %v659 = vadd.f32 0.0, %v658
    %v660 = vpop.f32.mrf.mxu0
    %v661 = vadd.f32 0.0, %v660
    %v662 = vpop.f32.mrf.mxu0
    %v663 = vpop.f32.mrf.mxu0
    %664 = vdwg.mxu0
    %v665 = vadd.f32 %v418, %v618
    %v666 = vadd.f32 %v419, %v620
    %v667 = vadd.f32 %v420, %v659
    %v668 = vadd.f32 %v421, %v661
    %v669 = vmul.f32 %v665, 0.5
    %v670 = vmul.f32 %v666, 0.5
    %v671 = vmul.f32 %v667, 0.5
    %v672 = vtanh.pop %v669
    %v673 = vtanh.pop %v670
    %v674 = vtanh.pop %v671
    %v675 = vmul.f32 %v672, 0.5
    %v676 = vmul.f32 %v673, 0.5
    %v677 = vmul.f32 %v674, 0.5
    %v678 = vadd.f32 %v675, 0.5
    %v679 = vadd.f32 %v676, 0.5
    %v680 = vadd.f32 %v677, 0.5
    %v681 = vtanh.pop %v668
    %v682 = vmul.f32 %v679, %v417
    %v683 = vmul.f32 %v678, %v681
    %v684 = vadd.f32 %v682, %v683
    %v685 = vtanh.pop %v684
    %v686 = vmul.f32 %v680, %v685
    %s687 = scalar_lea.vmem [#allocation2], 32
    %v688 = vld [vmem:[%s687] sm:$0xff]
    %v689 = vld [vmem:[%s687 + $0x8] sm:$0xff]
    %v690 = vld [vmem:[%s687 + $0x10] sm:$0xff]
    %v691 = vld [vmem:[%s687 + $0x18] sm:$0xff]
    %v692 = vpack.c.bf16 %v686, %v686
    %693 = vmatprep.subr.bf16.mxu0 %v548
    %694 = vmatpush1.bf16.msra.mxu0 %v547
    %695 = vmatprep.subr.bf16.mxu0 %v544
    %696 = vmatpush1.bf16.msra.mxu0 %v543
    %697 = vmatprep.subr.bf16.mxu0 %v540
    %698 = vmatpush1.bf16.msra.mxu0 %v539
    %699 = vmatprep.subr.bf16.mxu0 %v536
    %700 = vmatpush1.bf16.msra.mxu0 %v535
    %701 = vmatprep.subr.bf16.mxu0 %v532
    %702 = vmatpush1.bf16.msra.mxu0 %v531
    %703 = vmatprep.subr.bf16.mxu0 %v528
    %704 = vmatpush1.bf16.msra.mxu0 %v527
    %705 = vmatprep.subr.bf16.mxu0 %v524
    %706 = vmatpush1.bf16.msra.mxu0 %v523
    %707 = vmatprep.subr.bf16.mxu0 %v520
    %708 = vmatpush1.bf16.msra.mxu0 %v519
    %709 = vmatprep.subr.bf16.mxu0 0
    %710 = vmatpush2.bf16.msra.mxu0 0
    %711 = vmatprep.subr.bf16.mxu0 0
    %712 = vmatpush2.bf16.msra.mxu0 0
    %713 = vmatprep.subr.bf16.mxu0 0
    %714 = vmatpush2.bf16.msra.mxu0 0
    %715 = vmatprep.subr.bf16.mxu0 0
    %716 = vmatpush2.bf16.msra.mxu0 0
    %717 = vmatprep.subr.bf16.mxu0 0
    %718 = vmatpush2.bf16.msra.mxu0 0
    %719 = vmatprep.subr.bf16.mxu0 0
    %720 = vmatpush2.bf16.msra.mxu0 0
    %721 = vmatprep.subr.bf16.mxu0 0
    %722 = vmatpush2.bf16.msra.mxu0 0
    %723 = vmatprep.subr.bf16.mxu0 0
    %724 = vmatpush2.bf16.msra.mxu0 0
    %725 = vmatprep.mubr.bf16.mxu0 0
    %726 = vmatmul.mubr.bf16.gmra.mxu0 %v692
    %v727 = vpop.f32.mrf.mxu0
    %v728 = vadd.f32 0.0, %v727
    %v729 = vpop.f32.mrf.mxu0
    %v730 = vadd.f32 0.0, %v729
    %v731 = vpop.f32.mrf.mxu0
    %v732 = vpop.f32.mrf.mxu0
    %733 = vdwg.mxu0
    %734 = vmatprep.subr.bf16.mxu0 %v550
    %735 = vmatpush1.bf16.msra.mxu0 %v549
    %736 = vmatprep.subr.bf16.mxu0 %v546
    %737 = vmatpush1.bf16.msra.mxu0 %v545
    %738 = vmatprep.subr.bf16.mxu0 %v542
    %739 = vmatpush1.bf16.msra.mxu0 %v541
    %740 = vmatprep.subr.bf16.mxu0 %v538
    %741 = vmatpush1.bf16.msra.mxu0 %v537
    %742 = vmatprep.subr.bf16.mxu0 %v534
    %743 = vmatpush1.bf16.msra.mxu0 %v533
    %744 = vmatprep.subr.bf16.mxu0 %v530
    %745 = vmatpush1.bf16.msra.mxu0 %v529
    %746 = vmatprep.subr.bf16.mxu0 %v526
    %747 = vmatpush1.bf16.msra.mxu0 %v525
    %748 = vmatprep.subr.bf16.mxu0 %v522
    %749 = vmatpush1.bf16.msra.mxu0 %v521
    %750 = vmatprep.subr.bf16.mxu0 0
    %751 = vmatpush2.bf16.msra.mxu0 0
    %752 = vmatprep.subr.bf16.mxu0 0
    %753 = vmatpush2.bf16.msra.mxu0 0
    %754 = vmatprep.subr.bf16.mxu0 0
    %755 = vmatpush2.bf16.msra.mxu0 0
    %756 = vmatprep.subr.bf16.mxu0 0
    %757 = vmatpush2.bf16.msra.mxu0 0
    %758 = vmatprep.subr.bf16.mxu0 0
    %759 = vmatpush2.bf16.msra.mxu0 0
    %760 = vmatprep.subr.bf16.mxu0 0
    %761 = vmatpush2.bf16.msra.mxu0 0
    %762 = vmatprep.subr.bf16.mxu0 0
    %763 = vmatpush2.bf16.msra.mxu0 0
    %764 = vmatprep.subr.bf16.mxu0 0
    %765 = vmatpush2.bf16.msra.mxu0 0
    %766 = vmatprep.mubr.bf16.mxu0 0
    %767 = vmatmul.mubr.bf16.gmra.mxu0 %v692
    %v768 = vpop.f32.mrf.mxu0
    %v769 = vadd.f32 0.0, %v768
    %v770 = vpop.f32.mrf.mxu0
    %v771 = vadd.f32 0.0, %v770
    %v772 = vpop.f32.mrf.mxu0
    %v773 = vpop.f32.mrf.mxu0
    %774 = vdwg.mxu0
    %v775 = vadd.f32 %v688, %v728
    %v776 = vadd.f32 %v689, %v730
    %v777 = vadd.f32 %v690, %v769
    %v778 = vadd.f32 %v691, %v771
    %v779 = vmul.f32 %v775, 0.5
    %v780 = vmul.f32 %v776, 0.5
    %v781 = vmul.f32 %v777, 0.5
    %v782 = vtanh.pop %v779
    %v783 = vtanh.pop %v780
    %v784 = vtanh.pop %v781
    %v785 = vmul.f32 %v782, 0.5
    %v786 = vmul.f32 %v783, 0.5
    %v787 = vmul.f32 %v784, 0.5
    %v788 = vadd.f32 %v785, 0.5
    %v789 = vadd.f32 %v786, 0.5
    %v790 = vadd.f32 %v787, 0.5
    %v791 = vtanh.pop %v778
    %v792 = vmul.f32 %v789, %v684
    %v793 = vmul.f32 %v788, %v791
    %v794 = vadd.f32 %v792, %v793
    %v795 = vtanh.pop %v794
    %v796 = vmul.f32 %v790, %v795
    %s797 = scalar_lea.vmem [#allocation2], 64
    %v798 = vld [vmem:[%s797] sm:$0xff]
    %v799 = vld [vmem:[%s797 + $0x8] sm:$0xff]
    %v800 = vld [vmem:[%s797 + $0x10] sm:$0xff]
    %v801 = vld [vmem:[%s797 + $0x18] sm:$0xff]
    %v802 = vpack.c.bf16 %v796, %v796
    %803 = vmatprep.subr.bf16.mxu0 %v548
    %804 = vmatpush1.bf16.msra.mxu0 %v547
    %805 = vmatprep.subr.bf16.mxu0 %v544
    %806 = vmatpush1.bf16.msra.mxu0 %v543
    %807 = vmatprep.subr.bf16.mxu0 %v540
    %808 = vmatpush1.bf16.msra.mxu0 %v539
    %809 = vmatprep.subr.bf16.mxu0 %v536
    %810 = vmatpush1.bf16.msra.mxu0 %v535
    %811 = vmatprep.subr.bf16.mxu0 %v532
    %812 = vmatpush1.bf16.msra.mxu0 %v531
    %813 = vmatprep.subr.bf16.mxu0 %v528
    %814 = vmatpush1.bf16.msra.mxu0 %v527
    %815 = vmatprep.subr.bf16.mxu0 %v524
    %816 = vmatpush1.bf16.msra.mxu0 %v523
    %817 = vmatprep.subr.bf16.mxu0 %v520
    %818 = vmatpush1.bf16.msra.mxu0 %v519
    %819 = vmatprep.subr.bf16.mxu0 0
    %820 = vmatpush2.bf16.msra.mxu0 0
    %821 = vmatprep.subr.bf16.mxu0 0
    %822 = vmatpush2.bf16.msra.mxu0 0
    %823 = vmatprep.subr.bf16.mxu0 0
    %824 = vmatpush2.bf16.msra.mxu0 0
    %825 = vmatprep.subr.bf16.mxu0 0
    %826 = vmatpush2.bf16.msra.mxu0 0
    %827 = vmatprep.subr.bf16.mxu0 0
    %828 = vmatpush2.bf16.msra.mxu0 0
    %829 = vmatprep.subr.bf16.mxu0 0
    %830 = vmatpush2.bf16.msra.mxu0 0
    %831 = vmatprep.subr.bf16.mxu0 0
    %832 = vmatpush2.bf16.msra.mxu0 0
    %833 = vmatprep.subr.bf16.mxu0 0
    %834 = vmatpush2.bf16.msra.mxu0 0
    %835 = vmatprep.mubr.bf16.mxu0 0
    %836 = vmatmul.mubr.bf16.gmra.mxu0 %v802
    %v837 = vpop.f32.mrf.mxu0
    %v838 = vadd.f32 0.0, %v837
    %v839 = vpop.f32.mrf.mxu0
    %v840 = vadd.f32 0.0, %v839
    %v841 = vpop.f32.mrf.mxu0
    %v842 = vpop.f32.mrf.mxu0
    %843 = vdwg.mxu0
    %844 = vmatprep.subr.bf16.mxu0 %v550
    %845 = vmatpush1.bf16.msra.mxu0 %v549
    %846 = vmatprep.subr.bf16.mxu0 %v546
    %847 = vmatpush1.bf16.msra.mxu0 %v545
    %848 = vmatprep.subr.bf16.mxu0 %v542
    %849 = vmatpush1.bf16.msra.mxu0 %v541
    %850 = vmatprep.subr.bf16.mxu0 %v538
    %851 = vmatpush1.bf16.msra.mxu0 %v537
    %852 = vmatprep.subr.bf16.mxu0 %v534
    %853 = vmatpush1.bf16.msra.mxu0 %v533
    %854 = vmatprep.subr.bf16.mxu0 %v530
    %855 = vmatpush1.bf16.msra.mxu0 %v529
    %856 = vmatprep.subr.bf16.mxu0 %v526
    %857 = vmatpush1.bf16.msra.mxu0 %v525
    %858 = vmatprep.subr.bf16.mxu0 %v522
    %859 = vmatpush1.bf16.msra.mxu0 %v521
    %860 = vmatprep.subr.bf16.mxu0 0
    %861 = vmatpush2.bf16.msra.mxu0 0
    %862 = vmatprep.subr.bf16.mxu0 0
    %863 = vmatpush2.bf16.msra.mxu0 0
    %864 = vmatprep.subr.bf16.mxu0 0
    %865 = vmatpush2.bf16.msra.mxu0 0
    %866 = vmatprep.subr.bf16.mxu0 0
    %867 = vmatpush2.bf16.msra.mxu0 0
    %868 = vmatprep.subr.bf16.mxu0 0
    %869 = vmatpush2.bf16.msra.mxu0 0
    %870 = vmatprep.subr.bf16.mxu0 0
    %871 = vmatpush2.bf16.msra.mxu0 0
    %872 = vmatprep.subr.bf16.mxu0 0
    %873 = vmatpush2.bf16.msra.mxu0 0
    %874 = vmatprep.subr.bf16.mxu0 0
    %875 = vmatpush2.bf16.msra.mxu0 0
    %876 = vmatprep.mubr.bf16.mxu0 0
    %877 = vmatmul.mubr.bf16.gmra.mxu0 %v802
    %v878 = vpop.f32.mrf.mxu0
    %v879 = vadd.f32 0.0, %v878
    %v880 = vpop.f32.mrf.mxu0
    %v881 = vadd.f32 0.0, %v880
    %v882 = vpop.f32.mrf.mxu0
    %v883 = vpop.f32.mrf.mxu0
    %884 = vdwg.mxu0
    %v885 = vadd.f32 %v798, %v838
    %v886 = vadd.f32 %v799, %v840
    %v887 = vadd.f32 %v800, %v879
    %v888 = vadd.f32 %v801, %v881
    %v889 = vmul.f32 %v885, 0.5
    %v890 = vmul.f32 %v886, 0.5
    %v891 = vmul.f32 %v887, 0.5
    %v892 = vtanh.pop %v889
    %v893 = vtanh.pop %v890
    %v894 = vtanh.pop %v891
    %v895 = vmul.f32 %v892, 0.5
    %v896 = vmul.f32 %v893, 0.5
    %v897 = vmul.f32 %v894, 0.5
    %v898 = vadd.f32 %v895, 0.5
    %v899 = vadd.f32 %v896, 0.5
    %v900 = vadd.f32 %v897, 0.5
    %v901 = vtanh.pop %v888
    %v902 = vmul.f32 %v899, %v794
    %v903 = vmul.f32 %v898, %v901
    %v904 = vadd.f32 %v902, %v903
    %v905 = vtanh.pop %v904
    %v906 = vmul.f32 %v900, %v905
    %s907 = scalar_lea.vmem [#allocation2], 96
    %v908 = vld [vmem:[%s907] sm:$0xff]
    %v909 = vld [vmem:[%s907 + $0x8] sm:$0xff]
    %v910 = vld [vmem:[%s907 + $0x10] sm:$0xff]
    %v911 = vld [vmem:[%s907 + $0x18] sm:$0xff]
    %v912 = vpack.c.bf16 %v906, %v906
    %913 = vmatprep.subr.bf16.mxu0 %v548
    %914 = vmatpush1.bf16.msra.mxu0 %v547
    %915 = vmatprep.subr.bf16.mxu0 %v544
    %916 = vmatpush1.bf16.msra.mxu0 %v543
    %917 = vmatprep.subr.bf16.mxu0 %v540
    %918 = vmatpush1.bf16.msra.mxu0 %v539
    %919 = vmatprep.subr.bf16.mxu0 %v536
    %920 = vmatpush1.bf16.msra.mxu0 %v535
    %921 = vmatprep.subr.bf16.mxu0 %v532
    %922 = vmatpush1.bf16.msra.mxu0 %v531
    %923 = vmatprep.subr.bf16.mxu0 %v528
    %924 = vmatpush1.bf16.msra.mxu0 %v527
    %925 = vmatprep.subr.bf16.mxu0 %v524
    %926 = vmatpush1.bf16.msra.mxu0 %v523
    %927 = vmatprep.subr.bf16.mxu0 %v520
    %928 = vmatpush1.bf16.msra.mxu0 %v519
    %929 = vmatprep.subr.bf16.mxu0 0
    %930 = vmatpush2.bf16.msra.mxu0 0
    %931 = vmatprep.subr.bf16.mxu0 0
    %932 = vmatpush2.bf16.msra.mxu0 0
    %933 = vmatprep.subr.bf16.mxu0 0
    %934 = vmatpush2.bf16.msra.mxu0 0
    %935 = vmatprep.subr.bf16.mxu0 0
    %936 = vmatpush2.bf16.msra.mxu0 0
    %937 = vmatprep.subr.bf16.mxu0 0
    %938 = vmatpush2.bf16.msra.mxu0 0
    %939 = vmatprep.subr.bf16.mxu0 0
    %940 = vmatpush2.bf16.msra.mxu0 0
    %941 = vmatprep.subr.bf16.mxu0 0
    %942 = vmatpush2.bf16.msra.mxu0 0
    %943 = vmatprep.subr.bf16.mxu0 0
    %944 = vmatpush2.bf16.msra.mxu0 0
    %945 = vmatprep.mubr.bf16.mxu0 0
    %946 = vmatmul.mubr.bf16.gmra.mxu0 %v912
    %v947 = vpop.f32.mrf.mxu0
    %v948 = vadd.f32 0.0, %v947
    %v949 = vpop.f32.mrf.mxu0
    %v950 = vadd.f32 0.0, %v949
    %v951 = vpop.f32.mrf.mxu0
    %v952 = vpop.f32.mrf.mxu0
    %953 = vdwg.mxu0
    %954 = vmatprep.subr.bf16.mxu0 %v550
    %955 = vmatpush1.bf16.msra.mxu0 %v549
    %956 = vmatprep.subr.bf16.mxu0 %v546
    %957 = vmatpush1.bf16.msra.mxu0 %v545
    %958 = vmatprep.subr.bf16.mxu0 %v542
    %959 = vmatpush1.bf16.msra.mxu0 %v541
    %960 = vmatprep.subr.bf16.mxu0 %v538
    %961 = vmatpush1.bf16.msra.mxu0 %v537
    %962 = vmatprep.subr.bf16.mxu0 %v534
    %963 = vmatpush1.bf16.msra.mxu0 %v533
    %964 = vmatprep.subr.bf16.mxu0 %v530
    %965 = vmatpush1.bf16.msra.mxu0 %v529
    %966 = vmatprep.subr.bf16.mxu0 %v526
    %967 = vmatpush1.bf16.msra.mxu0 %v525
    %968 = vmatprep.subr.bf16.mxu0 %v522
    %969 = vmatpush1.bf16.msra.mxu0 %v521
    %970 = vmatprep.subr.bf16.mxu0 0
    %971 = vmatpush2.bf16.msra.mxu0 0
    %972 = vmatprep.subr.bf16.mxu0 0
    %973 = vmatpush2.bf16.msra.mxu0 0
    %974 = vmatprep.subr.bf16.mxu0 0
    %975 = vmatpush2.bf16.msra.mxu0 0
    %976 = vmatprep.subr.bf16.mxu0 0
    %977 = vmatpush2.bf16.msra.mxu0 0
    %978 = vmatprep.subr.bf16.mxu0 0
    %979 = vmatpush2.bf16.msra.mxu0 0
    %980 = vmatprep.subr.bf16.mxu0 0
    %981 = vmatpush2.bf16.msra.mxu0 0
    %982 = vmatprep.subr.bf16.mxu0 0
    %983 = vmatpush2.bf16.msra.mxu0 0
    %984 = vmatprep.subr.bf16.mxu0 0
    %985 = vmatpush2.bf16.msra.mxu0 0
    %986 = vmatprep.mubr.bf16.mxu0 0
    %987 = vmatmul.mubr.bf16.gmra.mxu0 %v912
    %v988 = vpop.f32.mrf.mxu0
    %v989 = vadd.f32 0.0, %v988
    %v990 = vpop.f32.mrf.mxu0
    %v991 = vadd.f32 0.0, %v990
    %v992 = vpop.f32.mrf.mxu0
    %v993 = vpop.f32.mrf.mxu0
    %994 = vdwg.mxu0
    %v995 = vadd.f32 %v908, %v948
    %v996 = vadd.f32 %v909, %v950
    %v997 = vadd.f32 %v910, %v989
    %v998 = vadd.f32 %v911, %v991
    %v999 = vmul.f32 %v995, 0.5
    %v1000 = vmul.f32 %v996, 0.5
    %v1001 = vmul.f32 %v997, 0.5
    %v1002 = vtanh.pop %v999
    %v1003 = vtanh.pop %v1000
    %v1004 = vtanh.pop %v1001
    %v1005 = vmul.f32 %v1002, 0.5
    %v1006 = vmul.f32 %v1003, 0.5
    %v1007 = vmul.f32 %v1004, 0.5
    %v1008 = vadd.f32 %v1005, 0.5
    %v1009 = vadd.f32 %v1006, 0.5
    %v1010 = vadd.f32 %v1007, 0.5
    %v1011 = vtanh.pop %v998
    %v1012 = vmul.f32 %v1009, %v904
    %v1013 = vmul.f32 %v1008, %v1011
    %v1014 = vadd.f32 %v1012, %v1013
    %v1015 = vtanh.pop %v1014
    %v1016 = vmul.f32 %v1010, %v1015
    %s1017 = scalar_lea.vmem [#allocation2], 128
    %v1018 = vld [vmem:[%s1017] sm:$0xff]
    %v1019 = vld [vmem:[%s1017 + $0x8] sm:$0xff]
    %v1020 = vld [vmem:[%s1017 + $0x10] sm:$0xff]
    %v1021 = vld [vmem:[%s1017 + $0x18] sm:$0xff]
    %v1022 = vpack.c.bf16 %v1016, %v1016
    %1023 = vmatprep.subr.bf16.mxu0 %v548
    %1024 = vmatpush1.bf16.msra.mxu0 %v547
    %1025 = vmatprep.subr.bf16.mxu0 %v544
    %1026 = vmatpush1.bf16.msra.mxu0 %v543
    %1027 = vmatprep.subr.bf16.mxu0 %v540
    %1028 = vmatpush1.bf16.msra.mxu0 %v539
    %1029 = vmatprep.subr.bf16.mxu0 %v536
    %1030 = vmatpush1.bf16.msra.mxu0 %v535
    %1031 = vmatprep.subr.bf16.mxu0 %v532
    %1032 = vmatpush1.bf16.msra.mxu0 %v531
    %1033 = vmatprep.subr.bf16.mxu0 %v528
    %1034 = vmatpush1.bf16.msra.mxu0 %v527
    %1035 = vmatprep.subr.bf16.mxu0 %v524
    %1036 = vmatpush1.bf16.msra.mxu0 %v523
    %1037 = vmatprep.subr.bf16.mxu0 %v520
    %1038 = vmatpush1.bf16.msra.mxu0 %v519
    %1039 = vmatprep.subr.bf16.mxu0 0
    %1040 = vmatpush2.bf16.msra.mxu0 0
    %1041 = vmatprep.subr.bf16.mxu0 0
    %1042 = vmatpush2.bf16.msra.mxu0 0
    %1043 = vmatprep.subr.bf16.mxu0 0
    %1044 = vmatpush2.bf16.msra.mxu0 0
    %1045 = vmatprep.subr.bf16.mxu0 0
    %1046 = vmatpush2.bf16.msra.mxu0 0
    %1047 = vmatprep.subr.bf16.mxu0 0
    %1048 = vmatpush2.bf16.msra.mxu0 0
    %1049 = vmatprep.subr.bf16.mxu0 0
    %1050 = vmatpush2.bf16.msra.mxu0 0
    %1051 = vmatprep.subr.bf16.mxu0 0
    %1052 = vmatpush2.bf16.msra.mxu0 0
    %1053 = vmatprep.subr.bf16.mxu0 0
    %1054 = vmatpush2.bf16.msra.mxu0 0
    %1055 = vmatprep.mubr.bf16.mxu0 0
    %1056 = vmatmul.mubr.bf16.gmra.mxu0 %v1022
    %v1057 = vpop.f32.mrf.mxu0
    %v1058 = vadd.f32 0.0, %v1057
    %v1059 = vpop.f32.mrf.mxu0
    %v1060 = vadd.f32 0.0, %v1059
    %v1061 = vpop.f32.mrf.mxu0
    %v1062 = vpop.f32.mrf.mxu0
    %1063 = vdwg.mxu0
    %1064 = vmatprep.subr.bf16.mxu0 %v550
    %1065 = vmatpush1.bf16.msra.mxu0 %v549
    %1066 = vmatprep.subr.bf16.mxu0 %v546
    %1067 = vmatpush1.bf16.msra.mxu0 %v545
    %1068 = vmatprep.subr.bf16.mxu0 %v542
    %1069 = vmatpush1.bf16.msra.mxu0 %v541
    %1070 = vmatprep.subr.bf16.mxu0 %v538
    %1071 = vmatpush1.bf16.msra.mxu0 %v537
    %1072 = vmatprep.subr.bf16.mxu0 %v534
    %1073 = vmatpush1.bf16.msra.mxu0 %v533
    %1074 = vmatprep.subr.bf16.mxu0 %v530
    %1075 = vmatpush1.bf16.msra.mxu0 %v529
    %1076 = vmatprep.subr.bf16.mxu0 %v526
    %1077 = vmatpush1.bf16.msra.mxu0 %v525
    %1078 = vmatprep.subr.bf16.mxu0 %v522
    %1079 = vmatpush1.bf16.msra.mxu0 %v521
    %1080 = vmatprep.subr.bf16.mxu0 0
    %1081 = vmatpush2.bf16.msra.mxu0 0
    %1082 = vmatprep.subr.bf16.mxu0 0
    %1083 = vmatpush2.bf16.msra.mxu0 0
    %1084 = vmatprep.subr.bf16.mxu0 0
    %1085 = vmatpush2.bf16.msra.mxu0 0
    %1086 = vmatprep.subr.bf16.mxu0 0
    %1087 = vmatpush2.bf16.msra.mxu0 0
    %1088 = vmatprep.subr.bf16.mxu0 0
    %1089 = vmatpush2.bf16.msra.mxu0 0
    %1090 = vmatprep.subr.bf16.mxu0 0
    %1091 = vmatpush2.bf16.msra.mxu0 0
    %1092 = vmatprep.subr.bf16.mxu0 0
    %1093 = vmatpush2.bf16.msra.mxu0 0
    %1094 = vmatprep.subr.bf16.mxu0 0
    %1095 = vmatpush2.bf16.msra.mxu0 0
    %1096 = vmatprep.mubr.bf16.mxu0 0
    %1097 = vmatmul.mubr.bf16.gmra.mxu0 %v1022
    %v1098 = vpop.f32.mrf.mxu0
    %v1099 = vadd.f32 0.0, %v1098
    %v1100 = vpop.f32.mrf.mxu0
    %v1101 = vadd.f32 0.0, %v1100
    %v1102 = vpop.f32.mrf.mxu0
    %v1103 = vpop.f32.mrf.mxu0
    %1104 = vdwg.mxu0
    %v1105 = vadd.f32 %v1018, %v1058
    %v1106 = vadd.f32 %v1019, %v1060
    %v1107 = vadd.f32 %v1020, %v1099
    %v1108 = vadd.f32 %v1021, %v1101
    %v1109 = vmul.f32 %v1105, 0.5
    %v1110 = vmul.f32 %v1106, 0.5
    %v1111 = vmul.f32 %v1107, 0.5
    %v1112 = vtanh.pop %v1109
    %v1113 = vtanh.pop %v1110
    %v1114 = vtanh.pop %v1111
    %v1115 = vmul.f32 %v1112, 0.5
    %v1116 = vmul.f32 %v1113, 0.5
    %v1117 = vmul.f32 %v1114, 0.5
    %v1118 = vadd.f32 %v1115, 0.5
    %v1119 = vadd.f32 %v1116, 0.5
    %v1120 = vadd.f32 %v1117, 0.5
    %v1121 = vtanh.pop %v1108
    %v1122 = vmul.f32 %v1119, %v1014
    %v1123 = vmul.f32 %v1118, %v1121
    %v1124 = vadd.f32 %v1122, %v1123
    %v1125 = vtanh.pop %v1124
    %v1126 = vmul.f32 %v1120, %v1125
    %s1127 = scalar_lea.vmem [#allocation2], 160
    %v1128 = vld [vmem:[%s1127] sm:$0xff]
    %v1129 = vld [vmem:[%s1127 + $0x8] sm:$0xff]
    %v1130 = vld [vmem:[%s1127 + $0x10] sm:$0xff]
    %v1131 = vld [vmem:[%s1127 + $0x18] sm:$0xff]
    %v1132 = vpack.c.bf16 %v1126, %v1126
    %1133 = vmatprep.subr.bf16.mxu0 %v548
    %1134 = vmatpush1.bf16.msra.mxu0 %v547
    %1135 = vmatprep.subr.bf16.mxu0 %v544
    %1136 = vmatpush1.bf16.msra.mxu0 %v543
    %1137 = vmatprep.subr.bf16.mxu0 %v540
    %1138 = vmatpush1.bf16.msra.mxu0 %v539
    %1139 = vmatprep.subr.bf16.mxu0 %v536
    %1140 = vmatpush1.bf16.msra.mxu0 %v535
    %1141 = vmatprep.subr.bf16.mxu0 %v532
    %1142 = vmatpush1.bf16.msra.mxu0 %v531
    %1143 = vmatprep.subr.bf16.mxu0 %v528
    %1144 = vmatpush1.bf16.msra.mxu0 %v527
    %1145 = vmatprep.subr.bf16.mxu0 %v524
    %1146 = vmatpush1.bf16.msra.mxu0 %v523
    %1147 = vmatprep.subr.bf16.mxu0 %v520
    %1148 = vmatpush1.bf16.msra.mxu0 %v519
    %1149 = vmatprep.subr.bf16.mxu0 0
    %1150 = vmatpush2.bf16.msra.mxu0 0
    %1151 = vmatprep.subr.bf16.mxu0 0
    %1152 = vmatpush2.bf16.msra.mxu0 0
    %1153 = vmatprep.subr.bf16.mxu0 0
    %1154 = vmatpush2.bf16.msra.mxu0 0
    %1155 = vmatprep.subr.bf16.mxu0 0
    %1156 = vmatpush2.bf16.msra.mxu0 0
    %1157 = vmatprep.subr.bf16.mxu0 0
    %1158 = vmatpush2.bf16.msra.mxu0 0
    %1159 = vmatprep.subr.bf16.mxu0 0
    %1160 = vmatpush2.bf16.msra.mxu0 0
    %1161 = vmatprep.subr.bf16.mxu0 0
    %1162 = vmatpush2.bf16.msra.mxu0 0
    %1163 = vmatprep.subr.bf16.mxu0 0
    %1164 = vmatpush2.bf16.msra.mxu0 0
    %1165 = vmatprep.mubr.bf16.mxu0 0
    %1166 = vmatmul.mubr.bf16.gmra.mxu0 %v1132
    %v1167 = vpop.f32.mrf.mxu0
    %v1168 = vadd.f32 0.0, %v1167
    %v1169 = vpop.f32.mrf.mxu0
    %v1170 = vadd.f32 0.0, %v1169
    %v1171 = vpop.f32.mrf.mxu0
    %v1172 = vpop.f32.mrf.mxu0
    %1173 = vdwg.mxu0
    %1174 = vmatprep.subr.bf16.mxu0 %v550
    %1175 = vmatpush1.bf16.msra.mxu0 %v549
    %1176 = vmatprep.subr.bf16.mxu0 %v546
    %1177 = vmatpush1.bf16.msra.mxu0 %v545
    %1178 = vmatprep.subr.bf16.mxu0 %v542
    %1179 = vmatpush1.bf16.msra.mxu0 %v541
    %1180 = vmatprep.subr.bf16.mxu0 %v538
    %1181 = vmatpush1.bf16.msra.mxu0 %v537
    %1182 = vmatprep.subr.bf16.mxu0 %v534
    %1183 = vmatpush1.bf16.msra.mxu0 %v533
    %1184 = vmatprep.subr.bf16.mxu0 %v530
    %1185 = vmatpush1.bf16.msra.mxu0 %v529
    %1186 = vmatprep.subr.bf16.mxu0 %v526
    %1187 = vmatpush1.bf16.msra.mxu0 %v525
    %1188 = vmatprep.subr.bf16.mxu0 %v522
    %1189 = vmatpush1.bf16.msra.mxu0 %v521
    %1190 = vmatprep.subr.bf16.mxu0 0
    %1191 = vmatpush2.bf16.msra.mxu0 0
    %1192 = vmatprep.subr.bf16.mxu0 0
    %1193 = vmatpush2.bf16.msra.mxu0 0
    %1194 = vmatprep.subr.bf16.mxu0 0
    %1195 = vmatpush2.bf16.msra.mxu0 0
    %1196 = vmatprep.subr.bf16.mxu0 0
    %1197 = vmatpush2.bf16.msra.mxu0 0
    %1198 = vmatprep.subr.bf16.mxu0 0
    %1199 = vmatpush2.bf16.msra.mxu0 0
    %1200 = vmatprep.subr.bf16.mxu0 0
    %1201 = vmatpush2.bf16.msra.mxu0 0
    %1202 = vmatprep.subr.bf16.mxu0 0
    %1203 = vmatpush2.bf16.msra.mxu0 0
    %1204 = vmatprep.subr.bf16.mxu0 0
    %1205 = vmatpush2.bf16.msra.mxu0 0
    %1206 = vmatprep.mubr.bf16.mxu0 0
    %1207 = vmatmul.mubr.bf16.gmra.mxu0 %v1132
    %v1208 = vpop.f32.mrf.mxu0
    %v1209 = vadd.f32 0.0, %v1208
    %v1210 = vpop.f32.mrf.mxu0
    %v1211 = vadd.f32 0.0, %v1210
    %v1212 = vpop.f32.mrf.mxu0
    %v1213 = vpop.f32.mrf.mxu0
    %1214 = vdwg.mxu0
    %v1215 = vadd.f32 %v1128, %v1168
    %v1216 = vadd.f32 %v1129, %v1170
    %v1217 = vadd.f32 %v1130, %v1209
    %v1218 = vadd.f32 %v1131, %v1211
    %v1219 = vmul.f32 %v1215, 0.5
    %v1220 = vmul.f32 %v1216, 0.5
    %v1221 = vmul.f32 %v1217, 0.5
    %v1222 = vtanh.pop %v1219
    %v1223 = vtanh.pop %v1220
    %v1224 = vtanh.pop %v1221
    %v1225 = vmul.f32 %v1222, 0.5
    %v1226 = vmul.f32 %v1223, 0.5
    %v1227 = vmul.f32 %v1224, 0.5
    %v1228 = vadd.f32 %v1225, 0.5
    %v1229 = vadd.f32 %v1226, 0.5
    %v1230 = vadd.f32 %v1227, 0.5
    %v1231 = vtanh.pop %v1218
    %v1232 = vmul.f32 %v1229, %v1124
    %v1233 = vmul.f32 %v1228, %v1231
    %v1234 = vadd.f32 %v1232, %v1233
    %v1235 = vtanh.pop %v1234
    %v1236 = vmul.f32 %v1230, %v1235
    %s1237 = scalar_lea.vmem [#allocation2], 192
    %v1238 = vld [vmem:[%s1237] sm:$0xff]
    %v1239 = vld [vmem:[%s1237 + $0x8] sm:$0xff]
    %v1240 = vld [vmem:[%s1237 + $0x10] sm:$0xff]
    %v1241 = vld [vmem:[%s1237 + $0x18] sm:$0xff]
    %v1242 = vpack.c.bf16 %v1236, %v1236
    %1243 = vmatprep.subr.bf16.mxu0 %v548
    %1244 = vmatpush1.bf16.msra.mxu0 %v547
    %1245 = vmatprep.subr.bf16.mxu0 %v544
    %1246 = vmatpush1.bf16.msra.mxu0 %v543
    %1247 = vmatprep.subr.bf16.mxu0 %v540
    %1248 = vmatpush1.bf16.msra.mxu0 %v539
    %1249 = vmatprep.subr.bf16.mxu0 %v536
    %1250 = vmatpush1.bf16.msra.mxu0 %v535
    %1251 = vmatprep.subr.bf16.mxu0 %v532
    %1252 = vmatpush1.bf16.msra.mxu0 %v531
    %1253 = vmatprep.subr.bf16.mxu0 %v528
    %1254 = vmatpush1.bf16.msra.mxu0 %v527
    %1255 = vmatprep.subr.bf16.mxu0 %v524
    %1256 = vmatpush1.bf16.msra.mxu0 %v523
    %1257 = vmatprep.subr.bf16.mxu0 %v520
    %1258 = vmatpush1.bf16.msra.mxu0 %v519
    %1259 = vmatprep.subr.bf16.mxu0 0
    %1260 = vmatpush2.bf16.msra.mxu0 0
    %1261 = vmatprep.subr.bf16.mxu0 0
    %1262 = vmatpush2.bf16.msra.mxu0 0
    %1263 = vmatprep.subr.bf16.mxu0 0
    %1264 = vmatpush2.bf16.msra.mxu0 0
    %1265 = vmatprep.subr.bf16.mxu0 0
    %1266 = vmatpush2.bf16.msra.mxu0 0
    %1267 = vmatprep.subr.bf16.mxu0 0
    %1268 = vmatpush2.bf16.msra.mxu0 0
    %1269 = vmatprep.subr.bf16.mxu0 0
    %1270 = vmatpush2.bf16.msra.mxu0 0
    %1271 = vmatprep.subr.bf16.mxu0 0
    %1272 = vmatpush2.bf16.msra.mxu0 0
    %1273 = vmatprep.subr.bf16.mxu0 0
    %1274 = vmatpush2.bf16.msra.mxu0 0
    %1275 = vmatprep.mubr.bf16.mxu0 0
    %1276 = vmatmul.mubr.bf16.gmra.mxu0 %v1242
    %v1277 = vpop.f32.mrf.mxu0
    %v1278 = vadd.f32 0.0, %v1277
    %v1279 = vpop.f32.mrf.mxu0
    %v1280 = vadd.f32 0.0, %v1279
    %v1281 = vpop.f32.mrf.mxu0
    %v1282 = vpop.f32.mrf.mxu0
    %1283 = vdwg.mxu0
    %1284 = vmatprep.subr.bf16.mxu0 %v550
    %1285 = vmatpush1.bf16.msra.mxu0 %v549
    %1286 = vmatprep.subr.bf16.mxu0 %v546
    %1287 = vmatpush1.bf16.msra.mxu0 %v545
    %1288 = vmatprep.subr.bf16.mxu0 %v542
    %1289 = vmatpush1.bf16.msra.mxu0 %v541
    %1290 = vmatprep.subr.bf16.mxu0 %v538
    %1291 = vmatpush1.bf16.msra.mxu0 %v537
    %1292 = vmatprep.subr.bf16.mxu0 %v534
    %1293 = vmatpush1.bf16.msra.mxu0 %v533
    %1294 = vmatprep.subr.bf16.mxu0 %v530
    %1295 = vmatpush1.bf16.msra.mxu0 %v529
    %1296 = vmatprep.subr.bf16.mxu0 %v526
    %1297 = vmatpush1.bf16.msra.mxu0 %v525
    %1298 = vmatprep.subr.bf16.mxu0 %v522
    %1299 = vmatpush1.bf16.msra.mxu0 %v521
    %1300 = vmatprep.subr.bf16.mxu0 0
    %1301 = vmatpush2.bf16.msra.mxu0 0
    %1302 = vmatprep.subr.bf16.mxu0 0
    %1303 = vmatpush2.bf16.msra.mxu0 0
    %1304 = vmatprep.subr.bf16.mxu0 0
    %1305 = vmatpush2.bf16.msra.mxu0 0
    %1306 = vmatprep.subr.bf16.mxu0 0
    %1307 = vmatpush2.bf16.msra.mxu0 0
    %1308 = vmatprep.subr.bf16.mxu0 0
    %1309 = vmatpush2.bf16.msra.mxu0 0
    %1310 = vmatprep.subr.bf16.mxu0 0
    %1311 = vmatpush2.bf16.msra.mxu0 0
    %1312 = vmatprep.subr.bf16.mxu0 0
    %1313 = vmatpush2.bf16.msra.mxu0 0
    %1314 = vmatprep.subr.bf16.mxu0 0
    %1315 = vmatpush2.bf16.msra.mxu0 0
    %1316 = vmatprep.mubr.bf16.mxu0 0
    %1317 = vmatmul.mubr.bf16.gmra.mxu0 %v1242
    %v1318 = vpop.f32.mrf.mxu0
    %v1319 = vadd.f32 0.0, %v1318
    %v1320 = vpop.f32.mrf.mxu0
    %v1321 = vadd.f32 0.0, %v1320
    %v1322 = vpop.f32.mrf.mxu0
    %v1323 = vpop.f32.mrf.mxu0
    %1324 = vdwg.mxu0
    %v1325 = vadd.f32 %v1238, %v1278
    %v1326 = vadd.f32 %v1239, %v1280
    %v1327 = vadd.f32 %v1240, %v1319
    %v1328 = vadd.f32 %v1241, %v1321
    %v1329 = vmul.f32 %v1325, 0.5
    %v1330 = vmul.f32 %v1326, 0.5
    %v1331 = vmul.f32 %v1327, 0.5
    %v1332 = vtanh.pop %v1329
    %v1333 = vtanh.pop %v1330
    %v1334 = vtanh.pop %v1331
    %v1335 = vmul.f32 %v1332, 0.5
    %v1336 = vmul.f32 %v1333, 0.5
    %v1337 = vmul.f32 %v1334, 0.5
    %v1338 = vadd.f32 %v1335, 0.5
    %v1339 = vadd.f32 %v1336, 0.5
    %v1340 = vadd.f32 %v1337, 0.5
    %v1341 = vtanh.pop %v1328
    %v1342 = vmul.f32 %v1339, %v1234
    %v1343 = vmul.f32 %v1338, %v1341
    %v1344 = vadd.f32 %v1342, %v1343
    %v1345 = vtanh.pop %v1344
    %v1346 = vmul.f32 %v1340, %v1345
    %s1347 = scalar_lea.vmem [#allocation2], 224
    %v1348 = vld [vmem:[%s1347] sm:$0xff]
    %v1349 = vld [vmem:[%s1347 + $0x8] sm:$0xff]
    %v1350 = vld [vmem:[%s1347 + $0x10] sm:$0xff]
    %v1351 = vld [vmem:[%s1347 + $0x18] sm:$0xff]
    %v1352 = vpack.c.bf16 %v1346, %v1346
    %1353 = vmatprep.subr.bf16.mxu0 %v548
    %1354 = vmatpush1.bf16.msra.mxu0 %v547
    %1355 = vmatprep.subr.bf16.mxu0 %v544
    %1356 = vmatpush1.bf16.msra.mxu0 %v543
    %1357 = vmatprep.subr.bf16.mxu0 %v540
    %1358 = vmatpush1.bf16.msra.mxu0 %v539
    %1359 = vmatprep.subr.bf16.mxu0 %v536
    %1360 = vmatpush1.bf16.msra.mxu0 %v535
    %1361 = vmatprep.subr.bf16.mxu0 %v532
    %1362 = vmatpush1.bf16.msra.mxu0 %v531
    %1363 = vmatprep.subr.bf16.mxu0 %v528
    %1364 = vmatpush1.bf16.msra.mxu0 %v527
    %1365 = vmatprep.subr.bf16.mxu0 %v524
    %1366 = vmatpush1.bf16.msra.mxu0 %v523
    %1367 = vmatprep.subr.bf16.mxu0 %v520
    %1368 = vmatpush1.bf16.msra.mxu0 %v519
    %1369 = vmatprep.subr.bf16.mxu0 0
    %1370 = vmatpush2.bf16.msra.mxu0 0
    %1371 = vmatprep.subr.bf16.mxu0 0
    %1372 = vmatpush2.bf16.msra.mxu0 0
    %1373 = vmatprep.subr.bf16.mxu0 0
    %1374 = vmatpush2.bf16.msra.mxu0 0
    %1375 = vmatprep.subr.bf16.mxu0 0
    %1376 = vmatpush2.bf16.msra.mxu0 0
    %1377 = vmatprep.subr.bf16.mxu0 0
    %1378 = vmatpush2.bf16.msra.mxu0 0
    %1379 = vmatprep.subr.bf16.mxu0 0
    %1380 = vmatpush2.bf16.msra.mxu0 0
    %1381 = vmatprep.subr.bf16.mxu0 0
    %1382 = vmatpush2.bf16.msra.mxu0 0
    %1383 = vmatprep.subr.bf16.mxu0 0
    %1384 = vmatpush2.bf16.msra.mxu0 0
    %1385 = vmatprep.mubr.bf16.mxu0 0
    %1386 = vmatmul.mubr.bf16.gmra.mxu0 %v1352
    %v1387 = vpop.f32.mrf.mxu0
    %v1388 = vadd.f32 0.0, %v1387
    %v1389 = vpop.f32.mrf.mxu0
    %v1390 = vadd.f32 0.0, %v1389
    %v1391 = vpop.f32.mrf.mxu0
    %v1392 = vpop.f32.mrf.mxu0
    %1393 = vdwg.mxu0
    %1394 = vmatprep.subr.bf16.mxu0 %v550
    %1395 = vmatpush1.bf16.msra.mxu0 %v549
    %1396 = vmatprep.subr.bf16.mxu0 %v546
    %1397 = vmatpush1.bf16.msra.mxu0 %v545
    %1398 = vmatprep.subr.bf16.mxu0 %v542
    %1399 = vmatpush1.bf16.msra.mxu0 %v541
    %1400 = vmatprep.subr.bf16.mxu0 %v538
    %1401 = vmatpush1.bf16.msra.mxu0 %v537
    %1402 = vmatprep.subr.bf16.mxu0 %v534
    %1403 = vmatpush1.bf16.msra.mxu0 %v533
    %1404 = vmatprep.subr.bf16.mxu0 %v530
    %1405 = vmatpush1.bf16.msra.mxu0 %v529
    %1406 = vmatprep.subr.bf16.mxu0 %v526
    %1407 = vmatpush1.bf16.msra.mxu0 %v525
    %1408 = vmatprep.subr.bf16.mxu0 %v522
    %1409 = vmatpush1.bf16.msra.mxu0 %v521
    %1410 = vmatprep.subr.bf16.mxu0 0
    %1411 = vmatpush2.bf16.msra.mxu0 0
    %1412 = vmatprep.subr.bf16.mxu0 0
    %1413 = vmatpush2.bf16.msra.mxu0 0
    %1414 = vmatprep.subr.bf16.mxu0 0
    %1415 = vmatpush2.bf16.msra.mxu0 0
    %1416 = vmatprep.subr.bf16.mxu0 0
    %1417 = vmatpush2.bf16.msra.mxu0 0
    %1418 = vmatprep.subr.bf16.mxu0 0
    %1419 = vmatpush2.bf16.msra.mxu0 0
    %1420 = vmatprep.subr.bf16.mxu0 0
    %1421 = vmatpush2.bf16.msra.mxu0 0
    %1422 = vmatprep.subr.bf16.mxu0 0
    %1423 = vmatpush2.bf16.msra.mxu0 0
    %1424 = vmatprep.subr.bf16.mxu0 0
    %1425 = vmatpush2.bf16.msra.mxu0 0
    %1426 = vmatprep.mubr.bf16.mxu0 0
    %1427 = vmatmul.mubr.bf16.gmra.mxu0 %v1352
    %v1428 = vpop.f32.mrf.mxu0
    %v1429 = vadd.f32 0.0, %v1428
    %v1430 = vpop.f32.mrf.mxu0
    %v1431 = vadd.f32 0.0, %v1430
    %v1432 = vpop.f32.mrf.mxu0
    %v1433 = vpop.f32.mrf.mxu0
    %1434 = vdwg.mxu0
    %v1435 = vadd.f32 %v1348, %v1388
    %v1436 = vadd.f32 %v1349, %v1390
    %v1437 = vadd.f32 %v1350, %v1429
    %v1438 = vadd.f32 %v1351, %v1431
    %v1439 = vmul.f32 %v1435, 0.5
    %v1440 = vmul.f32 %v1436, 0.5
    %v1441 = vmul.f32 %v1437, 0.5
    %v1442 = vtanh.pop %v1439
    %v1443 = vtanh.pop %v1440
    %v1444 = vtanh.pop %v1441
    %v1445 = vmul.f32 %v1442, 0.5
    %v1446 = vmul.f32 %v1443, 0.5
    %v1447 = vmul.f32 %v1444, 0.5
    %v1448 = vadd.f32 %v1445, 0.5
    %v1449 = vadd.f32 %v1446, 0.5
    %v1450 = vadd.f32 %v1447, 0.5
    %v1451 = vtanh.pop %v1438
    %v1452 = vmul.f32 %v1449, %v1344
    %v1453 = vmul.f32 %v1448, %v1451
    %v1454 = vadd.f32 %v1452, %v1453
    %v1455 = vtanh.pop %v1454
    %v1456 = vmul.f32 %v1450, %v1455
    %s1457 = scalar_lea.vmem [#allocation2], 256
    %v1458 = vld [vmem:[%s1457] sm:$0xff]
    %v1459 = vld [vmem:[%s1457 + $0x8] sm:$0xff]
    %v1460 = vld [vmem:[%s1457 + $0x10] sm:$0xff]
    %v1461 = vld [vmem:[%s1457 + $0x18] sm:$0xff]
    %v1462 = vpack.c.bf16 %v1456, %v1456
    %1463 = vmatprep.subr.bf16.mxu0 %v548
    %1464 = vmatpush1.bf16.msra.mxu0 %v547
    %1465 = vmatprep.subr.bf16.mxu0 %v544
    %1466 = vmatpush1.bf16.msra.mxu0 %v543
    %1467 = vmatprep.subr.bf16.mxu0 %v540
    %1468 = vmatpush1.bf16.msra.mxu0 %v539
    %1469 = vmatprep.subr.bf16.mxu0 %v536
    %1470 = vmatpush1.bf16.msra.mxu0 %v535
    %1471 = vmatprep.subr.bf16.mxu0 %v532
    %1472 = vmatpush1.bf16.msra.mxu0 %v531
    %1473 = vmatprep.subr.bf16.mxu0 %v528
    %1474 = vmatpush1.bf16.msra.mxu0 %v527
    %1475 = vmatprep.subr.bf16.mxu0 %v524
    %1476 = vmatpush1.bf16.msra.mxu0 %v523
    %1477 = vmatprep.subr.bf16.mxu0 %v520
    %1478 = vmatpush1.bf16.msra.mxu0 %v519
    %1479 = vmatprep.subr.bf16.mxu0 0
    %1480 = vmatpush2.bf16.msra.mxu0 0
    %1481 = vmatprep.subr.bf16.mxu0 0
    %1482 = vmatpush2.bf16.msra.mxu0 0
    %1483 = vmatprep.subr.bf16.mxu0 0
    %1484 = vmatpush2.bf16.msra.mxu0 0
    %1485 = vmatprep.subr.bf16.mxu0 0
    %1486 = vmatpush2.bf16.msra.mxu0 0
    %1487 = vmatprep.subr.bf16.mxu0 0
    %1488 = vmatpush2.bf16.msra.mxu0 0
    %1489 = vmatprep.subr.bf16.mxu0 0
    %1490 = vmatpush2.bf16.msra.mxu0 0
    %1491 = vmatprep.subr.bf16.mxu0 0
    %1492 = vmatpush2.bf16.msra.mxu0 0
    %1493 = vmatprep.subr.bf16.mxu0 0
    %1494 = vmatpush2.bf16.msra.mxu0 0
    %1495 = vmatprep.mubr.bf16.mxu0 0
    %1496 = vmatmul.mubr.bf16.gmra.mxu0 %v1462
    %v1497 = vpop.f32.mrf.mxu0
    %v1498 = vadd.f32 0.0, %v1497
    %v1499 = vpop.f32.mrf.mxu0
    %v1500 = vadd.f32 0.0, %v1499
    %v1501 = vpop.f32.mrf.mxu0
    %v1502 = vpop.f32.mrf.mxu0
    %1503 = vdwg.mxu0
    %1504 = vmatprep.subr.bf16.mxu0 %v550
    %1505 = vmatpush1.bf16.msra.mxu0 %v549
    %1506 = vmatprep.subr.bf16.mxu0 %v546
    %1507 = vmatpush1.bf16.msra.mxu0 %v545
    %1508 = vmatprep.subr.bf16.mxu0 %v542
    %1509 = vmatpush1.bf16.msra.mxu0 %v541
    %1510 = vmatprep.subr.bf16.mxu0 %v538
    %1511 = vmatpush1.bf16.msra.mxu0 %v537
    %1512 = vmatprep.subr.bf16.mxu0 %v534
    %1513 = vmatpush1.bf16.msra.mxu0 %v533
    %1514 = vmatprep.subr.bf16.mxu0 %v530
    %1515 = vmatpush1.bf16.msra.mxu0 %v529
    %1516 = vmatprep.subr.bf16.mxu0 %v526
    %1517 = vmatpush1.bf16.msra.mxu0 %v525
    %1518 = vmatprep.subr.bf16.mxu0 %v522
    %1519 = vmatpush1.bf16.msra.mxu0 %v521
    %1520 = vmatprep.subr.bf16.mxu0 0
    %1521 = vmatpush2.bf16.msra.mxu0 0
    %1522 = vmatprep.subr.bf16.mxu0 0
    %1523 = vmatpush2.bf16.msra.mxu0 0
    %1524 = vmatprep.subr.bf16.mxu0 0
    %1525 = vmatpush2.bf16.msra.mxu0 0
    %1526 = vmatprep.subr.bf16.mxu0 0
    %1527 = vmatpush2.bf16.msra.mxu0 0
    %1528 = vmatprep.subr.bf16.mxu0 0
    %1529 = vmatpush2.bf16.msra.mxu0 0
    %1530 = vmatprep.subr.bf16.mxu0 0
    %1531 = vmatpush2.bf16.msra.mxu0 0
    %1532 = vmatprep.subr.bf16.mxu0 0
    %1533 = vmatpush2.bf16.msra.mxu0 0
    %1534 = vmatprep.subr.bf16.mxu0 0
    %1535 = vmatpush2.bf16.msra.mxu0 0
    %1536 = vmatprep.mubr.bf16.mxu0 0
    %1537 = vmatmul.mubr.bf16.gmra.mxu0 %v1462
    %v1538 = vpop.f32.mrf.mxu0
    %v1539 = vadd.f32 0.0, %v1538
    %v1540 = vpop.f32.mrf.mxu0
    %v1541 = vadd.f32 0.0, %v1540
    %v1542 = vpop.f32.mrf.mxu0
    %v1543 = vpop.f32.mrf.mxu0
    %1544 = vdwg.mxu0
    %v1545 = vadd.f32 %v1458, %v1498
    %v1546 = vadd.f32 %v1459, %v1500
    %v1547 = vadd.f32 %v1460, %v1539
    %v1548 = vadd.f32 %v1461, %v1541
    %v1549 = vmul.f32 %v1545, 0.5
    %v1550 = vmul.f32 %v1546, 0.5
    %v1551 = vmul.f32 %v1547, 0.5
    %v1552 = vtanh.pop %v1549
    %v1553 = vtanh.pop %v1550
    %v1554 = vtanh.pop %v1551
    %v1555 = vmul.f32 %v1552, 0.5
    %v1556 = vmul.f32 %v1553, 0.5
    %v1557 = vmul.f32 %v1554, 0.5
    %v1558 = vadd.f32 %v1555, 0.5
    %v1559 = vadd.f32 %v1556, 0.5
    %v1560 = vadd.f32 %v1557, 0.5
    %v1561 = vtanh.pop %v1548
    %v1562 = vmul.f32 %v1559, %v1454
    %v1563 = vmul.f32 %v1558, %v1561
    %v1564 = vadd.f32 %v1562, %v1563
    %v1565 = vtanh.pop %v1564
    %v1566 = vmul.f32 %v1560, %v1565
    %s1567 = scalar_lea.vmem [#allocation2], 288
    %v1568 = vld [vmem:[%s1567] sm:$0xff]
    %v1569 = vld [vmem:[%s1567 + $0x8] sm:$0xff]
    %v1570 = vld [vmem:[%s1567 + $0x10] sm:$0xff]
    %v1571 = vld [vmem:[%s1567 + $0x18] sm:$0xff]
    %v1572 = vpack.c.bf16 %v1566, %v1566
    %1573 = vmatprep.subr.bf16.mxu0 %v548
    %1574 = vmatpush1.bf16.msra.mxu0 %v547
    %1575 = vmatprep.subr.bf16.mxu0 %v544
    %1576 = vmatpush1.bf16.msra.mxu0 %v543
    %1577 = vmatprep.subr.bf16.mxu0 %v540
    %1578 = vmatpush1.bf16.msra.mxu0 %v539
    %1579 = vmatprep.subr.bf16.mxu0 %v536
    %1580 = vmatpush1.bf16.msra.mxu0 %v535
    %1581 = vmatprep.subr.bf16.mxu0 %v532
    %1582 = vmatpush1.bf16.msra.mxu0 %v531
    %1583 = vmatprep.subr.bf16.mxu0 %v528
    %1584 = vmatpush1.bf16.msra.mxu0 %v527
    %1585 = vmatprep.subr.bf16.mxu0 %v524
    %1586 = vmatpush1.bf16.msra.mxu0 %v523
    %1587 = vmatprep.subr.bf16.mxu0 %v520
    %1588 = vmatpush1.bf16.msra.mxu0 %v519
    %1589 = vmatprep.subr.bf16.mxu0 0
    %1590 = vmatpush2.bf16.msra.mxu0 0
    %1591 = vmatprep.subr.bf16.mxu0 0
    %1592 = vmatpush2.bf16.msra.mxu0 0
    %1593 = vmatprep.subr.bf16.mxu0 0
    %1594 = vmatpush2.bf16.msra.mxu0 0
    %1595 = vmatprep.subr.bf16.mxu0 0
    %1596 = vmatpush2.bf16.msra.mxu0 0
    %1597 = vmatprep.subr.bf16.mxu0 0
    %1598 = vmatpush2.bf16.msra.mxu0 0
    %1599 = vmatprep.subr.bf16.mxu0 0
    %1600 = vmatpush2.bf16.msra.mxu0 0
    %1601 = vmatprep.subr.bf16.mxu0 0
    %1602 = vmatpush2.bf16.msra.mxu0 0
    %1603 = vmatprep.subr.bf16.mxu0 0
    %1604 = vmatpush2.bf16.msra.mxu0 0
    %1605 = vmatprep.mubr.bf16.mxu0 0
    %1606 = vmatmul.mubr.bf16.gmra.mxu0 %v1572
    %v1607 = vpop.f32.mrf.mxu0
    %v1608 = vadd.f32 0.0, %v1607
    %v1609 = vpop.f32.mrf.mxu0
    %v1610 = vadd.f32 0.0, %v1609
    %v1611 = vpop.f32.mrf.mxu0
    %v1612 = vpop.f32.mrf.mxu0
    %1613 = vdwg.mxu0
    %1614 = vmatprep.subr.bf16.mxu0 %v550
    %1615 = vmatpush1.bf16.msra.mxu0 %v549
    %1616 = vmatprep.subr.bf16.mxu0 %v546
    %1617 = vmatpush1.bf16.msra.mxu0 %v545
    %1618 = vmatprep.subr.bf16.mxu0 %v542
    %1619 = vmatpush1.bf16.msra.mxu0 %v541
    %1620 = vmatprep.subr.bf16.mxu0 %v538
    %1621 = vmatpush1.bf16.msra.mxu0 %v537
    %1622 = vmatprep.subr.bf16.mxu0 %v534
    %1623 = vmatpush1.bf16.msra.mxu0 %v533
    %1624 = vmatprep.subr.bf16.mxu0 %v530
    %1625 = vmatpush1.bf16.msra.mxu0 %v529
    %1626 = vmatprep.subr.bf16.mxu0 %v526
    %1627 = vmatpush1.bf16.msra.mxu0 %v525
    %1628 = vmatprep.subr.bf16.mxu0 %v522
    %1629 = vmatpush1.bf16.msra.mxu0 %v521
    %1630 = vmatprep.subr.bf16.mxu0 0
    %1631 = vmatpush2.bf16.msra.mxu0 0
    %1632 = vmatprep.subr.bf16.mxu0 0
    %1633 = vmatpush2.bf16.msra.mxu0 0
    %1634 = vmatprep.subr.bf16.mxu0 0
    %1635 = vmatpush2.bf16.msra.mxu0 0
    %1636 = vmatprep.subr.bf16.mxu0 0
    %1637 = vmatpush2.bf16.msra.mxu0 0
    %1638 = vmatprep.subr.bf16.mxu0 0
    %1639 = vmatpush2.bf16.msra.mxu0 0
    %1640 = vmatprep.subr.bf16.mxu0 0
    %1641 = vmatpush2.bf16.msra.mxu0 0
    %1642 = vmatprep.subr.bf16.mxu0 0
    %1643 = vmatpush2.bf16.msra.mxu0 0
    %1644 = vmatprep.subr.bf16.mxu0 0
    %1645 = vmatpush2.bf16.msra.mxu0 0
    %1646 = vmatprep.mubr.bf16.mxu0 0
    %1647 = vmatmul.mubr.bf16.gmra.mxu0 %v1572
    %v1648 = vpop.f32.mrf.mxu0
    %v1649 = vadd.f32 0.0, %v1648
    %v1650 = vpop.f32.mrf.mxu0
    %v1651 = vadd.f32 0.0, %v1650
    %v1652 = vpop.f32.mrf.mxu0
    %v1653 = vpop.f32.mrf.mxu0
    %1654 = vdwg.mxu0
    %v1655 = vadd.f32 %v1568, %v1608
    %v1656 = vadd.f32 %v1569, %v1610
    %v1657 = vadd.f32 %v1570, %v1649
    %v1658 = vadd.f32 %v1571, %v1651
    %v1659 = vmul.f32 %v1655, 0.5
    %v1660 = vmul.f32 %v1656, 0.5
    %v1661 = vmul.f32 %v1657, 0.5
    %v1662 = vtanh.pop %v1659
    %v1663 = vtanh.pop %v1660
    %v1664 = vtanh.pop %v1661
    %v1665 = vmul.f32 %v1662, 0.5
    %v1666 = vmul.f32 %v1663, 0.5
    %v1667 = vmul.f32 %v1664, 0.5
    %v1668 = vadd.f32 %v1665, 0.5
    %v1669 = vadd.f32 %v1666, 0.5
    %v1670 = vadd.f32 %v1667, 0.5
    %v1671 = vtanh.pop %v1658
    %v1672 = vmul.f32 %v1669, %v1564
    %v1673 = vmul.f32 %v1668, %v1671
    %v1674 = vadd.f32 %v1672, %v1673
    %v1675 = vtanh.pop %v1674
    %v1676 = vmul.f32 %v1670, %v1675
    %s1677 = scalar_lea.vmem [#allocation2], 320
    %v1678 = vld [vmem:[%s1677] sm:$0xff]
    %v1679 = vld [vmem:[%s1677 + $0x8] sm:$0xff]
    %v1680 = vld [vmem:[%s1677 + $0x10] sm:$0xff]
    %v1681 = vld [vmem:[%s1677 + $0x18] sm:$0xff]
    %v1682 = vpack.c.bf16 %v1676, %v1676
    %1683 = vmatprep.subr.bf16.mxu0 %v548
    %1684 = vmatpush1.bf16.msra.mxu0 %v547
    %1685 = vmatprep.subr.bf16.mxu0 %v544
    %1686 = vmatpush1.bf16.msra.mxu0 %v543
    %1687 = vmatprep.subr.bf16.mxu0 %v540
    %1688 = vmatpush1.bf16.msra.mxu0 %v539
    %1689 = vmatprep.subr.bf16.mxu0 %v536
    %1690 = vmatpush1.bf16.msra.mxu0 %v535
    %1691 = vmatprep.subr.bf16.mxu0 %v532
    %1692 = vmatpush1.bf16.msra.mxu0 %v531
    %1693 = vmatprep.subr.bf16.mxu0 %v528
    %1694 = vmatpush1.bf16.msra.mxu0 %v527
    %1695 = vmatprep.subr.bf16.mxu0 %v524
    %1696 = vmatpush1.bf16.msra.mxu0 %v523
    %1697 = vmatprep.subr.bf16.mxu0 %v520
    %1698 = vmatpush1.bf16.msra.mxu0 %v519
    %1699 = vmatprep.subr.bf16.mxu0 0
    %1700 = vmatpush2.bf16.msra.mxu0 0
    %1701 = vmatprep.subr.bf16.mxu0 0
    %1702 = vmatpush2.bf16.msra.mxu0 0
    %1703 = vmatprep.subr.bf16.mxu0 0
    %1704 = vmatpush2.bf16.msra.mxu0 0
    %1705 = vmatprep.subr.bf16.mxu0 0
    %1706 = vmatpush2.bf16.msra.mxu0 0
    %1707 = vmatprep.subr.bf16.mxu0 0
    %1708 = vmatpush2.bf16.msra.mxu0 0
    %1709 = vmatprep.subr.bf16.mxu0 0
    %1710 = vmatpush2.bf16.msra.mxu0 0
    %1711 = vmatprep.subr.bf16.mxu0 0
    %1712 = vmatpush2.bf16.msra.mxu0 0
    %1713 = vmatprep.subr.bf16.mxu0 0
    %1714 = vmatpush2.bf16.msra.mxu0 0
    %1715 = vmatprep.mubr.bf16.mxu0 0
    %1716 = vmatmul.mubr.bf16.gmra.mxu0 %v1682
    %v1717 = vpop.f32.mrf.mxu0
    %v1718 = vadd.f32 0.0, %v1717
    %v1719 = vpop.f32.mrf.mxu0
    %v1720 = vadd.f32 0.0, %v1719
    %v1721 = vpop.f32.mrf.mxu0
    %v1722 = vpop.f32.mrf.mxu0
    %1723 = vdwg.mxu0
    %1724 = vmatprep.subr.bf16.mxu0 %v550
    %1725 = vmatpush1.bf16.msra.mxu0 %v549
    %1726 = vmatprep.subr.bf16.mxu0 %v546
    %1727 = vmatpush1.bf16.msra.mxu0 %v545
    %1728 = vmatprep.subr.bf16.mxu0 %v542
    %1729 = vmatpush1.bf16.msra.mxu0 %v541
    %1730 = vmatprep.subr.bf16.mxu0 %v538
    %1731 = vmatpush1.bf16.msra.mxu0 %v537
    %1732 = vmatprep.subr.bf16.mxu0 %v534
    %1733 = vmatpush1.bf16.msra.mxu0 %v533
    %1734 = vmatprep.subr.bf16.mxu0 %v530
    %1735 = vmatpush1.bf16.msra.mxu0 %v529
    %1736 = vmatprep.subr.bf16.mxu0 %v526
    %1737 = vmatpush1.bf16.msra.mxu0 %v525
    %1738 = vmatprep.subr.bf16.mxu0 %v522
    %1739 = vmatpush1.bf16.msra.mxu0 %v521
    %1740 = vmatprep.subr.bf16.mxu0 0
    %1741 = vmatpush2.bf16.msra.mxu0 0
    %1742 = vmatprep.subr.bf16.mxu0 0
    %1743 = vmatpush2.bf16.msra.mxu0 0
    %1744 = vmatprep.subr.bf16.mxu0 0
    %1745 = vmatpush2.bf16.msra.mxu0 0
    %1746 = vmatprep.subr.bf16.mxu0 0
    %1747 = vmatpush2.bf16.msra.mxu0 0
    %1748 = vmatprep.subr.bf16.mxu0 0
    %1749 = vmatpush2.bf16.msra.mxu0 0
    %1750 = vmatprep.subr.bf16.mxu0 0
    %1751 = vmatpush2.bf16.msra.mxu0 0
    %1752 = vmatprep.subr.bf16.mxu0 0
    %1753 = vmatpush2.bf16.msra.mxu0 0
    %1754 = vmatprep.subr.bf16.mxu0 0
    %1755 = vmatpush2.bf16.msra.mxu0 0
    %1756 = vmatprep.mubr.bf16.mxu0 0
    %1757 = vmatmul.mubr.bf16.gmra.mxu0 %v1682
    %v1758 = vpop.f32.mrf.mxu0
    %v1759 = vadd.f32 0.0, %v1758
    %v1760 = vpop.f32.mrf.mxu0
    %v1761 = vadd.f32 0.0, %v1760
    %v1762 = vpop.f32.mrf.mxu0
    %v1763 = vpop.f32.mrf.mxu0
    %1764 = vdwg.mxu0
    %v1765 = vadd.f32 %v1678, %v1718
    %v1766 = vadd.f32 %v1679, %v1720
    %v1767 = vadd.f32 %v1680, %v1759
    %v1768 = vadd.f32 %v1681, %v1761
    %v1769 = vmul.f32 %v1765, 0.5
    %v1770 = vmul.f32 %v1766, 0.5
    %v1771 = vmul.f32 %v1767, 0.5
    %v1772 = vtanh.pop %v1769
    %v1773 = vtanh.pop %v1770
    %v1774 = vtanh.pop %v1771
    %v1775 = vmul.f32 %v1772, 0.5
    %v1776 = vmul.f32 %v1773, 0.5
    %v1777 = vmul.f32 %v1774, 0.5
    %v1778 = vadd.f32 %v1775, 0.5
    %v1779 = vadd.f32 %v1776, 0.5
    %v1780 = vadd.f32 %v1777, 0.5
    %v1781 = vtanh.pop %v1768
    %v1782 = vmul.f32 %v1779, %v1674
    %v1783 = vmul.f32 %v1778, %v1781
    %v1784 = vadd.f32 %v1782, %v1783
    %v1785 = vtanh.pop %v1784
    %v1786 = vmul.f32 %v1780, %v1785
    %s1787 = scalar_lea.vmem [#allocation2], 352
    %v1788 = vld [vmem:[%s1787] sm:$0xff]
    %v1789 = vld [vmem:[%s1787 + $0x8] sm:$0xff]
    %v1790 = vld [vmem:[%s1787 + $0x10] sm:$0xff]
    %v1791 = vld [vmem:[%s1787 + $0x18] sm:$0xff]
    %v1792 = vpack.c.bf16 %v1786, %v1786
    %1793 = vmatprep.subr.bf16.mxu0 %v548
    %1794 = vmatpush1.bf16.msra.mxu0 %v547
    %1795 = vmatprep.subr.bf16.mxu0 %v544
    %1796 = vmatpush1.bf16.msra.mxu0 %v543
    %1797 = vmatprep.subr.bf16.mxu0 %v540
    %1798 = vmatpush1.bf16.msra.mxu0 %v539
    %1799 = vmatprep.subr.bf16.mxu0 %v536
    %1800 = vmatpush1.bf16.msra.mxu0 %v535
    %1801 = vmatprep.subr.bf16.mxu0 %v532
    %1802 = vmatpush1.bf16.msra.mxu0 %v531
    %1803 = vmatprep.subr.bf16.mxu0 %v528
    %1804 = vmatpush1.bf16.msra.mxu0 %v527
    %1805 = vmatprep.subr.bf16.mxu0 %v524
    %1806 = vmatpush1.bf16.msra.mxu0 %v523
    %1807 = vmatprep.subr.bf16.mxu0 %v520
    %1808 = vmatpush1.bf16.msra.mxu0 %v519
    %1809 = vmatprep.subr.bf16.mxu0 0
    %1810 = vmatpush2.bf16.msra.mxu0 0
    %1811 = vmatprep.subr.bf16.mxu0 0
    %1812 = vmatpush2.bf16.msra.mxu0 0
    %1813 = vmatprep.subr.bf16.mxu0 0
    %1814 = vmatpush2.bf16.msra.mxu0 0
    %1815 = vmatprep.subr.bf16.mxu0 0
    %1816 = vmatpush2.bf16.msra.mxu0 0
    %1817 = vmatprep.subr.bf16.mxu0 0
    %1818 = vmatpush2.bf16.msra.mxu0 0
    %1819 = vmatprep.subr.bf16.mxu0 0
    %1820 = vmatpush2.bf16.msra.mxu0 0
    %1821 = vmatprep.subr.bf16.mxu0 0
    %1822 = vmatpush2.bf16.msra.mxu0 0
    %1823 = vmatprep.subr.bf16.mxu0 0
    %1824 = vmatpush2.bf16.msra.mxu0 0
    %1825 = vmatprep.mubr.bf16.mxu0 0
    %1826 = vmatmul.mubr.bf16.gmra.mxu0 %v1792
    %v1827 = vpop.f32.mrf.mxu0
    %v1828 = vadd.f32 0.0, %v1827
    %v1829 = vpop.f32.mrf.mxu0
    %v1830 = vadd.f32 0.0, %v1829
    %v1831 = vpop.f32.mrf.mxu0
    %v1832 = vpop.f32.mrf.mxu0
    %1833 = vdwg.mxu0
    %1834 = vmatprep.subr.bf16.mxu0 %v550
    %1835 = vmatpush1.bf16.msra.mxu0 %v549
    %1836 = vmatprep.subr.bf16.mxu0 %v546
    %1837 = vmatpush1.bf16.msra.mxu0 %v545
    %1838 = vmatprep.subr.bf16.mxu0 %v542
    %1839 = vmatpush1.bf16.msra.mxu0 %v541
    %1840 = vmatprep.subr.bf16.mxu0 %v538
    %1841 = vmatpush1.bf16.msra.mxu0 %v537
    %1842 = vmatprep.subr.bf16.mxu0 %v534
    %1843 = vmatpush1.bf16.msra.mxu0 %v533
    %1844 = vmatprep.subr.bf16.mxu0 %v530
    %1845 = vmatpush1.bf16.msra.mxu0 %v529
    %1846 = vmatprep.subr.bf16.mxu0 %v526
    %1847 = vmatpush1.bf16.msra.mxu0 %v525
    %1848 = vmatprep.subr.bf16.mxu0 %v522
    %1849 = vmatpush1.bf16.msra.mxu0 %v521
    %1850 = vmatprep.subr.bf16.mxu0 0
    %1851 = vmatpush2.bf16.msra.mxu0 0
    %1852 = vmatprep.subr.bf16.mxu0 0
    %1853 = vmatpush2.bf16.msra.mxu0 0
    %1854 = vmatprep.subr.bf16.mxu0 0
    %1855 = vmatpush2.bf16.msra.mxu0 0
    %1856 = vmatprep.subr.bf16.mxu0 0
    %1857 = vmatpush2.bf16.msra.mxu0 0
    %1858 = vmatprep.subr.bf16.mxu0 0
    %1859 = vmatpush2.bf16.msra.mxu0 0
    %1860 = vmatprep.subr.bf16.mxu0 0
    %1861 = vmatpush2.bf16.msra.mxu0 0
    %1862 = vmatprep.subr.bf16.mxu0 0
    %1863 = vmatpush2.bf16.msra.mxu0 0
    %1864 = vmatprep.subr.bf16.mxu0 0
    %1865 = vmatpush2.bf16.msra.mxu0 0
    %1866 = vmatprep.mubr.bf16.mxu0 0
    %1867 = vmatmul.mubr.bf16.gmra.mxu0 %v1792
    %v1868 = vpop.f32.mrf.mxu0
    %v1869 = vadd.f32 0.0, %v1868
    %v1870 = vpop.f32.mrf.mxu0
    %v1871 = vadd.f32 0.0, %v1870
    %v1872 = vpop.f32.mrf.mxu0
    %v1873 = vpop.f32.mrf.mxu0
    %1874 = vdwg.mxu0
    %v1875 = vadd.f32 %v1788, %v1828
    %v1876 = vadd.f32 %v1789, %v1830
    %v1877 = vadd.f32 %v1790, %v1869
    %v1878 = vadd.f32 %v1791, %v1871
    %v1879 = vmul.f32 %v1875, 0.5
    %v1880 = vmul.f32 %v1876, 0.5
    %v1881 = vmul.f32 %v1877, 0.5
    %v1882 = vtanh.pop %v1879
    %v1883 = vtanh.pop %v1880
    %v1884 = vtanh.pop %v1881
    %v1885 = vmul.f32 %v1882, 0.5
    %v1886 = vmul.f32 %v1883, 0.5
    %v1887 = vmul.f32 %v1884, 0.5
    %v1888 = vadd.f32 %v1885, 0.5
    %v1889 = vadd.f32 %v1886, 0.5
    %v1890 = vadd.f32 %v1887, 0.5
    %v1891 = vtanh.pop %v1878
    %v1892 = vmul.f32 %v1889, %v1784
    %v1893 = vmul.f32 %v1888, %v1891
    %v1894 = vadd.f32 %v1892, %v1893
    %v1895 = vtanh.pop %v1894
    %v1896 = vmul.f32 %v1890, %v1895
    %s1897 = scalar_lea.vmem [#allocation2], 384
    %v1898 = vld [vmem:[%s1897] sm:$0xff]
    %v1899 = vld [vmem:[%s1897 + $0x8] sm:$0xff]
    %v1900 = vld [vmem:[%s1897 + $0x10] sm:$0xff]
    %v1901 = vld [vmem:[%s1897 + $0x18] sm:$0xff]
    %v1902 = vpack.c.bf16 %v1896, %v1896
    %1903 = vmatprep.subr.bf16.mxu0 %v548
    %1904 = vmatpush1.bf16.msra.mxu0 %v547
    %1905 = vmatprep.subr.bf16.mxu0 %v544
    %1906 = vmatpush1.bf16.msra.mxu0 %v543
    %1907 = vmatprep.subr.bf16.mxu0 %v540
    %1908 = vmatpush1.bf16.msra.mxu0 %v539
    %1909 = vmatprep.subr.bf16.mxu0 %v536
    %1910 = vmatpush1.bf16.msra.mxu0 %v535
    %1911 = vmatprep.subr.bf16.mxu0 %v532
    %1912 = vmatpush1.bf16.msra.mxu0 %v531
    %1913 = vmatprep.subr.bf16.mxu0 %v528
    %1914 = vmatpush1.bf16.msra.mxu0 %v527
    %1915 = vmatprep.subr.bf16.mxu0 %v524
    %1916 = vmatpush1.bf16.msra.mxu0 %v523
    %1917 = vmatprep.subr.bf16.mxu0 %v520
    %1918 = vmatpush1.bf16.msra.mxu0 %v519
    %1919 = vmatprep.subr.bf16.mxu0 0
    %1920 = vmatpush2.bf16.msra.mxu0 0
    %1921 = vmatprep.subr.bf16.mxu0 0
    %1922 = vmatpush2.bf16.msra.mxu0 0
    %1923 = vmatprep.subr.bf16.mxu0 0
    %1924 = vmatpush2.bf16.msra.mxu0 0
    %1925 = vmatprep.subr.bf16.mxu0 0
    %1926 = vmatpush2.bf16.msra.mxu0 0
    %1927 = vmatprep.subr.bf16.mxu0 0
    %1928 = vmatpush2.bf16.msra.mxu0 0
    %1929 = vmatprep.subr.bf16.mxu0 0
    %1930 = vmatpush2.bf16.msra.mxu0 0
    %1931 = vmatprep.subr.bf16.mxu0 0
    %1932 = vmatpush2.bf16.msra.mxu0 0
    %1933 = vmatprep.subr.bf16.mxu0 0
    %1934 = vmatpush2.bf16.msra.mxu0 0
    %1935 = vmatprep.mubr.bf16.mxu0 0
    %1936 = vmatmul.mubr.bf16.gmra.mxu0 %v1902
    %v1937 = vpop.f32.mrf.mxu0
    %v1938 = vadd.f32 0.0, %v1937
    %v1939 = vpop.f32.mrf.mxu0
    %v1940 = vadd.f32 0.0, %v1939
    %v1941 = vpop.f32.mrf.mxu0
    %v1942 = vpop.f32.mrf.mxu0
    %1943 = vdwg.mxu0
    %1944 = vmatprep.subr.bf16.mxu0 %v550
    %1945 = vmatpush1.bf16.msra.mxu0 %v549
    %1946 = vmatprep.subr.bf16.mxu0 %v546
    %1947 = vmatpush1.bf16.msra.mxu0 %v545
    %1948 = vmatprep.subr.bf16.mxu0 %v542
    %1949 = vmatpush1.bf16.msra.mxu0 %v541
    %1950 = vmatprep.subr.bf16.mxu0 %v538
    %1951 = vmatpush1.bf16.msra.mxu0 %v537
    %1952 = vmatprep.subr.bf16.mxu0 %v534
    %1953 = vmatpush1.bf16.msra.mxu0 %v533
    %1954 = vmatprep.subr.bf16.mxu0 %v530
    %1955 = vmatpush1.bf16.msra.mxu0 %v529
    %1956 = vmatprep.subr.bf16.mxu0 %v526
    %1957 = vmatpush1.bf16.msra.mxu0 %v525
    %1958 = vmatprep.subr.bf16.mxu0 %v522
    %1959 = vmatpush1.bf16.msra.mxu0 %v521
    %1960 = vmatprep.subr.bf16.mxu0 0
    %1961 = vmatpush2.bf16.msra.mxu0 0
    %1962 = vmatprep.subr.bf16.mxu0 0
    %1963 = vmatpush2.bf16.msra.mxu0 0
    %1964 = vmatprep.subr.bf16.mxu0 0
    %1965 = vmatpush2.bf16.msra.mxu0 0
    %1966 = vmatprep.subr.bf16.mxu0 0
    %1967 = vmatpush2.bf16.msra.mxu0 0
    %1968 = vmatprep.subr.bf16.mxu0 0
    %1969 = vmatpush2.bf16.msra.mxu0 0
    %1970 = vmatprep.subr.bf16.mxu0 0
    %1971 = vmatpush2.bf16.msra.mxu0 0
    %1972 = vmatprep.subr.bf16.mxu0 0
    %1973 = vmatpush2.bf16.msra.mxu0 0
    %1974 = vmatprep.subr.bf16.mxu0 0
    %1975 = vmatpush2.bf16.msra.mxu0 0
    %1976 = vmatprep.mubr.bf16.mxu0 0
    %1977 = vmatmul.mubr.bf16.gmra.mxu0 %v1902
    %v1978 = vpop.f32.mrf.mxu0
    %v1979 = vadd.f32 0.0, %v1978
    %v1980 = vpop.f32.mrf.mxu0
    %v1981 = vadd.f32 0.0, %v1980
    %v1982 = vpop.f32.mrf.mxu0
    %v1983 = vpop.f32.mrf.mxu0
    %1984 = vdwg.mxu0
    %v1985 = vadd.f32 %v1898, %v1938
    %v1986 = vadd.f32 %v1899, %v1940
    %v1987 = vadd.f32 %v1900, %v1979
    %v1988 = vadd.f32 %v1901, %v1981
    %v1989 = vmul.f32 %v1985, 0.5
    %v1990 = vmul.f32 %v1986, 0.5
    %v1991 = vmul.f32 %v1987, 0.5
    %v1992 = vtanh.pop %v1989
    %v1993 = vtanh.pop %v1990
    %v1994 = vtanh.pop %v1991
    %v1995 = vmul.f32 %v1992, 0.5
    %v1996 = vmul.f32 %v1993, 0.5
    %v1997 = vmul.f32 %v1994, 0.5
    %v1998 = vadd.f32 %v1995, 0.5
    %v1999 = vadd.f32 %v1996, 0.5
    %v2000 = vadd.f32 %v1997, 0.5
    %v2001 = vtanh.pop %v1988
    %v2002 = vmul.f32 %v1999, %v1894
    %v2003 = vmul.f32 %v1998, %v2001
    %v2004 = vadd.f32 %v2002, %v2003
    %v2005 = vtanh.pop %v2004
    %v2006 = vmul.f32 %v2000, %v2005
    %s2007 = scalar_lea.vmem [#allocation2], 416
    %v2008 = vld [vmem:[%s2007] sm:$0xff]
    %v2009 = vld [vmem:[%s2007 + $0x8] sm:$0xff]
    %v2010 = vld [vmem:[%s2007 + $0x10] sm:$0xff]
    %v2011 = vld [vmem:[%s2007 + $0x18] sm:$0xff]
    %v2012 = vpack.c.bf16 %v2006, %v2006
    %2013 = vmatprep.subr.bf16.mxu0 %v548
    %2014 = vmatpush1.bf16.msra.mxu0 %v547
    %2015 = vmatprep.subr.bf16.mxu0 %v544
    %2016 = vmatpush1.bf16.msra.mxu0 %v543
    %2017 = vmatprep.subr.bf16.mxu0 %v540
    %2018 = vmatpush1.bf16.msra.mxu0 %v539
    %2019 = vmatprep.subr.bf16.mxu0 %v536
    %2020 = vmatpush1.bf16.msra.mxu0 %v535
    %2021 = vmatprep.subr.bf16.mxu0 %v532
    %2022 = vmatpush1.bf16.msra.mxu0 %v531
    %2023 = vmatprep.subr.bf16.mxu0 %v528
    %2024 = vmatpush1.bf16.msra.mxu0 %v527
    %2025 = vmatprep.subr.bf16.mxu0 %v524
    %2026 = vmatpush1.bf16.msra.mxu0 %v523
    %2027 = vmatprep.subr.bf16.mxu0 %v520
    %2028 = vmatpush1.bf16.msra.mxu0 %v519
    %2029 = vmatprep.subr.bf16.mxu0 0
    %2030 = vmatpush2.bf16.msra.mxu0 0
    %2031 = vmatprep.subr.bf16.mxu0 0
    %2032 = vmatpush2.bf16.msra.mxu0 0
    %2033 = vmatprep.subr.bf16.mxu0 0
    %2034 = vmatpush2.bf16.msra.mxu0 0
    %2035 = vmatprep.subr.bf16.mxu0 0
    %2036 = vmatpush2.bf16.msra.mxu0 0
    %2037 = vmatprep.subr.bf16.mxu0 0
    %2038 = vmatpush2.bf16.msra.mxu0 0
    %2039 = vmatprep.subr.bf16.mxu0 0
    %2040 = vmatpush2.bf16.msra.mxu0 0
    %2041 = vmatprep.subr.bf16.mxu0 0
    %2042 = vmatpush2.bf16.msra.mxu0 0
    %2043 = vmatprep.subr.bf16.mxu0 0
    %2044 = vmatpush2.bf16.msra.mxu0 0
    %2045 = vmatprep.mubr.bf16.mxu0 0
    %2046 = vmatmul.mubr.bf16.gmra.mxu0 %v2012
    %v2047 = vpop.f32.mrf.mxu0
    %v2048 = vadd.f32 0.0, %v2047
    %v2049 = vpop.f32.mrf.mxu0
    %v2050 = vadd.f32 0.0, %v2049
    %v2051 = vpop.f32.mrf.mxu0
    %v2052 = vpop.f32.mrf.mxu0
    %2053 = vdwg.mxu0
    %2054 = vmatprep.subr.bf16.mxu0 %v550
    %2055 = vmatpush1.bf16.msra.mxu0 %v549
    %2056 = vmatprep.subr.bf16.mxu0 %v546
    %2057 = vmatpush1.bf16.msra.mxu0 %v545
    %2058 = vmatprep.subr.bf16.mxu0 %v542
    %2059 = vmatpush1.bf16.msra.mxu0 %v541
    %2060 = vmatprep.subr.bf16.mxu0 %v538
    %2061 = vmatpush1.bf16.msra.mxu0 %v537
    %2062 = vmatprep.subr.bf16.mxu0 %v534
    %2063 = vmatpush1.bf16.msra.mxu0 %v533
    %2064 = vmatprep.subr.bf16.mxu0 %v530
    %2065 = vmatpush1.bf16.msra.mxu0 %v529
    %2066 = vmatprep.subr.bf16.mxu0 %v526
    %2067 = vmatpush1.bf16.msra.mxu0 %v525
    %2068 = vmatprep.subr.bf16.mxu0 %v522
    %2069 = vmatpush1.bf16.msra.mxu0 %v521
    %2070 = vmatprep.subr.bf16.mxu0 0
    %2071 = vmatpush2.bf16.msra.mxu0 0
    %2072 = vmatprep.subr.bf16.mxu0 0
    %2073 = vmatpush2.bf16.msra.mxu0 0
    %2074 = vmatprep.subr.bf16.mxu0 0
    %2075 = vmatpush2.bf16.msra.mxu0 0
    %2076 = vmatprep.subr.bf16.mxu0 0
    %2077 = vmatpush2.bf16.msra.mxu0 0
    %2078 = vmatprep.subr.bf16.mxu0 0
    %2079 = vmatpush2.bf16.msra.mxu0 0
    %2080 = vmatprep.subr.bf16.mxu0 0
    %2081 = vmatpush2.bf16.msra.mxu0 0
    %2082 = vmatprep.subr.bf16.mxu0 0
    %2083 = vmatpush2.bf16.msra.mxu0 0
    %2084 = vmatprep.subr.bf16.mxu0 0
    %2085 = vmatpush2.bf16.msra.mxu0 0
    %2086 = vmatprep.mubr.bf16.mxu0 0
    %2087 = vmatmul.mubr.bf16.gmra.mxu0 %v2012
    %v2088 = vpop.f32.mrf.mxu0
    %v2089 = vadd.f32 0.0, %v2088
    %v2090 = vpop.f32.mrf.mxu0
    %v2091 = vadd.f32 0.0, %v2090
    %v2092 = vpop.f32.mrf.mxu0
    %v2093 = vpop.f32.mrf.mxu0
    %2094 = vdwg.mxu0
    %v2095 = vadd.f32 %v2008, %v2048
    %v2096 = vadd.f32 %v2009, %v2050
    %v2097 = vadd.f32 %v2010, %v2089
    %v2098 = vadd.f32 %v2011, %v2091
    %v2099 = vmul.f32 %v2095, 0.5
    %v2100 = vmul.f32 %v2096, 0.5
    %v2101 = vmul.f32 %v2097, 0.5
    %v2102 = vtanh.pop %v2099
    %v2103 = vtanh.pop %v2100
    %v2104 = vtanh.pop %v2101
    %v2105 = vmul.f32 %v2102, 0.5
    %v2106 = vmul.f32 %v2103, 0.5
    %v2107 = vmul.f32 %v2104, 0.5
    %v2108 = vadd.f32 %v2105, 0.5
    %v2109 = vadd.f32 %v2106, 0.5
    %v2110 = vadd.f32 %v2107, 0.5
    %v2111 = vtanh.pop %v2098
    %v2112 = vmul.f32 %v2109, %v2004
    %v2113 = vmul.f32 %v2108, %v2111
    %v2114 = vadd.f32 %v2112, %v2113
    %v2115 = vtanh.pop %v2114
    %v2116 = vmul.f32 %v2110, %v2115
    %s2117 = scalar_lea.vmem [#allocation2], 448
    %v2118 = vld [vmem:[%s2117] sm:$0xff]
    %v2119 = vld [vmem:[%s2117 + $0x8] sm:$0xff]
    %v2120 = vld [vmem:[%s2117 + $0x10] sm:$0xff]
    %v2121 = vld [vmem:[%s2117 + $0x18] sm:$0xff]
    %v2122 = vpack.c.bf16 %v2116, %v2116
    %2123 = vmatprep.subr.bf16.mxu0 %v548
    %2124 = vmatpush1.bf16.msra.mxu0 %v547
    %2125 = vmatprep.subr.bf16.mxu0 %v544
    %2126 = vmatpush1.bf16.msra.mxu0 %v543
    %2127 = vmatprep.subr.bf16.mxu0 %v540
    %2128 = vmatpush1.bf16.msra.mxu0 %v539
    %2129 = vmatprep.subr.bf16.mxu0 %v536
    %2130 = vmatpush1.bf16.msra.mxu0 %v535
    %2131 = vmatprep.subr.bf16.mxu0 %v532
    %2132 = vmatpush1.bf16.msra.mxu0 %v531
    %2133 = vmatprep.subr.bf16.mxu0 %v528
    %2134 = vmatpush1.bf16.msra.mxu0 %v527
    %2135 = vmatprep.subr.bf16.mxu0 %v524
    %2136 = vmatpush1.bf16.msra.mxu0 %v523
    %2137 = vmatprep.subr.bf16.mxu0 %v520
    %2138 = vmatpush1.bf16.msra.mxu0 %v519
    %2139 = vmatprep.subr.bf16.mxu0 0
    %2140 = vmatpush2.bf16.msra.mxu0 0
    %2141 = vmatprep.subr.bf16.mxu0 0
    %2142 = vmatpush2.bf16.msra.mxu0 0
    %2143 = vmatprep.subr.bf16.mxu0 0
    %2144 = vmatpush2.bf16.msra.mxu0 0
    %2145 = vmatprep.subr.bf16.mxu0 0
    %2146 = vmatpush2.bf16.msra.mxu0 0
    %2147 = vmatprep.subr.bf16.mxu0 0
    %2148 = vmatpush2.bf16.msra.mxu0 0
    %2149 = vmatprep.subr.bf16.mxu0 0
    %2150 = vmatpush2.bf16.msra.mxu0 0
    %2151 = vmatprep.subr.bf16.mxu0 0
    %2152 = vmatpush2.bf16.msra.mxu0 0
    %2153 = vmatprep.subr.bf16.mxu0 0
    %2154 = vmatpush2.bf16.msra.mxu0 0
    %2155 = vmatprep.mubr.bf16.mxu0 0
    %2156 = vmatmul.mubr.bf16.gmra.mxu0 %v2122
    %v2157 = vpop.f32.mrf.mxu0
    %v2158 = vadd.f32 0.0, %v2157
    %v2159 = vpop.f32.mrf.mxu0
    %v2160 = vadd.f32 0.0, %v2159
    %v2161 = vpop.f32.mrf.mxu0
    %v2162 = vpop.f32.mrf.mxu0
    %2163 = vdwg.mxu0
    %2164 = vmatprep.subr.bf16.mxu0 %v550
    %2165 = vmatpush1.bf16.msra.mxu0 %v549
    %2166 = vmatprep.subr.bf16.mxu0 %v546
    %2167 = vmatpush1.bf16.msra.mxu0 %v545
    %2168 = vmatprep.subr.bf16.mxu0 %v542
    %2169 = vmatpush1.bf16.msra.mxu0 %v541
    %2170 = vmatprep.subr.bf16.mxu0 %v538
    %2171 = vmatpush1.bf16.msra.mxu0 %v537
    %2172 = vmatprep.subr.bf16.mxu0 %v534
    %2173 = vmatpush1.bf16.msra.mxu0 %v533
    %2174 = vmatprep.subr.bf16.mxu0 %v530
    %2175 = vmatpush1.bf16.msra.mxu0 %v529
    %2176 = vmatprep.subr.bf16.mxu0 %v526
    %2177 = vmatpush1.bf16.msra.mxu0 %v525
    %2178 = vmatprep.subr.bf16.mxu0 %v522
    %2179 = vmatpush1.bf16.msra.mxu0 %v521
    %2180 = vmatprep.subr.bf16.mxu0 0
    %2181 = vmatpush2.bf16.msra.mxu0 0
    %2182 = vmatprep.subr.bf16.mxu0 0
    %2183 = vmatpush2.bf16.msra.mxu0 0
    %2184 = vmatprep.subr.bf16.mxu0 0
    %2185 = vmatpush2.bf16.msra.mxu0 0
    %2186 = vmatprep.subr.bf16.mxu0 0
    %2187 = vmatpush2.bf16.msra.mxu0 0
    %2188 = vmatprep.subr.bf16.mxu0 0
    %2189 = vmatpush2.bf16.msra.mxu0 0
    %2190 = vmatprep.subr.bf16.mxu0 0
    %2191 = vmatpush2.bf16.msra.mxu0 0
    %2192 = vmatprep.subr.bf16.mxu0 0
    %2193 = vmatpush2.bf16.msra.mxu0 0
    %2194 = vmatprep.subr.bf16.mxu0 0
    %2195 = vmatpush2.bf16.msra.mxu0 0
    %2196 = vmatprep.mubr.bf16.mxu0 0
    %2197 = vmatmul.mubr.bf16.gmra.mxu0 %v2122
    %v2198 = vpop.f32.mrf.mxu0
    %v2199 = vadd.f32 0.0, %v2198
    %v2200 = vpop.f32.mrf.mxu0
    %v2201 = vadd.f32 0.0, %v2200
    %v2202 = vpop.f32.mrf.mxu0
    %v2203 = vpop.f32.mrf.mxu0
    %2204 = vdwg.mxu0
    %v2205 = vadd.f32 %v2118, %v2158
    %v2206 = vadd.f32 %v2119, %v2160
    %v2207 = vadd.f32 %v2120, %v2199
    %v2208 = vadd.f32 %v2121, %v2201
    %v2209 = vmul.f32 %v2205, 0.5
    %v2210 = vmul.f32 %v2206, 0.5
    %v2211 = vmul.f32 %v2207, 0.5
    %v2212 = vtanh.pop %v2209
    %v2213 = vtanh.pop %v2210
    %v2214 = vtanh.pop %v2211
    %v2215 = vmul.f32 %v2212, 0.5
    %v2216 = vmul.f32 %v2213, 0.5
    %v2217 = vmul.f32 %v2214, 0.5
    %v2218 = vadd.f32 %v2215, 0.5
    %v2219 = vadd.f32 %v2216, 0.5
    %v2220 = vadd.f32 %v2217, 0.5
    %v2221 = vtanh.pop %v2208
    %v2222 = vmul.f32 %v2219, %v2114
    %v2223 = vmul.f32 %v2218, %v2221
    %v2224 = vadd.f32 %v2222, %v2223
    %v2225 = vtanh.pop %v2224
    %v2226 = vmul.f32 %v2220, %v2225
    %s2227 = scalar_lea.vmem [#allocation2], 480
    %v2228 = vld [vmem:[%s2227] sm:$0xff]
    %v2229 = vld [vmem:[%s2227 + $0x8] sm:$0xff]
    %v2230 = vld [vmem:[%s2227 + $0x10] sm:$0xff]
    %v2231 = vld [vmem:[%s2227 + $0x18] sm:$0xff]
    %v2232 = vpack.c.bf16 %v2226, %v2226
    %2233 = vmatprep.subr.bf16.mxu0 %v548
    %2234 = vmatpush1.bf16.msra.mxu0 %v547
    %2235 = vmatprep.subr.bf16.mxu0 %v544
    %2236 = vmatpush1.bf16.msra.mxu0 %v543
    %2237 = vmatprep.subr.bf16.mxu0 %v540
    %2238 = vmatpush1.bf16.msra.mxu0 %v539
    %2239 = vmatprep.subr.bf16.mxu0 %v536
    %2240 = vmatpush1.bf16.msra.mxu0 %v535
    %2241 = vmatprep.subr.bf16.mxu0 %v532
    %2242 = vmatpush1.bf16.msra.mxu0 %v531
    %2243 = vmatprep.subr.bf16.mxu0 %v528
    %2244 = vmatpush1.bf16.msra.mxu0 %v527
    %2245 = vmatprep.subr.bf16.mxu0 %v524
    %2246 = vmatpush1.bf16.msra.mxu0 %v523
    %2247 = vmatprep.subr.bf16.mxu0 %v520
    %2248 = vmatpush1.bf16.msra.mxu0 %v519
    %2249 = vmatprep.subr.bf16.mxu0 0
    %2250 = vmatpush2.bf16.msra.mxu0 0
    %2251 = vmatprep.subr.bf16.mxu0 0
    %2252 = vmatpush2.bf16.msra.mxu0 0
    %2253 = vmatprep.subr.bf16.mxu0 0
    %2254 = vmatpush2.bf16.msra.mxu0 0
    %2255 = vmatprep.subr.bf16.mxu0 0
    %2256 = vmatpush2.bf16.msra.mxu0 0
    %2257 = vmatprep.subr.bf16.mxu0 0
    %2258 = vmatpush2.bf16.msra.mxu0 0
    %2259 = vmatprep.subr.bf16.mxu0 0
    %2260 = vmatpush2.bf16.msra.mxu0 0
    %2261 = vmatprep.subr.bf16.mxu0 0
    %2262 = vmatpush2.bf16.msra.mxu0 0
    %2263 = vmatprep.subr.bf16.mxu0 0
    %2264 = vmatpush2.bf16.msra.mxu0 0
    %2265 = vmatprep.mubr.bf16.mxu0 0
    %2266 = vmatmul.mubr.bf16.gmra.mxu0 %v2232
    %v2267 = vpop.f32.mrf.mxu0
    %v2268 = vadd.f32 0.0, %v2267
    %v2269 = vpop.f32.mrf.mxu0
    %v2270 = vadd.f32 0.0, %v2269
    %v2271 = vpop.f32.mrf.mxu0
    %v2272 = vpop.f32.mrf.mxu0
    %2273 = vdwg.mxu0
    %2274 = vmatprep.subr.bf16.mxu0 %v550
    %2275 = vmatpush1.bf16.msra.mxu0 %v549
    %2276 = vmatprep.subr.bf16.mxu0 %v546
    %2277 = vmatpush1.bf16.msra.mxu0 %v545
    %2278 = vmatprep.subr.bf16.mxu0 %v542
    %2279 = vmatpush1.bf16.msra.mxu0 %v541
    %2280 = vmatprep.subr.bf16.mxu0 %v538
    %2281 = vmatpush1.bf16.msra.mxu0 %v537
    %2282 = vmatprep.subr.bf16.mxu0 %v534
    %2283 = vmatpush1.bf16.msra.mxu0 %v533
    %2284 = vmatprep.subr.bf16.mxu0 %v530
    %2285 = vmatpush1.bf16.msra.mxu0 %v529
    %2286 = vmatprep.subr.bf16.mxu0 %v526
    %2287 = vmatpush1.bf16.msra.mxu0 %v525
    %2288 = vmatprep.subr.bf16.mxu0 %v522
    %2289 = vmatpush1.bf16.msra.mxu0 %v521
    %2290 = vmatprep.subr.bf16.mxu0 0
    %2291 = vmatpush2.bf16.msra.mxu0 0
    %2292 = vmatprep.subr.bf16.mxu0 0
    %2293 = vmatpush2.bf16.msra.mxu0 0
    %2294 = vmatprep.subr.bf16.mxu0 0
    %2295 = vmatpush2.bf16.msra.mxu0 0
    %2296 = vmatprep.subr.bf16.mxu0 0
    %2297 = vmatpush2.bf16.msra.mxu0 0
    %2298 = vmatprep.subr.bf16.mxu0 0
    %2299 = vmatpush2.bf16.msra.mxu0 0
    %2300 = vmatprep.subr.bf16.mxu0 0
    %2301 = vmatpush2.bf16.msra.mxu0 0
    %2302 = vmatprep.subr.bf16.mxu0 0
    %2303 = vmatpush2.bf16.msra.mxu0 0
    %2304 = vmatprep.subr.bf16.mxu0 0
    %2305 = vmatpush2.bf16.msra.mxu0 0
    %2306 = vmatprep.mubr.bf16.mxu0 0
    %2307 = vmatmul.mubr.bf16.gmra.mxu0 %v2232
    %v2308 = vpop.f32.mrf.mxu0
    %v2309 = vadd.f32 0.0, %v2308
    %v2310 = vpop.f32.mrf.mxu0
    %v2311 = vadd.f32 0.0, %v2310
    %v2312 = vpop.f32.mrf.mxu0
    %v2313 = vpop.f32.mrf.mxu0
    %2314 = vdwg.mxu0
    %v2315 = vadd.f32 %v2228, %v2268
    %v2316 = vadd.f32 %v2229, %v2270
    %v2317 = vadd.f32 %v2230, %v2309
    %v2318 = vadd.f32 %v2231, %v2311
    %v2319 = vmul.f32 %v2315, 0.5
    %v2320 = vmul.f32 %v2316, 0.5
    %v2321 = vmul.f32 %v2317, 0.5
    %v2322 = vtanh.pop %v2319
    %v2323 = vtanh.pop %v2320
    %v2324 = vtanh.pop %v2321
    %v2325 = vmul.f32 %v2322, 0.5
    %v2326 = vmul.f32 %v2323, 0.5
    %v2327 = vmul.f32 %v2324, 0.5
    %v2328 = vadd.f32 %v2325, 0.5
    %v2329 = vadd.f32 %v2326, 0.5
    %v2330 = vadd.f32 %v2327, 0.5
    %v2331 = vtanh.pop %v2318
    %v2332 = vmul.f32 %v2329, %v2224
    %v2333 = vmul.f32 %v2328, %v2331
    %v2334 = vadd.f32 %v2332, %v2333
    %v2335 = vtanh.pop %v2334
    %v2336 = vmul.f32 %v2330, %v2335
    %v2337 = vpack.c.bf16 %v2336, %v2336
    %v2338 = vld [vmem:[%s6] sm:$0xf]
    %v2339 = vld [vmem:[%s6 + $0x4] sm:$0xf]
    %v2340 = vld [vmem:[%s6 + $0x8] sm:$0xf]
    %v2341 = vld [vmem:[%s6 + $0xc] sm:$0xf]
    %v2342 = vld [vmem:[%s6 + $0x10] sm:$0xf]
    %v2343 = vld [vmem:[%s6 + $0x14] sm:$0xf]
    %v2344 = vld [vmem:[%s6 + $0x18] sm:$0xf]
    %v2345 = vld [vmem:[%s6 + $0x1c] sm:$0xf]
    %v2346 = vld [vmem:[%s6 + $0x20] sm:$0xf]
    %v2347 = vld [vmem:[%s6 + $0x24] sm:$0xf]
    %v2348 = vld [vmem:[%s6 + $0x28] sm:$0xf]
    %v2349 = vld [vmem:[%s6 + $0x2c] sm:$0xf]
    %v2350 = vld [vmem:[%s6 + $0x30] sm:$0xf]
    %v2351 = vld [vmem:[%s6 + $0x34] sm:$0xf]
    %v2352 = vld [vmem:[%s6 + $0x38] sm:$0xf]
    %v2353 = vld [vmem:[%s6 + $0x3c] sm:$0xf]
    %v2354 = vld [vmem:[%s7] sm:$0x1]
    %v2356 = vlaneseq
    %v2357 = vshrl.u32 %v2356, 7
    %v2358 = vsub.s32 0, %v2357
    %v2359 = vrot.slane %v2354, %v2358
    %v2377 = vunpack.c.l.b16 %v2338
    %v2378 = vunpack.c.l.b16 %v2339
    %v2379 = vunpack.c.l.b16 %v2340
    %v2380 = vunpack.c.l.b16 %v2341
    %v2381 = vunpack.c.l.b16 %v2342
    %v2382 = vunpack.c.l.b16 %v2343
    %v2383 = vunpack.c.l.b16 %v2344
    %v2384 = vunpack.c.l.b16 %v2345
    %v2385 = vunpack.c.l.b16 %v2346
    %v2386 = vunpack.c.l.b16 %v2347
    %v2387 = vunpack.c.l.b16 %v2348
    %v2388 = vunpack.c.l.b16 %v2349
    %v2389 = vunpack.c.l.b16 %v2350
    %v2390 = vunpack.c.l.b16 %v2351
    %v2391 = vunpack.c.l.b16 %v2352
    %v2392 = vunpack.c.l.b16 %v2353
    %v2393 = vpack.c.b16 %v2378, %v2377
    %v2394 = vpack.c.b16 %v2380, %v2379
    %v2395 = vpack.c.b16 %v2382, %v2381
    %v2396 = vpack.c.b16 %v2384, %v2383
    %v2397 = vpack.c.b16 %v2386, %v2385
    %v2398 = vpack.c.b16 %v2388, %v2387
    %v2399 = vpack.c.b16 %v2390, %v2389
    %v2400 = vpack.c.b16 %v2392, %v2391
    %2409 = vmatprep.subr.bf16.mxu0 0
    %2410 = vmatpush1.bf16.msra.mxu0 %v2400
    %2411 = vmatprep.subr.bf16.mxu0 0
    %2412 = vmatpush1.bf16.msra.mxu0 %v2399
    %2413 = vmatprep.subr.bf16.mxu0 0
    %2414 = vmatpush1.bf16.msra.mxu0 %v2398
    %2415 = vmatprep.subr.bf16.mxu0 0
    %2416 = vmatpush1.bf16.msra.mxu0 %v2397
    %2417 = vmatprep.subr.bf16.mxu0 0
    %2418 = vmatpush1.bf16.msra.mxu0 %v2396
    %2419 = vmatprep.subr.bf16.mxu0 0
    %2420 = vmatpush1.bf16.msra.mxu0 %v2395
    %2421 = vmatprep.subr.bf16.mxu0 0
    %2422 = vmatpush1.bf16.msra.mxu0 %v2394
    %2423 = vmatprep.subr.bf16.mxu0 0
    %2424 = vmatpush1.bf16.msra.mxu0 %v2393
    %2425 = vmatprep.subr.bf16.mxu0 0
    %2426 = vmatpush2.bf16.msra.mxu0 0
    %2427 = vmatprep.subr.bf16.mxu0 0
    %2428 = vmatpush2.bf16.msra.mxu0 0
    %2429 = vmatprep.subr.bf16.mxu0 0
    %2430 = vmatpush2.bf16.msra.mxu0 0
    %2431 = vmatprep.subr.bf16.mxu0 0
    %2432 = vmatpush2.bf16.msra.mxu0 0
    %2433 = vmatprep.subr.bf16.mxu0 0
    %2434 = vmatpush2.bf16.msra.mxu0 0
    %2435 = vmatprep.subr.bf16.mxu0 0
    %2436 = vmatpush2.bf16.msra.mxu0 0
    %2437 = vmatprep.subr.bf16.mxu0 0
    %2438 = vmatpush2.bf16.msra.mxu0 0
    %2439 = vmatprep.subr.bf16.mxu0 0
    %2440 = vmatpush2.bf16.msra.mxu0 0
    %2441 = vmatprep.mubr.bf16.mxu0 0
    %2442 = vmatmul.mubr.bf16.gmra.mxu0 %v2337
    %v2443 = vpop.f32.mrf.mxu0
    %v2444 = vadd.f32 %v2359, %v2443
    %v2445 = vpop.f32.mrf.mxu0
    %v2446 = vpop.f32.mrf.mxu0
    %v2447 = vpop.f32.mrf.mxu0
    %2448 = vdwg.mxu0
    %v2449 = vmax.f32 %v2444, 0.0
    %v2450 = vld [vmem:[%s8] sm:$0x1]
    %v2452 = vlaneseq
    %v2453 = vshrl.u32 %v2452, 7
    %v2454 = vsub.s32 0, %v2453
    %v2455 = vrot.slane %v2450, %v2454
    %v2457 = vmul.f32 %v2449, %v2455
    %2458 = vadd.xlane.f32.xlu0 %v2457
    %v2459 = vpop.xlane.xlu0 %2458
    %v2460 = vld [vmem:[#allocation3] sm:$0x1]
    %v2462 = vlaneseq
    %v2463 = vshrl.u32 %v2462, 7
    %v2464 = vsub.s32 0, %v2463
    %v2465 = vrot.slane %v2460, %v2464
    %v2467 = vadd.f32 %v2459, %v2465
    %vm2468 = vcmask 7168
    %2469 = vst.msk [vmem:[%s10] sm:$0xff] %vm2468, %v2467
    // Predicated region
    $region46: #{tpu_custom_call.1} parent=1 // pred_check
      _
    $region47: #{tpu_custom_call.1} parent=1 // pred_check_branch
      %2471 = sbr.rel (0) target = $region49
    $region48: #{tpu_custom_call.1} parent=1 // pred_region
      _
    $region49: #{tpu_custom_call.1} parent=1 // pred_fallthru
      _
    // Predicated region
    $region50: #{tpu_custom_call.1} parent=1 // pred_check
      _
    $region51: #{tpu_custom_call.1} parent=1 // pred_check_branch
      %2473 = sbr.rel (0) target = $region53
    $region52: #{tpu_custom_call.1} parent=1 // pred_region
      _
    $region53: #{tpu_custom_call.1} parent=1 // pred_fallthru
      _
    %2474 = vsyncpa [#allocation5], 1

</llo_original>
